<compile_context>
chip_gen: v7x
topology: tpu7x:2x2x1
jax: 0.10.0
libtpu: 0.0.40
codegen_flags: <defaults>
</compile_context>

<pallas_src>
import jax
import jax.numpy as jnp
from jax import lax
from jax.experimental import pallas as pl
from jax.experimental.pallas import tpu as pltpu

H_GRU = 64           # hidden size of each GRU (per the PyTorch module)
H_PACK = 2 * H_GRU   # packed state width [sentiment | price] = 128
N_OUT = 2            # fc2 output classes
SUBLANE = 8


# ---------------------------------------------------------------------------
# Pallas kernel: input projection + fused packed-GRU recurrence + FC head.
# ---------------------------------------------------------------------------
def gru_fc_kernel(x_ref, w_rec_ref, w_fc_ref, bias_ref, out_ref, gi_ref):
    B, T, D = x_ref.shape
    HH = H_PACK
    G = 3 * HH

    whh = w_rec_ref[0:HH, :]               # (128, 384) block-diag recurrent W
    wih = w_rec_ref[HH:HH + D, :]          # (D, 384)   packed input W

    # Hoisted input projection: ONE MXU pass over all timesteps (off the
    # serial critical path), staged in a VMEM scratch and re-read per step.
    x2d = x_ref[...].reshape(B * T, D)
    gi_ref[...] = jnp.dot(
        x2d, wih, preferred_element_type=jnp.float32).reshape(B, T, G)

    # Bias broadcasts hoisted out of the recurrence.
    b_r = jnp.broadcast_to(bias_ref[0:1, :], (B, HH))
    b_z = jnp.broadcast_to(bias_ref[1:2, :], (B, HH))
    b_n = jnp.broadcast_to(bias_ref[2:3, :], (B, HH))
    bhn = jnp.broadcast_to(bias_ref[3:4, :], (B, HH))

    h = jnp.zeros((B, HH), jnp.float32)
    for t in range(T):                     # static T=8 -> fully unrolled
        gi = gi_ref[:, t, :]                                         # (B, 384)
        gh = jnp.dot(h, whh, preferred_element_type=jnp.float32)     # (B, 384)
        r = jax.nn.sigmoid(gi[:, 0:HH] + gh[:, 0:HH] + b_r)
        z = jax.nn.sigmoid(gi[:, HH:2 * HH] + gh[:, HH:2 * HH] + b_z)
        n = jnp.tanh(gi[:, 2 * HH:G] + b_n + r * (gh[:, 2 * HH:G] + bhn))
        h = (1.0 - z) * n + z * h

    # FC head.  BN0 / BN1 are pre-folded into fc1_w / fc1_b (eval mode exact).
    # TODO(synk): dropout is identity in eval mode and is not implemented.
    fc1_w = w_fc_ref[0:HH, :]
    fc2_w = w_fc_ref[HH:2 * HH, :]         # lane-dense padded (128 -> 128)
    fc1_b = jnp.broadcast_to(bias_ref[4:5, :], (B, HH))
    fc2_b = jnp.broadcast_to(bias_ref[5:6, :], (B, HH))

    z1 = jnp.dot(h, fc1_w, preferred_element_type=jnp.float32) + fc1_b
    a1 = jnp.maximum(z1, 0.0)
    out_ref[...] = jnp.dot(a1, fc2_w, preferred_element_type=jnp.float32) + fc2_b


# ---------------------------------------------------------------------------
# One-time weight packing / folding (outside the per-call path).
# ---------------------------------------------------------------------------
def prepare_params(p, input_size):
    Ds, Dp = input_size
    H = H_GRU

    def gate(w, g):
        return w[g * H:(g + 1) * H, :]

    zss = jnp.zeros((H, H), jnp.float32)
    whh_cols, wih_cols, b_rows = [], [], []
    for g in range(3):  # PyTorch gate order: r, z, n
        # Recurrent weight: block-diag(Ws_hh_g.T, Wp_hh_g.T) -> (128, 128)
        whh_cols.append(jnp.block([[gate(p["ws_hh"], g).T, zss],
                                   [zss, gate(p["wp_hh"], g).T]]))
        # Input weight: sentiment features -> lanes [0,64), price -> [64,128)
        wih_cols.append(jnp.block(
            [[gate(p["ws_ih"], g).T, jnp.zeros((Ds, H), jnp.float32)],
             [jnp.zeros((Dp, H), jnp.float32), gate(p["wp_ih"], g).T]]))
        bg = jnp.concatenate([p["bs_ih"][g * H:(g + 1) * H],
                              p["bp_ih"][g * H:(g + 1) * H]])
        if g < 2:   # fold hidden bias for r and z gates into the gate bias
            bg = bg + jnp.concatenate([p["bs_hh"][g * H:(g + 1) * H],
                                       p["bp_hh"][g * H:(g + 1) * H]])
        b_rows.append(bg)                                  # (128,) each

    whh = jnp.concatenate(whh_cols, axis=1)                # (128, 384)
    wih = jnp.concatenate(wih_cols, axis=1)                # (Ds+Dp, 384)
    bhn = jnp.concatenate([p["bs_hh"][2 * H:], p["bp_hh"][2 * H:]])  # (128,)

    def bn_affine(g, b, m, v, eps=1e-5):
        s = g / jnp.sqrt(v + eps)
        return s, b - m * s

    s_s, t_s = bn_affine(p["bns_g"], p["bns_b"], p["bns_m"], p["bns_v"])
    s_p, t_p = bn_affine(p["bnp_g"], p["bnp_b"], p["bnp_m"], p["bnp_v"])
    s1, t1 = bn_affine(p["bn1_g"], p["bn1_b"], p["bn1_m"], p["bn1_v"])
    s0 = jnp.concatenate([s_s, s_p])                       # (128,)
    t0 = jnp.concatenate([t_s, t_p])                       # (128,)

    # Fold BN0 (pre-fc1) and BN1 (post-fc1) into fc1 (exact in eval mode).
    w1 = p["fc1_w"].T                                      # (128 in, 128 out)
    fc1_w = (s0[:, None] * w1) * s1[None, :]
    fc1_b = (t0 @ w1 + p["fc1_b"]) * s1 + t1               # (128,)

    # fc2 padded lane-dense: (128 in, 128 out), only first N_OUT cols nonzero.
    fc2_w = jnp.zeros((2 * H, 2 * H), jnp.float32).at[:, :N_OUT].set(p["fc2_w"].T)
    fc2_b = jnp.zeros((2 * H,), jnp.float32).at[:N_OUT].set(p["fc2_b"])

    zero = jnp.zeros((2 * H,), jnp.float32)
    bias = jnp.stack([b_rows[0], b_rows[1], b_rows[2], bhn,
                      fc1_b, fc2_b, zero, zero], axis=0)   # (8, 128)

    return {
        "w_rec": jnp.concatenate([whh, wih], axis=0),      # (128 + D, 384)
        "w_fc": jnp.concatenate([fc1_w, fc2_w], axis=0),   # (256, 128)
        "bias": bias,                                      # (8, 128)
    }


# ---------------------------------------------------------------------------
# Forward pass (single Pallas call).
# ---------------------------------------------------------------------------
def model_forward(sentiment_seq, price_seq, pp, input_size):
    if input_size[0] == 1 and sentiment_seq.ndim == 2:
        sentiment_seq = sentiment_seq[..., None]           # unsqueeze(-1)
    B, T, _ = sentiment_seq.shape

    # Packed features [sentiment | price], batch-first (B, T, Ds+Dp), padded
    # to a sublane multiple of 8 so the recurrence / stores use full tiles.
    x = jnp.concatenate([sentiment_seq.astype(jnp.float32),
                         price_seq.astype(jnp.float32)], axis=-1)
    B_pad = ((B + SUBLANE - 1) // SUBLANE) * SUBLANE
    if B_pad != B:
        x = jnp.pad(x, ((0, B_pad - B), (0, 0), (0, 0)))

    vmem = pl.BlockSpec(memory_space=pltpu.MemorySpace.VMEM)
    out = pl.pallas_call(
        gru_fc_kernel,
        out_shape=jax.ShapeDtypeStruct((B_pad, H_PACK), jnp.float32),
        in_specs=[vmem, vmem, vmem, vmem],
        out_specs=vmem,
        scratch_shapes=[pltpu.VMEM((B_pad, T, 3 * H_PACK), jnp.float32)],
    )(x, pp["w_rec"], pp["w_fc"], pp["bias"])

    return out[:B, :N_OUT]                                 # lane-dense -> slice


# ---------------------------------------------------------------------------
# Pure-JAX reference (PyTorch semantics, eval mode) for validation.
# ---------------------------------------------------------------------------
def _gru_ref(x, w_ih, w_hh, b_ih, b_hh):
    B, T, _ = x.shape
    H = w_hh.shape[1]
    h = jnp.zeros((B, H), jnp.float32)
    for t in range(T):
        gi = x[:, t] @ w_ih.T + b_ih
        gh = h @ w_hh.T + b_hh
        i_r, i_z, i_n = gi[:, :H], gi[:, H:2 * H], gi[:, 2 * H:]
        h_r, h_z, h_n = gh[:, :H], gh[:, H:2 * H], gh[:, 2 * H:]
        r = jax.nn.sigmoid(i_r + h_r)
        z = jax.nn.sigmoid(i_z + h_z)
        n = jnp.tanh(i_n + r * h_n)
        h = (1.0 - z) * n + z * h
    return h


def _bn_ref(x, g, b, m, v, eps=1e-5):
    return (x - m) / jnp.sqrt(v + eps) * g + b


def reference_forward(sentiment_seq, price_seq, p, input_size):
    if input_size[0] == 1 and sentiment_seq.ndim == 2:
        sentiment_seq = sentiment_seq[..., None]
    hs = _gru_ref(sentiment_seq.astype(jnp.float32),
                  p["ws_ih"], p["ws_hh"], p["bs_ih"], p["bs_hh"])
    hp = _gru_ref(price_seq.astype(jnp.float32),
                  p["wp_ih"], p["wp_hh"], p["bp_ih"], p["bp_hh"])
    hs = _bn_ref(hs, p["bns_g"], p["bns_b"], p["bns_m"], p["bns_v"])
    hp = _bn_ref(hp, p["bnp_g"], p["bnp_b"], p["bnp_m"], p["bnp_v"])
    x = jnp.concatenate([hs, hp], axis=1)
    x = x @ p["fc1_w"].T + p["fc1_b"]
    x = _bn_ref(x, p["bn1_g"], p["bn1_b"], p["bn1_m"], p["bn1_v"])
    x = jnp.maximum(x, 0.0)
    return x @ p["fc2_w"].T + p["fc2_b"]


# ---------------------------------------------------------------------------
# Deterministic parameter init (PyTorch-style U(-1/sqrt(fan), 1/sqrt(fan))).
# ---------------------------------------------------------------------------
def init_params(key, input_size):
    Ds, Dp = input_size
    H = H_GRU
    keys = iter(jax.random.split(key, 32))

    def u(shape, fan):
        bound = float(fan) ** -0.5
        return jax.random.uniform(next(keys), shape, jnp.float32, -bound, bound)

    p = {
        # sentiment GRU (PyTorch shapes: (3H, D), (3H, H), (3H,), (3H,))
        "ws_ih": u((3 * H, Ds), H), "ws_hh": u((3 * H, H), H),
        "bs_ih": u((3 * H,), H), "bs_hh": u((3 * H,), H),
        # price GRU
        "wp_ih": u((3 * H, Dp), H), "wp_hh": u((3 * H, H), H),
        "bp_ih": u((3 * H,), H), "bp_hh": u((3 * H,), H),
        # fc1: Linear(128, 128), fc2: Linear(128, 2)
        "fc1_w": u((2 * H, 2 * H), 2 * H), "fc1_b": u((2 * H,), 2 * H),
        "fc2_w": u((N_OUT, 2 * H), 2 * H), "fc2_b": u((N_OUT,), 2 * H),
    }

    def bn(n):
        return (jax.random.uniform(next(keys), (n,), jnp.float32, 0.5, 1.5),  # gamma
                0.1 * jax.random.normal(next(keys), (n,), jnp.float32),       # beta
                0.1 * jax.random.normal(next(keys), (n,), jnp.float32),       # run mean
                jax.random.uniform(next(keys), (n,), jnp.float32, 0.5, 1.5))  # run var

    p["bns_g"], p["bns_b"], p["bns_m"], p["bns_v"] = bn(H)
    p["bnp_g"], p["bnp_b"], p["bnp_m"], p["bnp_v"] = bn(H)
    p["bn1_g"], p["bn1_b"], p["bn1_m"], p["bn1_v"] = bn(2 * H)
    return p


if __name__ == "__main__":
    input_size = (1, 4)   # (sentiment feature dim, price feature dim)
    B, T = 2, 8

    key = jax.random.PRNGKey(0)
    k_params, k_sent, k_price = jax.random.split(key, 3)

    params = init_params(k_params, input_size)
    packed = prepare_params(params, input_size)   # one-time weight packing

    # sentiment_seq comes in as (B, T) and is unsqueezed (input_size[0] == 1)
    sentiment_seq = jax.random.normal(k_sent, (B, T), jnp.float32)
    price_seq = jax.random.normal(k_price, (B, T, input_size[1]), jnp.float32)

    out = model_forward(sentiment_seq, price_seq, packed, input_size)
    out = jax.block_until_ready(out)

    ref = reference_forward(sentiment_seq, price_seq, params, input_size)
    assert out.shape == (B, N_OUT)
    assert jnp.allclose(out, ref, atol=2e-4, rtol=2e-3), (out, ref)

    print("KERNEL_OK")
</pallas_src>

<mosaic_0001>
module attributes {stable_mosaic.version = 11 : i64} {
  func.func @gru_fc_kernel(%arg0: memref<8x8x5xf32, #tpu.memory_space<vmem>>, %arg1: memref<133x384xf32, #tpu.memory_space<vmem>>, %arg2: memref<256x128xf32, #tpu.memory_space<vmem>>, %arg3: memref<8x128xf32, #tpu.memory_space<vmem>>, %arg4: memref<8x128xf32, #tpu.memory_space<vmem>>, %arg5: memref<8x8x384xf32, #tpu.memory_space<vmem>>) attributes {dimension_semantics = [], scalar_prefetch = 0 : i64, scratch_operands = 1 : i64, tpu.core_type = #tpu.core_type<tc>} {
    %c0 = arith.constant 0 : index
    %c0_0 = arith.constant 0 : index
    %0 = vector.load %arg1[%c0, %c0_0] : memref<133x384xf32, #tpu.memory_space<vmem>>, vector<128x384xf32>
    %c128 = arith.constant 128 : index
    %c0_1 = arith.constant 0 : index
    %1 = vector.load %arg1[%c128, %c0_1] : memref<133x384xf32, #tpu.memory_space<vmem>>, vector<5x384xf32>
    %c0_2 = arith.constant 0 : index
    %c0_3 = arith.constant 0 : index
    %c0_4 = arith.constant 0 : index
    %2 = vector.load %arg0[%c0_2, %c0_3, %c0_4] : memref<8x8x5xf32, #tpu.memory_space<vmem>>, vector<8x8x5xf32>
    %3 = vector.shape_cast %2 : vector<8x8x5xf32> to vector<64x5xf32>
    %cst = arith.constant dense<0.000000e+00> : vector<64x384xf32>
    %4 = tpu.matmul %3, %1, %cst {dimension_numbers = #tpu.dot_dimension_numbers<[1], [0], [0], [1], [0, 0, 1, 1], [], []>} : vector<64x5xf32>, vector<5x384xf32>, vector<64x384xf32> -> vector<64x384xf32>
    %5 = vector.shape_cast %4 : vector<64x384xf32> to vector<8x8x384xf32>
    %c0_5 = arith.constant 0 : index
    %c0_6 = arith.constant 0 : index
    %c0_7 = arith.constant 0 : index
    %6 = vector.load %arg5[%c0_5, %c0_6, %c0_7] : memref<8x8x384xf32, #tpu.memory_space<vmem>>, vector<8x8x384xf32>
    tpu.vector_store %arg5[%c0_5, %c0_6, %c0_7], %5 {strides = array<i32>} : memref<8x8x384xf32, #tpu.memory_space<vmem>>, vector<8x8x384xf32>,
    %c0_8 = arith.constant 0 : index
    %c0_9 = arith.constant 0 : index
    %7 = vector.load %arg3[%c0_8, %c0_9] : memref<8x128xf32, #tpu.memory_space<vmem>>, vector<1x128xf32>
    %8 = vector.shape_cast %7 : vector<1x128xf32> to vector<1x128xf32>
    %9 = vector.broadcast %8 : vector<1x128xf32> to vector<8x128xf32>
    %c1 = arith.constant 1 : index
    %c0_10 = arith.constant 0 : index
    %10 = vector.load %arg3[%c1, %c0_10] : memref<8x128xf32, #tpu.memory_space<vmem>>, vector<1x128xf32>
    %11 = vector.shape_cast %10 : vector<1x128xf32> to vector<1x128xf32>
    %12 = vector.broadcast %11 : vector<1x128xf32> to vector<8x128xf32>
    %c2 = arith.constant 2 : index
    %c0_11 = arith.constant 0 : index
    %13 = vector.load %arg3[%c2, %c0_11] : memref<8x128xf32, #tpu.memory_space<vmem>>, vector<1x128xf32>
    %14 = vector.shape_cast %13 : vector<1x128xf32> to vector<1x128xf32>
    %15 = vector.broadcast %14 : vector<1x128xf32> to vector<8x128xf32>
    %c3 = arith.constant 3 : index
    %c0_12 = arith.constant 0 : index
    %16 = vector.load %arg3[%c3, %c0_12] : memref<8x128xf32, #tpu.memory_space<vmem>>, vector<1x128xf32>
    %17 = vector.shape_cast %16 : vector<1x128xf32> to vector<1x128xf32>
    %18 = vector.broadcast %17 : vector<1x128xf32> to vector<8x128xf32>
    %cst_13 = arith.constant 0.000000e+00 : f32
    %19 = vector.broadcast %cst_13 : f32 to vector<8x128xf32>
    %c0_14 = arith.constant 0 : index
    %c0_15 = arith.constant 0 : index
    %c0_16 = arith.constant 0 : index
    %20 = vector.load %arg5[%c0_14, %c0_15, %c0_16] : memref<8x8x384xf32, #tpu.memory_space<vmem>>, vector<8x1x384xf32>
    %21 = vector.shape_cast %20 : vector<8x1x384xf32> to vector<8x384xf32>
    %cst_17 = arith.constant dense<0.000000e+00> : vector<8x384xf32>
    %22 = tpu.matmul %19, %0, %cst_17 {dimension_numbers = #tpu.dot_dimension_numbers<[1], [0], [0], [1], [0, 0, 1, 1], [], []>} : vector<8x128xf32>, vector<128x384xf32>, vector<8x384xf32> -> vector<8x384xf32>
    %23 = vector.extract_strided_slice %21 {offsets = [0, 0], sizes = [8, 128], strides = [1, 1]} : vector<8x384xf32> to vector<8x128xf32>
    %24 = vector.extract_strided_slice %22 {offsets = [0, 0], sizes = [8, 128], strides = [1, 1]} : vector<8x384xf32> to vector<8x128xf32>
    %25 = arith.addf %23, %24 : vector<8x128xf32>
    %26 = arith.addf %25, %9 : vector<8x128xf32>
    %27 = arith.negf %26 : vector<8x128xf32>
    %28 = math.exp %27 : vector<8x128xf32>
    %cst_18 = arith.constant 1.000000e+00 : f32
    %29 = vector.broadcast %cst_18 : f32 to vector<8x128xf32>
    %30 = arith.addf %29, %28 : vector<8x128xf32>
    %31 = arith.divf %29, %30 : vector<8x128xf32>
    %32 = vector.extract_strided_slice %21 {offsets = [0, 128], sizes = [8, 128], strides = [1, 1]} : vector<8x384xf32> to vector<8x128xf32>
    %33 = vector.extract_strided_slice %22 {offsets = [0, 128], sizes = [8, 128], strides = [1, 1]} : vector<8x384xf32> to vector<8x128xf32>
    %34 = arith.addf %32, %33 : vector<8x128xf32>
    %35 = arith.addf %34, %12 : vector<8x128xf32>
    %36 = arith.negf %35 : vector<8x128xf32>
    %37 = math.exp %36 : vector<8x128xf32>
    %cst_19 = arith.constant 1.000000e+00 : f32
    %38 = vector.broadcast %cst_19 : f32 to vector<8x128xf32>
    %39 = arith.addf %38, %37 : vector<8x128xf32>
    %40 = arith.divf %38, %39 : vector<8x128xf32>
    %41 = vector.extract_strided_slice %21 {offsets = [0, 256], sizes = [8, 128], strides = [1, 1]} : vector<8x384xf32> to vector<8x128xf32>
    %42 = arith.addf %41, %15 : vector<8x128xf32>
    %43 = vector.extract_strided_slice %22 {offsets = [0, 256], sizes = [8, 128], strides = [1, 1]} : vector<8x384xf32> to vector<8x128xf32>
    %44 = arith.addf %43, %18 : vector<8x128xf32>
    %45 = arith.mulf %31, %44 : vector<8x128xf32>
    %46 = arith.addf %42, %45 : vector<8x128xf32>
    %47 = math.tanh %46 : vector<8x128xf32>
    %cst_20 = arith.constant 1.000000e+00 : f32
    %48 = vector.broadcast %cst_20 : f32 to vector<8x128xf32>
    %49 = arith.subf %48, %40 : vector<8x128xf32>
    %50 = arith.mulf %49, %47 : vector<8x128xf32>
    %51 = arith.mulf %40, %19 : vector<8x128xf32>
    %52 = arith.addf %50, %51 : vector<8x128xf32>
    %c0_21 = arith.constant 0 : index
    %c1_22 = arith.constant 1 : index
    %c0_23 = arith.constant 0 : index
    %53 = vector.load %arg5[%c0_21, %c1_22, %c0_23] : memref<8x8x384xf32, #tpu.memory_space<vmem>>, vector<8x1x384xf32>
    %54 = vector.shape_cast %53 : vector<8x1x384xf32> to vector<8x384xf32>
    %cst_24 = arith.constant dense<0.000000e+00> : vector<8x384xf32>
    %55 = tpu.matmul %52, %0, %cst_24 {dimension_numbers = #tpu.dot_dimension_numbers<[1], [0], [0], [1], [0, 0, 1, 1], [], []>} : vector<8x128xf32>, vector<128x384xf32>, vector<8x384xf32> -> vector<8x384xf32>
    %56 = vector.extract_strided_slice %54 {offsets = [0, 0], sizes = [8, 128], strides = [1, 1]} : vector<8x384xf32> to vector<8x128xf32>
    %57 = vector.extract_strided_slice %55 {offsets = [0, 0], sizes = [8, 128], strides = [1, 1]} : vector<8x384xf32> to vector<8x128xf32>
    %58 = arith.addf %56, %57 : vector<8x128xf32>
    %59 = arith.addf %58, %9 : vector<8x128xf32>
    %60 = arith.negf %59 : vector<8x128xf32>
    %61 = math.exp %60 : vector<8x128xf32>
    %cst_25 = arith.constant 1.000000e+00 : f32
    %62 = vector.broadcast %cst_25 : f32 to vector<8x128xf32>
    %63 = arith.addf %62, %61 : vector<8x128xf32>
    %64 = arith.divf %62, %63 : vector<8x128xf32>
    %65 = vector.extract_strided_slice %54 {offsets = [0, 128], sizes = [8, 128], strides = [1, 1]} : vector<8x384xf32> to vector<8x128xf32>
    %66 = vector.extract_strided_slice %55 {offsets = [0, 128], sizes = [8, 128], strides = [1, 1]} : vector<8x384xf32> to vector<8x128xf32>
    %67 = arith.addf %65, %66 : vector<8x128xf32>
    %68 = arith.addf %67, %12 : vector<8x128xf32>
    %69 = arith.negf %68 : vector<8x128xf32>
    %70 = math.exp %69 : vector<8x128xf32>
    %cst_26 = arith.constant 1.000000e+00 : f32
    %71 = vector.broadcast %cst_26 : f32 to vector<8x128xf32>
    %72 = arith.addf %71, %70 : vector<8x128xf32>
    %73 = arith.divf %71, %72 : vector<8x128xf32>
    %74 = vector.extract_strided_slice %54 {offsets = [0, 256], sizes = [8, 128], strides = [1, 1]} : vector<8x384xf32> to vector<8x128xf32>
    %75 = arith.addf %74, %15 : vector<8x128xf32>
    %76 = vector.extract_strided_slice %55 {offsets = [0, 256], sizes = [8, 128], strides = [1, 1]} : vector<8x384xf32> to vector<8x128xf32>
    %77 = arith.addf %76, %18 : vector<8x128xf32>
    %78 = arith.mulf %64, %77 : vector<8x128xf32>
    %79 = arith.addf %75, %78 : vector<8x128xf32>
    %80 = math.tanh %79 : vector<8x128xf32>
    %cst_27 = arith.constant 1.000000e+00 : f32
    %81 = vector.broadcast %cst_27 : f32 to vector<8x128xf32>
    %82 = arith.subf %81, %73 : vector<8x128xf32>
    %83 = arith.mulf %82, %80 : vector<8x128xf32>
    %84 = arith.mulf %73, %52 : vector<8x128xf32>
    %85 = arith.addf %83, %84 : vector<8x128xf32>
    %c0_28 = arith.constant 0 : index
    %c2_29 = arith.constant 2 : index
    %c0_30 = arith.constant 0 : index
    %86 = vector.load %arg5[%c0_28, %c2_29, %c0_30] : memref<8x8x384xf32, #tpu.memory_space<vmem>>, vector<8x1x384xf32>
    %87 = vector.shape_cast %86 : vector<8x1x384xf32> to vector<8x384xf32>
    %cst_31 = arith.constant dense<0.000000e+00> : vector<8x384xf32>
    %88 = tpu.matmul %85, %0, %cst_31 {dimension_numbers = #tpu.dot_dimension_numbers<[1], [0], [0], [1], [0, 0, 1, 1], [], []>} : vector<8x128xf32>, vector<128x384xf32>, vector<8x384xf32> -> vector<8x384xf32>
    %89 = vector.extract_strided_slice %87 {offsets = [0, 0], sizes = [8, 128], strides = [1, 1]} : vector<8x384xf32> to vector<8x128xf32>
    %90 = vector.extract_strided_slice %88 {offsets = [0, 0], sizes = [8, 128], strides = [1, 1]} : vector<8x384xf32> to vector<8x128xf32>
    %91 = arith.addf %89, %90 : vector<8x128xf32>
    %92 = arith.addf %91, %9 : vector<8x128xf32>
    %93 = arith.negf %92 : vector<8x128xf32>
    %94 = math.exp %93 : vector<8x128xf32>
    %cst_32 = arith.constant 1.000000e+00 : f32
    %95 = vector.broadcast %cst_32 : f32 to vector<8x128xf32>
    %96 = arith.addf %95, %94 : vector<8x128xf32>
    %97 = arith.divf %95, %96 : vector<8x128xf32>
    %98 = vector.extract_strided_slice %87 {offsets = [0, 128], sizes = [8, 128], strides = [1, 1]} : vector<8x384xf32> to vector<8x128xf32>
    %99 = vector.extract_strided_slice %88 {offsets = [0, 128], sizes = [8, 128], strides = [1, 1]} : vector<8x384xf32> to vector<8x128xf32>
    %100 = arith.addf %98, %99 : vector<8x128xf32>
    %101 = arith.addf %100, %12 : vector<8x128xf32>
    %102 = arith.negf %101 : vector<8x128xf32>
    %103 = math.exp %102 : vector<8x128xf32>
    %cst_33 = arith.constant 1.000000e+00 : f32
    %104 = vector.broadcast %cst_33 : f32 to vector<8x128xf32>
    %105 = arith.addf %104, %103 : vector<8x128xf32>
    %106 = arith.divf %104, %105 : vector<8x128xf32>
    %107 = vector.extract_strided_slice %87 {offsets = [0, 256], sizes = [8, 128], strides = [1, 1]} : vector<8x384xf32> to vector<8x128xf32>
    %108 = arith.addf %107, %15 : vector<8x128xf32>
    %109 = vector.extract_strided_slice %88 {offsets = [0, 256], sizes = [8, 128], strides = [1, 1]} : vector<8x384xf32> to vector<8x128xf32>
    %110 = arith.addf %109, %18 : vector<8x128xf32>
    %111 = arith.mulf %97, %110 : vector<8x128xf32>
    %112 = arith.addf %108, %111 : vector<8x128xf32>
    %113 = math.tanh %112 : vector<8x128xf32>
    %cst_34 = arith.constant 1.000000e+00 : f32
    %114 = vector.broadcast %cst_34 : f32 to vector<8x128xf32>
    %115 = arith.subf %114, %106 : vector<8x128xf32>
    %116 = arith.mulf %115, %113 : vector<8x128xf32>
    %117 = arith.mulf %106, %85 : vector<8x128xf32>
    %118 = arith.addf %116, %117 : vector<8x128xf32>
    %c0_35 = arith.constant 0 : index
    %c3_36 = arith.constant 3 : index
    %c0_37 = arith.constant 0 : index
    %119 = vector.load %arg5[%c0_35, %c3_36, %c0_37] : memref<8x8x384xf32, #tpu.memory_space<vmem>>, vector<8x1x384xf32>
    %120 = vector.shape_cast %119 : vector<8x1x384xf32> to vector<8x384xf32>
    %cst_38 = arith.constant dense<0.000000e+00> : vector<8x384xf32>
    %121 = tpu.matmul %118, %0, %cst_38 {dimension_numbers = #tpu.dot_dimension_numbers<[1], [0], [0], [1], [0, 0, 1, 1], [], []>} : vector<8x128xf32>, vector<128x384xf32>, vector<8x384xf32> -> vector<8x384xf32>
    %122 = vector.extract_strided_slice %120 {offsets = [0, 0], sizes = [8, 128], strides = [1, 1]} : vector<8x384xf32> to vector<8x128xf32>
    %123 = vector.extract_strided_slice %121 {offsets = [0, 0], sizes = [8, 128], strides = [1, 1]} : vector<8x384xf32> to vector<8x128xf32>
    %124 = arith.addf %122, %123 : vector<8x128xf32>
    %125 = arith.addf %124, %9 : vector<8x128xf32>
    %126 = arith.negf %125 : vector<8x128xf32>
    %127 = math.exp %126 : vector<8x128xf32>
    %cst_39 = arith.constant 1.000000e+00 : f32
    %128 = vector.broadcast %cst_39 : f32 to vector<8x128xf32>
    %129 = arith.addf %128, %127 : vector<8x128xf32>
    %130 = arith.divf %128, %129 : vector<8x128xf32>
    %131 = vector.extract_strided_slice %120 {offsets = [0, 128], sizes = [8, 128], strides = [1, 1]} : vector<8x384xf32> to vector<8x128xf32>
    %132 = vector.extract_strided_slice %121 {offsets = [0, 128], sizes = [8, 128], strides = [1, 1]} : vector<8x384xf32> to vector<8x128xf32>
    %133 = arith.addf %131, %132 : vector<8x128xf32>
    %134 = arith.addf %133, %12 : vector<8x128xf32>
    %135 = arith.negf %134 : vector<8x128xf32>
    %136 = math.exp %135 : vector<8x128xf32>
    %cst_40 = arith.constant 1.000000e+00 : f32
    %137 = vector.broadcast %cst_40 : f32 to vector<8x128xf32>
    %138 = arith.addf %137, %136 : vector<8x128xf32>
    %139 = arith.divf %137, %138 : vector<8x128xf32>
    %140 = vector.extract_strided_slice %120 {offsets = [0, 256], sizes = [8, 128], strides = [1, 1]} : vector<8x384xf32> to vector<8x128xf32>
    %141 = arith.addf %140, %15 : vector<8x128xf32>
    %142 = vector.extract_strided_slice %121 {offsets = [0, 256], sizes = [8, 128], strides = [1, 1]} : vector<8x384xf32> to vector<8x128xf32>
    %143 = arith.addf %142, %18 : vector<8x128xf32>
    %144 = arith.mulf %130, %143 : vector<8x128xf32>
    %145 = arith.addf %141, %144 : vector<8x128xf32>
    %146 = math.tanh %145 : vector<8x128xf32>
    %cst_41 = arith.constant 1.000000e+00 : f32
    %147 = vector.broadcast %cst_41 : f32 to vector<8x128xf32>
    %148 = arith.subf %147, %139 : vector<8x128xf32>
    %149 = arith.mulf %148, %146 : vector<8x128xf32>
    %150 = arith.mulf %139, %118 : vector<8x128xf32>
    %151 = arith.addf %149, %150 : vector<8x128xf32>
    %c0_42 = arith.constant 0 : index
    %c4 = arith.constant 4 : index
    %c0_43 = arith.constant 0 : index
    %152 = vector.load %arg5[%c0_42, %c4, %c0_43] : memref<8x8x384xf32, #tpu.memory_space<vmem>>, vector<8x1x384xf32>
    %153 = vector.shape_cast %152 : vector<8x1x384xf32> to vector<8x384xf32>
    %cst_44 = arith.constant dense<0.000000e+00> : vector<8x384xf32>
    %154 = tpu.matmul %151, %0, %cst_44 {dimension_numbers = #tpu.dot_dimension_numbers<[1], [0], [0], [1], [0, 0, 1, 1], [], []>} : vector<8x128xf32>, vector<128x384xf32>, vector<8x384xf32> -> vector<8x384xf32>
    %155 = vector.extract_strided_slice %153 {offsets = [0, 0], sizes = [8, 128], strides = [1, 1]} : vector<8x384xf32> to vector<8x128xf32>
    %156 = vector.extract_strided_slice %154 {offsets = [0, 0], sizes = [8, 128], strides = [1, 1]} : vector<8x384xf32> to vector<8x128xf32>
    %157 = arith.addf %155, %156 : vector<8x128xf32>
    %158 = arith.addf %157, %9 : vector<8x128xf32>
    %159 = arith.negf %158 : vector<8x128xf32>
    %160 = math.exp %159 : vector<8x128xf32>
    %cst_45 = arith.constant 1.000000e+00 : f32
    %161 = vector.broadcast %cst_45 : f32 to vector<8x128xf32>
    %162 = arith.addf %161, %160 : vector<8x128xf32>
    %163 = arith.divf %161, %162 : vector<8x128xf32>
    %164 = vector.extract_strided_slice %153 {offsets = [0, 128], sizes = [8, 128], strides = [1, 1]} : vector<8x384xf32> to vector<8x128xf32>
    %165 = vector.extract_strided_slice %154 {offsets = [0, 128], sizes = [8, 128], strides = [1, 1]} : vector<8x384xf32> to vector<8x128xf32>
    %166 = arith.addf %164, %165 : vector<8x128xf32>
    %167 = arith.addf %166, %12 : vector<8x128xf32>
    %168 = arith.negf %167 : vector<8x128xf32>
    %169 = math.exp %168 : vector<8x128xf32>
    %cst_46 = arith.constant 1.000000e+00 : f32
    %170 = vector.broadcast %cst_46 : f32 to vector<8x128xf32>
    %171 = arith.addf %170, %169 : vector<8x128xf32>
    %172 = arith.divf %170, %171 : vector<8x128xf32>
    %173 = vector.extract_strided_slice %153 {offsets = [0, 256], sizes = [8, 128], strides = [1, 1]} : vector<8x384xf32> to vector<8x128xf32>
    %174 = arith.addf %173, %15 : vector<8x128xf32>
    %175 = vector.extract_strided_slice %154 {offsets = [0, 256], sizes = [8, 128], strides = [1, 1]} : vector<8x384xf32> to vector<8x128xf32>
    %176 = arith.addf %175, %18 : vector<8x128xf32>
    %177 = arith.mulf %163, %176 : vector<8x128xf32>
    %178 = arith.addf %174, %177 : vector<8x128xf32>
    %179 = math.tanh %178 : vector<8x128xf32>
    %cst_47 = arith.constant 1.000000e+00 : f32
    %180 = vector.broadcast %cst_47 : f32 to vector<8x128xf32>
    %181 = arith.subf %180, %172 : vector<8x128xf32>
    %182 = arith.mulf %181, %179 : vector<8x128xf32>
    %183 = arith.mulf %172, %151 : vector<8x128xf32>
    %184 = arith.addf %182, %183 : vector<8x128xf32>
    %c0_48 = arith.constant 0 : index
    %c5 = arith.constant 5 : index
    %c0_49 = arith.constant 0 : index
    %185 = vector.load %arg5[%c0_48, %c5, %c0_49] : memref<8x8x384xf32, #tpu.memory_space<vmem>>, vector<8x1x384xf32>
    %186 = vector.shape_cast %185 : vector<8x1x384xf32> to vector<8x384xf32>
    %cst_50 = arith.constant dense<0.000000e+00> : vector<8x384xf32>
    %187 = tpu.matmul %184, %0, %cst_50 {dimension_numbers = #tpu.dot_dimension_numbers<[1], [0], [0], [1], [0, 0, 1, 1], [], []>} : vector<8x128xf32>, vector<128x384xf32>, vector<8x384xf32> -> vector<8x384xf32>
    %188 = vector.extract_strided_slice %186 {offsets = [0, 0], sizes = [8, 128], strides = [1, 1]} : vector<8x384xf32> to vector<8x128xf32>
    %189 = vector.extract_strided_slice %187 {offsets = [0, 0], sizes = [8, 128], strides = [1, 1]} : vector<8x384xf32> to vector<8x128xf32>
    %190 = arith.addf %188, %189 : vector<8x128xf32>
    %191 = arith.addf %190, %9 : vector<8x128xf32>
    %192 = arith.negf %191 : vector<8x128xf32>
    %193 = math.exp %192 : vector<8x128xf32>
    %cst_51 = arith.constant 1.000000e+00 : f32
    %194 = vector.broadcast %cst_51 : f32 to vector<8x128xf32>
    %195 = arith.addf %194, %193 : vector<8x128xf32>
    %196 = arith.divf %194, %195 : vector<8x128xf32>
    %197 = vector.extract_strided_slice %186 {offsets = [0, 128], sizes = [8, 128], strides = [1, 1]} : vector<8x384xf32> to vector<8x128xf32>
    %198 = vector.extract_strided_slice %187 {offsets = [0, 128], sizes = [8, 128], strides = [1, 1]} : vector<8x384xf32> to vector<8x128xf32>
    %199 = arith.addf %197, %198 : vector<8x128xf32>
    %200 = arith.addf %199, %12 : vector<8x128xf32>
    %201 = arith.negf %200 : vector<8x128xf32>
    %202 = math.exp %201 : vector<8x128xf32>
    %cst_52 = arith.constant 1.000000e+00 : f32
    %203 = vector.broadcast %cst_52 : f32 to vector<8x128xf32>
    %204 = arith.addf %203, %202 : vector<8x128xf32>
    %205 = arith.divf %203, %204 : vector<8x128xf32>
    %206 = vector.extract_strided_slice %186 {offsets = [0, 256], sizes = [8, 128], strides = [1, 1]} : vector<8x384xf32> to vector<8x128xf32>
    %207 = arith.addf %206, %15 : vector<8x128xf32>
    %208 = vector.extract_strided_slice %187 {offsets = [0, 256], sizes = [8, 128], strides = [1, 1]} : vector<8x384xf32> to vector<8x128xf32>
    %209 = arith.addf %208, %18 : vector<8x128xf32>
    %210 = arith.mulf %196, %209 : vector<8x128xf32>
    %211 = arith.addf %207, %210 : vector<8x128xf32>
    %212 = math.tanh %211 : vector<8x128xf32>
    %cst_53 = arith.constant 1.000000e+00 : f32
    %213 = vector.broadcast %cst_53 : f32 to vector<8x128xf32>
    %214 = arith.subf %213, %205 : vector<8x128xf32>
    %215 = arith.mulf %214, %212 : vector<8x128xf32>
    %216 = arith.mulf %205, %184 : vector<8x128xf32>
    %217 = arith.addf %215, %216 : vector<8x128xf32>
    %c0_54 = arith.constant 0 : index
    %c6 = arith.constant 6 : index
    %c0_55 = arith.constant 0 : index
    %218 = vector.load %arg5[%c0_54, %c6, %c0_55] : memref<8x8x384xf32, #tpu.memory_space<vmem>>, vector<8x1x384xf32>
    %219 = vector.shape_cast %218 : vector<8x1x384xf32> to vector<8x384xf32>
    %cst_56 = arith.constant dense<0.000000e+00> : vector<8x384xf32>
    %220 = tpu.matmul %217, %0, %cst_56 {dimension_numbers = #tpu.dot_dimension_numbers<[1], [0], [0], [1], [0, 0, 1, 1], [], []>} : vector<8x128xf32>, vector<128x384xf32>, vector<8x384xf32> -> vector<8x384xf32>
    %221 = vector.extract_strided_slice %219 {offsets = [0, 0], sizes = [8, 128], strides = [1, 1]} : vector<8x384xf32> to vector<8x128xf32>
    %222 = vector.extract_strided_slice %220 {offsets = [0, 0], sizes = [8, 128], strides = [1, 1]} : vector<8x384xf32> to vector<8x128xf32>
    %223 = arith.addf %221, %222 : vector<8x128xf32>
    %224 = arith.addf %223, %9 : vector<8x128xf32>
    %225 = arith.negf %224 : vector<8x128xf32>
    %226 = math.exp %225 : vector<8x128xf32>
    %cst_57 = arith.constant 1.000000e+00 : f32
    %227 = vector.broadcast %cst_57 : f32 to vector<8x128xf32>
    %228 = arith.addf %227, %226 : vector<8x128xf32>
    %229 = arith.divf %227, %228 : vector<8x128xf32>
    %230 = vector.extract_strided_slice %219 {offsets = [0, 128], sizes = [8, 128], strides = [1, 1]} : vector<8x384xf32> to vector<8x128xf32>
    %231 = vector.extract_strided_slice %220 {offsets = [0, 128], sizes = [8, 128], strides = [1, 1]} : vector<8x384xf32> to vector<8x128xf32>
    %232 = arith.addf %230, %231 : vector<8x128xf32>
    %233 = arith.addf %232, %12 : vector<8x128xf32>
    %234 = arith.negf %233 : vector<8x128xf32>
    %235 = math.exp %234 : vector<8x128xf32>
    %cst_58 = arith.constant 1.000000e+00 : f32
    %236 = vector.broadcast %cst_58 : f32 to vector<8x128xf32>
    %237 = arith.addf %236, %235 : vector<8x128xf32>
    %238 = arith.divf %236, %237 : vector<8x128xf32>
    %239 = vector.extract_strided_slice %219 {offsets = [0, 256], sizes = [8, 128], strides = [1, 1]} : vector<8x384xf32> to vector<8x128xf32>
    %240 = arith.addf %239, %15 : vector<8x128xf32>
    %241 = vector.extract_strided_slice %220 {offsets = [0, 256], sizes = [8, 128], strides = [1, 1]} : vector<8x384xf32> to vector<8x128xf32>
    %242 = arith.addf %241, %18 : vector<8x128xf32>
    %243 = arith.mulf %229, %242 : vector<8x128xf32>
    %244 = arith.addf %240, %243 : vector<8x128xf32>
    %245 = math.tanh %244 : vector<8x128xf32>
    %cst_59 = arith.constant 1.000000e+00 : f32
    %246 = vector.broadcast %cst_59 : f32 to vector<8x128xf32>
    %247 = arith.subf %246, %238 : vector<8x128xf32>
    %248 = arith.mulf %247, %245 : vector<8x128xf32>
    %249 = arith.mulf %238, %217 : vector<8x128xf32>
    %250 = arith.addf %248, %249 : vector<8x128xf32>
    %c0_60 = arith.constant 0 : index
    %c7 = arith.constant 7 : index
    %c0_61 = arith.constant 0 : index
    %251 = vector.load %arg5[%c0_60, %c7, %c0_61] : memref<8x8x384xf32, #tpu.memory_space<vmem>>, vector<8x1x384xf32>
    %252 = vector.shape_cast %251 : vector<8x1x384xf32> to vector<8x384xf32>
    %cst_62 = arith.constant dense<0.000000e+00> : vector<8x384xf32>
    %253 = tpu.matmul %250, %0, %cst_62 {dimension_numbers = #tpu.dot_dimension_numbers<[1], [0], [0], [1], [0, 0, 1, 1], [], []>} : vector<8x128xf32>, vector<128x384xf32>, vector<8x384xf32> -> vector<8x384xf32>
    %254 = vector.extract_strided_slice %252 {offsets = [0, 0], sizes = [8, 128], strides = [1, 1]} : vector<8x384xf32> to vector<8x128xf32>
    %255 = vector.extract_strided_slice %253 {offsets = [0, 0], sizes = [8, 128], strides = [1, 1]} : vector<8x384xf32> to vector<8x128xf32>
    %256 = arith.addf %254, %255 : vector<8x128xf32>
    %257 = arith.addf %256, %9 : vector<8x128xf32>
    %258 = arith.negf %257 : vector<8x128xf32>
    %259 = math.exp %258 : vector<8x128xf32>
    %cst_63 = arith.constant 1.000000e+00 : f32
    %260 = vector.broadcast %cst_63 : f32 to vector<8x128xf32>
    %261 = arith.addf %260, %259 : vector<8x128xf32>
    %262 = arith.divf %260, %261 : vector<8x128xf32>
    %263 = vector.extract_strided_slice %252 {offsets = [0, 128], sizes = [8, 128], strides = [1, 1]} : vector<8x384xf32> to vector<8x128xf32>
    %264 = vector.extract_strided_slice %253 {offsets = [0, 128], sizes = [8, 128], strides = [1, 1]} : vector<8x384xf32> to vector<8x128xf32>
    %265 = arith.addf %263, %264 : vector<8x128xf32>
    %266 = arith.addf %265, %12 : vector<8x128xf32>
    %267 = arith.negf %266 : vector<8x128xf32>
    %268 = math.exp %267 : vector<8x128xf32>
    %cst_64 = arith.constant 1.000000e+00 : f32
    %269 = vector.broadcast %cst_64 : f32 to vector<8x128xf32>
    %270 = arith.addf %269, %268 : vector<8x128xf32>
    %271 = arith.divf %269, %270 : vector<8x128xf32>
    %272 = vector.extract_strided_slice %252 {offsets = [0, 256], sizes = [8, 128], strides = [1, 1]} : vector<8x384xf32> to vector<8x128xf32>
    %273 = arith.addf %272, %15 : vector<8x128xf32>
    %274 = vector.extract_strided_slice %253 {offsets = [0, 256], sizes = [8, 128], strides = [1, 1]} : vector<8x384xf32> to vector<8x128xf32>
    %275 = arith.addf %274, %18 : vector<8x128xf32>
    %276 = arith.mulf %262, %275 : vector<8x128xf32>
    %277 = arith.addf %273, %276 : vector<8x128xf32>
    %278 = math.tanh %277 : vector<8x128xf32>
    %cst_65 = arith.constant 1.000000e+00 : f32
    %279 = vector.broadcast %cst_65 : f32 to vector<8x128xf32>
    %280 = arith.subf %279, %271 : vector<8x128xf32>
    %281 = arith.mulf %280, %278 : vector<8x128xf32>
    %282 = arith.mulf %271, %250 : vector<8x128xf32>
    %283 = arith.addf %281, %282 : vector<8x128xf32>
    %c0_66 = arith.constant 0 : index
    %c0_67 = arith.constant 0 : index
    %284 = vector.load %arg2[%c0_66, %c0_67] : memref<256x128xf32, #tpu.memory_space<vmem>>, vector<128x128xf32>
    %c128_68 = arith.constant 128 : index
    %c0_69 = arith.constant 0 : index
    %285 = vector.load %arg2[%c128_68, %c0_69] : memref<256x128xf32, #tpu.memory_space<vmem>>, vector<128x128xf32>
    %c4_70 = arith.constant 4 : index
    %c0_71 = arith.constant 0 : index
    %286 = vector.load %arg3[%c4_70, %c0_71] : memref<8x128xf32, #tpu.memory_space<vmem>>, vector<1x128xf32>
    %287 = vector.shape_cast %286 : vector<1x128xf32> to vector<1x128xf32>
    %288 = vector.broadcast %287 : vector<1x128xf32> to vector<8x128xf32>
    %c5_72 = arith.constant 5 : index
    %c0_73 = arith.constant 0 : index
    %289 = vector.load %arg3[%c5_72, %c0_73] : memref<8x128xf32, #tpu.memory_space<vmem>>, vector<1x128xf32>
    %290 = vector.shape_cast %289 : vector<1x128xf32> to vector<1x128xf32>
    %291 = vector.broadcast %290 : vector<1x128xf32> to vector<8x128xf32>
    %cst_74 = arith.constant dense<0.000000e+00> : vector<8x128xf32>
    %292 = tpu.matmul %283, %284, %cst_74 {dimension_numbers = #tpu.dot_dimension_numbers<[1], [0], [0], [1], [0, 0, 1, 1], [], []>} : vector<8x128xf32>, vector<128x128xf32>, vector<8x128xf32> -> vector<8x128xf32>
    %293 = arith.addf %292, %288 : vector<8x128xf32>
    %cst_75 = arith.constant 0.000000e+00 : f32
    %294 = vector.broadcast %cst_75 : f32 to vector<8x128xf32>
    %295 = arith.maximumf %293, %294 : vector<8x128xf32>
    %cst_76 = arith.constant dense<0.000000e+00> : vector<8x128xf32>
    %296 = tpu.matmul %295, %285, %cst_76 {dimension_numbers = #tpu.dot_dimension_numbers<[1], [0], [0], [1], [0, 0, 1, 1], [], []>} : vector<8x128xf32>, vector<128x128xf32>, vector<8x128xf32> -> vector<8x128xf32>
    %297 = arith.addf %296, %291 : vector<8x128xf32>
    %c0_77 = arith.constant 0 : index
    %c0_78 = arith.constant 0 : index
    %298 = vector.load %arg4[%c0_77, %c0_78] : memref<8x128xf32, #tpu.memory_space<vmem>>, vector<8x128xf32>
    tpu.vector_store %arg4[%c0_77, %c0_78], %297 {strides = array<i32>} : memref<8x128xf32, #tpu.memory_space<vmem>>, vector<8x128xf32>,
    return
  }
}

</mosaic_0001>

<llo_original>
// kernel: tpu_custom_call.1
$region0: #{tpu_custom_call.1}
  #allocation0 [shape = 'u32[]', space=smem, size = 0x4, offset = 0x4, fixed_abs, tag = 'smem constant byte address 0x4 - core index']
  #allocation1 [shape = 'u32[144,128]{1,0:T(1,128)}', space=vmem, size = 0x12000, scoped, tag = 'internal scratch']
  #allocation2 [shape = 'f32[8,8,384]{2,1,0:T(8,128)}', space=vmem, size = 0x18000, scoped, tag = 'scratch operand']
  %s0 = inlined_call_operand.vmem [shape: f32[8,8,5], index: 0, kind: input, shape index: {}]
  %s1 = inlined_call_operand.hbm [shape: f32[133,384], index: 1, kind: input, shape index: {}]
  %s2 = inlined_call_operand.hbm [shape: f32[256,128], index: 2, kind: input, shape index: {}]
  %s3 = inlined_call_operand.vmem [shape: f32[8,128], index: 3, kind: input, shape index: {}]
  %s4 = inlined_call_operand.hbm [shape: f32[8,128], index: 4, kind: output, shape index: {}]
  %s5 = sld [smem:[#allocation0]]
  $region34: #{tpu_custom_call.1} parent=0
    _
  %s7 = ssub.s32 1, %s5
  %s8 = scalar_select 0, %s7, %s5
  $region1: #{tpu_custom_call.1} parent=0
    #allocation3 [shape = 'u8[208896]{0}', space=vmem, size = 0x33000, scoped, tag = 'input window, operand 1, single buffered']
    #allocation4 [shape = 's32[1]{0}', space=sflag, size = 0x4, scoped, tag = 'scoped memory for tpu_custom_call.1']
    #allocation5 [shape = 's32[1]{0}', space=sflag, size = 0x4, scoped, tag = 'scoped memory for tpu_custom_call.1']
    #allocation6 [shape = 'u8[131072]{0}', space=vmem, size = 0x20000, scoped, tag = 'input window, operand 2, single buffered']
    #allocation7 [shape = 's32[1]{0}', space=sflag, size = 0x4, scoped, tag = 'scoped memory for tpu_custom_call.1']
    #allocation8 [shape = 'u8[4096]{0}', space=vmem, size = 0x1000, scoped, tag = 'output window, operand 0, single buffered']
    %9 = vsyncpa [#allocation4], 0
    %10 = vsyncpa [#allocation7], 0
    %11 = vsyncpa [#allocation5], 0
    // Predicated region
    $region2: #{tpu_custom_call.1} parent=1 // pred_check
      _
    $region3: #{tpu_custom_call.1} parent=1 // pred_check_branch
      %13 = sbr.rel (0) target = $region5
    $region4: #{tpu_custom_call.1} parent=1 // pred_region
      _
    $region5: #{tpu_custom_call.1} parent=1 // pred_fallthru
      _
    // Predicated region
    $region6: #{tpu_custom_call.1} parent=1 // pred_check
      _
    $region7: #{tpu_custom_call.1} parent=1 // pred_check_branch
      %15 = sbr.rel (0) target = $region9
    $region8: #{tpu_custom_call.1} parent=1 // pred_region
      %s17 = ssub.s32 6528, 6528
      %18 = vsyncadd [#allocation4], %s17
      %s19 = sshll.u32 [#allocation3], 4
      %s20 = int_to_ptr.vmem [resolvable:$true] %s19
      %25 = dma.hbm_to_vmem [thread:$0]  %s1, 6528, %s20, [#allocation4], 384, 384, 24
    $region9: #{tpu_custom_call.1} parent=1 // pred_fallthru
      _
    // Predicated region
    $region10: #{tpu_custom_call.1} parent=1 // pred_check
      _
    $region11: #{tpu_custom_call.1} parent=1 // pred_check_branch
      %27 = sbr.rel (0) target = $region13
    $region12: #{tpu_custom_call.1} parent=1 // pred_region
      %s29 = ssub.s32 4096, 4096
      %30 = vsyncadd [#allocation7], %s29
      %s31 = sshll.u32 [#allocation6], 4
      %s32 = int_to_ptr.vmem [resolvable:$true] %s31
      %37 = dma.hbm_to_vmem [thread:$0]  %s2, 4096, %s32, [#allocation7], 128, 128, 8
    $region13: #{tpu_custom_call.1} parent=1 // pred_fallthru
      _
    // Predicated region
    $region14: #{tpu_custom_call.1} parent=1 // pred_check
      _
    $region15: #{tpu_custom_call.1} parent=1 // pred_check_branch
      %39 = sbr.rel (0) target = $region17
    $region16: #{tpu_custom_call.1} parent=1 // pred_region
      _
    $region17: #{tpu_custom_call.1} parent=1 // pred_fallthru
      _
    // Predicated region
    $region18: #{tpu_custom_call.1} parent=1 // pred_check
      _
    $region19: #{tpu_custom_call.1} parent=1 // pred_check_branch
      %41 = sbr.rel (0) target = $region21
    $region20: #{tpu_custom_call.1} parent=1 // pred_region
      %42 = dma.done [#allocation4], 6528
    $region21: #{tpu_custom_call.1} parent=1 // pred_fallthru
      _
    // Predicated region
    $region22: #{tpu_custom_call.1} parent=1 // pred_check
      _
    $region23: #{tpu_custom_call.1} parent=1 // pred_check_branch
      %44 = sbr.rel (0) target = $region25
    $region24: #{tpu_custom_call.1} parent=1 // pred_region
      %45 = dma.done [#allocation7], 4096
    $region25: #{tpu_custom_call.1} parent=1 // pred_fallthru
      _
    %v46 = vld [vmem:[#allocation3] sm:$0xff]
    %v47 = vld [vmem:[#allocation3 + $0x8] sm:$0xff]
    %v48 = vld [vmem:[#allocation3 + $0x10] sm:$0xff]
    %v49 = vld [vmem:[#allocation3 + $0x18] sm:$0xff]
    %v50 = vld [vmem:[#allocation3 + $0x20] sm:$0xff]
    %v51 = vld [vmem:[#allocation3 + $0x28] sm:$0xff]
    %v52 = vld [vmem:[#allocation3 + $0x30] sm:$0xff]
    %v53 = vld [vmem:[#allocation3 + $0x38] sm:$0xff]
    %v54 = vld [vmem:[#allocation3 + $0x40] sm:$0xff]
    %v55 = vld [vmem:[#allocation3 + $0x48] sm:$0xff]
    %v56 = vld [vmem:[#allocation3 + $0x50] sm:$0xff]
    %v57 = vld [vmem:[#allocation3 + $0x58] sm:$0xff]
    %v58 = vld [vmem:[#allocation3 + $0x60] sm:$0xff]
    %v59 = vld [vmem:[#allocation3 + $0x68] sm:$0xff]
    %v60 = vld [vmem:[#allocation3 + $0x70] sm:$0xff]
    %v61 = vld [vmem:[#allocation3 + $0x78] sm:$0xff]
    %v62 = vld [vmem:[#allocation3 + $0x80] sm:$0xff]
    %v63 = vld [vmem:[#allocation3 + $0x88] sm:$0xff]
    %v64 = vld [vmem:[#allocation3 + $0x90] sm:$0xff]
    %v65 = vld [vmem:[#allocation3 + $0x98] sm:$0xff]
    %v66 = vld [vmem:[#allocation3 + $0xa0] sm:$0xff]
    %v67 = vld [vmem:[#allocation3 + $0xa8] sm:$0xff]
    %v68 = vld [vmem:[#allocation3 + $0xb0] sm:$0xff]
    %v69 = vld [vmem:[#allocation3 + $0xb8] sm:$0xff]
    %v70 = vld [vmem:[#allocation3 + $0xc0] sm:$0xff]
    %v71 = vld [vmem:[#allocation3 + $0xc8] sm:$0xff]
    %v72 = vld [vmem:[#allocation3 + $0xd0] sm:$0xff]
    %v73 = vld [vmem:[#allocation3 + $0xd8] sm:$0xff]
    %v74 = vld [vmem:[#allocation3 + $0xe0] sm:$0xff]
    %v75 = vld [vmem:[#allocation3 + $0xe8] sm:$0xff]
    %v76 = vld [vmem:[#allocation3 + $0xf0] sm:$0xff]
    %v77 = vld [vmem:[#allocation3 + $0xf8] sm:$0xff]
    %v78 = vld [vmem:[#allocation3 + $0x100] sm:$0xff]
    %v79 = vld [vmem:[#allocation3 + $0x108] sm:$0xff]
    %v80 = vld [vmem:[#allocation3 + $0x110] sm:$0xff]
    %v81 = vld [vmem:[#allocation3 + $0x118] sm:$0xff]
    %v82 = vld [vmem:[#allocation3 + $0x120] sm:$0xff]
    %v83 = vld [vmem:[#allocation3 + $0x128] sm:$0xff]
    %v84 = vld [vmem:[#allocation3 + $0x130] sm:$0xff]
    %v85 = vld [vmem:[#allocation3 + $0x138] sm:$0xff]
    %v86 = vld [vmem:[#allocation3 + $0x140] sm:$0xff]
    %v87 = vld [vmem:[#allocation3 + $0x148] sm:$0xff]
    %v88 = vld [vmem:[#allocation3 + $0x150] sm:$0xff]
    %v89 = vld [vmem:[#allocation3 + $0x158] sm:$0xff]
    %v90 = vld [vmem:[#allocation3 + $0x160] sm:$0xff]
    %v91 = vld [vmem:[#allocation3 + $0x168] sm:$0xff]
    %v92 = vld [vmem:[#allocation3 + $0x170] sm:$0xff]
    %v93 = vld [vmem:[#allocation3 + $0x178] sm:$0xff]
    %v94 = vld [vmem:[#allocation3 + $0x180] sm:$0x1f]
    %v95 = vld [vmem:[#allocation3 + $0x188] sm:$0x1f]
    %v96 = vld [vmem:[#allocation3 + $0x190] sm:$0x1f]
    %v97 = vld [vmem:[%s0] sm:$0xff]
    %v98 = vld [vmem:[%s0 + $0x8] sm:$0xff]
    %v99 = vld [vmem:[%s0 + $0x10] sm:$0xff]
    %v100 = vld [vmem:[%s0 + $0x18] sm:$0xff]
    %v101 = vld [vmem:[%s0 + $0x20] sm:$0xff]
    %v102 = vld [vmem:[%s0 + $0x28] sm:$0xff]
    %v103 = vld [vmem:[%s0 + $0x30] sm:$0xff]
    %v104 = vld [vmem:[%s0 + $0x38] sm:$0xff]
    %vm105 = vcmask 39936
    %v107 = vsel %vm105, %v97, 0
    %v110 = vsel %vm105, %v98, 0
    %v113 = vsel %vm105, %v99, 0
    %v116 = vsel %vm105, %v100, 0
    %v119 = vsel %vm105, %v101, 0
    %v122 = vsel %vm105, %v102, 0
    %v125 = vsel %vm105, %v103, 0
    %v128 = vsel %vm105, %v104, 0
    %vm130 = vcmask 1044480
    %v132 = vsel %vm130, %v94, 0
    %v135 = vsel %vm130, %v95, 0
    %v138 = vsel %vm130, %v96, 0
    %140 = vmatprep.subr.mxu0 %v135
    %141 = vmatpush1.msra.mxu0 %v132
    %142 = vmatprep.subr.mxu0 0.0
    %143 = vmatpush1.msra.mxu0 0.0
    %144 = vmatprep.subr.mxu0 0.0
    %145 = vmatpush1.msra.mxu0 0.0
    %146 = vmatprep.subr.mxu0 0.0
    %147 = vmatpush1.msra.mxu0 0.0
    %148 = vmatprep.subr.mxu0 0.0
    %149 = vmatpush1.msra.mxu0 0.0
    %150 = vmatprep.subr.mxu0 0.0
    %151 = vmatpush1.msra.mxu0 0.0
    %152 = vmatprep.subr.mxu0 0.0
    %153 = vmatpush1.msra.mxu0 0.0
    %154 = vmatprep.subr.mxu0 0.0
    %155 = vmatpush1.msra.mxu0 0.0
    %156 = vmatprep.subr.mxu0 0.0
    %157 = vmatpush1.msra.mxu0 0.0
    %158 = vmatprep.subr.mxu0 0.0
    %159 = vmatpush1.msra.mxu0 0.0
    %160 = vmatprep.subr.mxu0 0.0
    %161 = vmatpush1.msra.mxu0 0.0
    %162 = vmatprep.subr.mxu0 0.0
    %163 = vmatpush1.msra.mxu0 0.0
    %164 = vmatprep.subr.mxu0 0.0
    %165 = vmatpush1.msra.mxu0 0.0
    %166 = vmatprep.subr.mxu0 0.0
    %167 = vmatpush1.msra.mxu0 0.0
    %168 = vmatprep.subr.mxu0 0.0
    %169 = vmatpush1.msra.mxu0 0.0
    %170 = vmatprep.subr.mxu0 0.0
    %171 = vmatpush1.msra.mxu0 0.0
    %172 = vmatprep.subr.mxu0 0.0
    %173 = vmatpush1.msra.mxu0 0.0
    %174 = vmatprep.subr.mxu0 0.0
    %175 = vmatpush1.msra.mxu0 0.0
    %176 = vmatprep.subr.mxu0 0.0
    %177 = vmatpush1.msra.mxu0 0.0
    %178 = vmatprep.subr.mxu0 0.0
    %179 = vmatpush1.msra.mxu0 0.0
    %180 = vmatprep.subr.mxu0 0.0
    %181 = vmatpush1.msra.mxu0 0.0
    %182 = vmatprep.subr.mxu0 0.0
    %183 = vmatpush1.msra.mxu0 0.0
    %184 = vmatprep.subr.mxu0 0.0
    %185 = vmatpush1.msra.mxu0 0.0
    %186 = vmatprep.subr.mxu0 0.0
    %187 = vmatpush1.msra.mxu0 0.0
    %188 = vmatprep.subr.mxu0 0.0
    %189 = vmatpush1.msra.mxu0 0.0
    %190 = vmatprep.subr.mxu0 0.0
    %191 = vmatpush1.msra.mxu0 0.0
    %192 = vmatprep.subr.mxu0 0.0
    %193 = vmatpush1.msra.mxu0 0.0
    %194 = vmatprep.subr.mxu0 0.0
    %195 = vmatpush1.msra.mxu0 0.0
    %196 = vmatprep.subr.mxu0 0.0
    %197 = vmatpush1.msra.mxu0 0.0
    %198 = vmatprep.subr.mxu0 0.0
    %199 = vmatpush1.msra.mxu0 0.0
    %200 = vmatprep.subr.mxu0 0.0
    %201 = vmatpush1.msra.mxu0 0.0
    %202 = vmatprep.subr.mxu0 0.0
    %203 = vmatpush1.msra.mxu0 0.0
    %204 = vmatprep.mubr.f32.mxu0 0.0
    %205 = vmatmul.mubr.f32.gmra.mrb[0].mxu0 %v107
    %v206 = vpop.f32.mrb[0].mxu0
    %v207 = vadd.f32 0.0, %v206
    %v208 = vpop.f32.mrb[0].mxu0
    %v209 = vadd.f32 0.0, %v208
    %210 = vmatprep.mubr.f32.mxu0 0.0
    %211 = vmatmul.mubr.f32.gmra.mrb[0].mxu0 %v110
    %v212 = vpop.f32.mrb[0].mxu0
    %v213 = vadd.f32 0.0, %v212
    %v214 = vpop.f32.mrb[0].mxu0
    %v215 = vadd.f32 0.0, %v214
    %216 = vmatprep.mubr.f32.mxu0 0.0
    %217 = vmatmul.mubr.f32.gmra.mrb[0].mxu0 %v113
    %v218 = vpop.f32.mrb[0].mxu0
    %v219 = vadd.f32 0.0, %v218
    %v220 = vpop.f32.mrb[0].mxu0
    %v221 = vadd.f32 0.0, %v220
    %222 = vmatprep.mubr.f32.mxu0 0.0
    %223 = vmatmul.mubr.f32.gmra.mrb[0].mxu0 %v116
    %v224 = vpop.f32.mrb[0].mxu0
    %v225 = vadd.f32 0.0, %v224
    %v226 = vpop.f32.mrb[0].mxu0
    %v227 = vadd.f32 0.0, %v226
    %228 = vmatprep.mubr.f32.mxu0 0.0
    %229 = vmatmul.mubr.f32.gmra.mrb[0].mxu0 %v119
    %v230 = vpop.f32.mrb[0].mxu0
    %v231 = vadd.f32 0.0, %v230
    %v232 = vpop.f32.mrb[0].mxu0
    %v233 = vadd.f32 0.0, %v232
    %234 = vmatprep.mubr.f32.mxu0 0.0
    %235 = vmatmul.mubr.f32.gmra.mrb[0].mxu0 %v122
    %v236 = vpop.f32.mrb[0].mxu0
    %v237 = vadd.f32 0.0, %v236
    %v238 = vpop.f32.mrb[0].mxu0
    %v239 = vadd.f32 0.0, %v238
    %240 = vmatprep.mubr.f32.mxu0 0.0
    %241 = vmatmul.mubr.f32.gmra.mrb[0].mxu0 %v125
    %v242 = vpop.f32.mrb[0].mxu0
    %v243 = vadd.f32 0.0, %v242
    %v244 = vpop.f32.mrb[0].mxu0
    %v245 = vadd.f32 0.0, %v244
    %246 = vmatprep.mubr.f32.mxu0 0.0
    %247 = vmatmul.mubr.f32.gmra.mrb[0].mxu0 %v128
    %v248 = vpop.f32.mrb[0].mxu0
    %v249 = vadd.f32 0.0, %v248
    %v250 = vpop.f32.mrb[0].mxu0
    %v251 = vadd.f32 0.0, %v250
    %252 = vdwg.mxu0
    %253 = vmatprep.subr.mxu0 0.0
    %254 = vmatpush1.msra.mxu0 %v138
    %255 = vmatprep.subr.mxu0 0.0
    %256 = vmatpush1.msra.mxu0 0.0
    %257 = vmatprep.subr.mxu0 0.0
    %258 = vmatpush1.msra.mxu0 0.0
    %259 = vmatprep.subr.mxu0 0.0
    %260 = vmatpush1.msra.mxu0 0.0
    %261 = vmatprep.subr.mxu0 0.0
    %262 = vmatpush1.msra.mxu0 0.0
    %263 = vmatprep.subr.mxu0 0.0
    %264 = vmatpush1.msra.mxu0 0.0
    %265 = vmatprep.subr.mxu0 0.0
    %266 = vmatpush1.msra.mxu0 0.0
    %267 = vmatprep.subr.mxu0 0.0
    %268 = vmatpush1.msra.mxu0 0.0
    %269 = vmatprep.subr.mxu0 0.0
    %270 = vmatpush1.msra.mxu0 0.0
    %271 = vmatprep.subr.mxu0 0.0
    %272 = vmatpush1.msra.mxu0 0.0
    %273 = vmatprep.subr.mxu0 0.0
    %274 = vmatpush1.msra.mxu0 0.0
    %275 = vmatprep.subr.mxu0 0.0
    %276 = vmatpush1.msra.mxu0 0.0
    %277 = vmatprep.subr.mxu0 0.0
    %278 = vmatpush1.msra.mxu0 0.0
    %279 = vmatprep.subr.mxu0 0.0
    %280 = vmatpush1.msra.mxu0 0.0
    %281 = vmatprep.subr.mxu0 0.0
    %282 = vmatpush1.msra.mxu0 0.0
    %283 = vmatprep.subr.mxu0 0.0
    %284 = vmatpush1.msra.mxu0 0.0
    %285 = vmatprep.subr.mxu0 0.0
    %286 = vmatpush1.msra.mxu0 0.0
    %287 = vmatprep.subr.mxu0 0.0
    %288 = vmatpush1.msra.mxu0 0.0
    %289 = vmatprep.subr.mxu0 0.0
    %290 = vmatpush1.msra.mxu0 0.0
    %291 = vmatprep.subr.mxu0 0.0
    %292 = vmatpush1.msra.mxu0 0.0
    %293 = vmatprep.subr.mxu0 0.0
    %294 = vmatpush1.msra.mxu0 0.0
    %295 = vmatprep.subr.mxu0 0.0
    %296 = vmatpush1.msra.mxu0 0.0
    %297 = vmatprep.subr.mxu0 0.0
    %298 = vmatpush1.msra.mxu0 0.0
    %299 = vmatprep.subr.mxu0 0.0
    %300 = vmatpush1.msra.mxu0 0.0
    %301 = vmatprep.subr.mxu0 0.0
    %302 = vmatpush1.msra.mxu0 0.0
    %303 = vmatprep.subr.mxu0 0.0
    %304 = vmatpush1.msra.mxu0 0.0
    %305 = vmatprep.subr.mxu0 0.0
    %306 = vmatpush1.msra.mxu0 0.0
    %307 = vmatprep.subr.mxu0 0.0
    %308 = vmatpush1.msra.mxu0 0.0
    %309 = vmatprep.subr.mxu0 0.0
    %310 = vmatpush1.msra.mxu0 0.0
    %311 = vmatprep.subr.mxu0 0.0
    %312 = vmatpush1.msra.mxu0 0.0
    %313 = vmatprep.subr.mxu0 0.0
    %314 = vmatpush1.msra.mxu0 0.0
    %315 = vmatprep.subr.mxu0 0.0
    %316 = vmatpush1.msra.mxu0 0.0
    %317 = vmatprep.mubr.f32.mxu0 0.0
    %318 = vmatmul.mubr.f32.gmra.mrb[0].mxu0 %v107
    %v319 = vpop.f32.mrb[0].mxu0
    %v320 = vadd.f32 0.0, %v319
    %v321 = vpop.f32.mrb[0].mxu0
    %322 = vmatprep.mubr.f32.mxu0 0.0
    %323 = vmatmul.mubr.f32.gmra.mrb[0].mxu0 %v110
    %v324 = vpop.f32.mrb[0].mxu0
    %v325 = vadd.f32 0.0, %v324
    %v326 = vpop.f32.mrb[0].mxu0
    %327 = vmatprep.mubr.f32.mxu0 0.0
    %328 = vmatmul.mubr.f32.gmra.mrb[0].mxu0 %v113
    %v329 = vpop.f32.mrb[0].mxu0
    %v330 = vadd.f32 0.0, %v329
    %v331 = vpop.f32.mrb[0].mxu0
    %332 = vmatprep.mubr.f32.mxu0 0.0
    %333 = vmatmul.mubr.f32.gmra.mrb[0].mxu0 %v116
    %v334 = vpop.f32.mrb[0].mxu0
    %v335 = vadd.f32 0.0, %v334
    %v336 = vpop.f32.mrb[0].mxu0
    %337 = vmatprep.mubr.f32.mxu0 0.0
    %338 = vmatmul.mubr.f32.gmra.mrb[0].mxu0 %v119
    %v339 = vpop.f32.mrb[0].mxu0
    %v340 = vadd.f32 0.0, %v339
    %v341 = vpop.f32.mrb[0].mxu0
    %342 = vmatprep.mubr.f32.mxu0 0.0
    %343 = vmatmul.mubr.f32.gmra.mrb[0].mxu0 %v122
    %v344 = vpop.f32.mrb[0].mxu0
    %v345 = vadd.f32 0.0, %v344
    %v346 = vpop.f32.mrb[0].mxu0
    %347 = vmatprep.mubr.f32.mxu0 0.0
    %348 = vmatmul.mubr.f32.gmra.mrb[0].mxu0 %v125
    %v349 = vpop.f32.mrb[0].mxu0
    %v350 = vadd.f32 0.0, %v349
    %v351 = vpop.f32.mrb[0].mxu0
    %352 = vmatprep.mubr.f32.mxu0 0.0
    %353 = vmatmul.mubr.f32.gmra.mrb[0].mxu0 %v128
    %v354 = vpop.f32.mrb[0].mxu0
    %v355 = vadd.f32 0.0, %v354
    %v356 = vpop.f32.mrb[0].mxu0
    %357 = vdwg.mxu0
    %358 = vst [vmem:[#allocation2] sm:$0xff] %v207
    %359 = vst [vmem:[#allocation2 + $0x8] sm:$0xff] %v209
    %360 = vst [vmem:[#allocation2 + $0x10] sm:$0xff] %v320
    %361 = vst [vmem:[#allocation2 + $0x18] sm:$0xff] %v213
    %362 = vst [vmem:[#allocation2 + $0x20] sm:$0xff] %v215
    %363 = vst [vmem:[#allocation2 + $0x28] sm:$0xff] %v325
    %364 = vst [vmem:[#allocation2 + $0x30] sm:$0xff] %v219
    %365 = vst [vmem:[#allocation2 + $0x38] sm:$0xff] %v221
    %366 = vst [vmem:[#allocation2 + $0x40] sm:$0xff] %v330
    %367 = vst [vmem:[#allocation2 + $0x48] sm:$0xff] %v225
    %368 = vst [vmem:[#allocation2 + $0x50] sm:$0xff] %v227
    %369 = vst [vmem:[#allocation2 + $0x58] sm:$0xff] %v335
    %370 = vst [vmem:[#allocation2 + $0x60] sm:$0xff] %v231
    %371 = vst [vmem:[#allocation2 + $0x68] sm:$0xff] %v233
    %372 = vst [vmem:[#allocation2 + $0x70] sm:$0xff] %v340
    %373 = vst [vmem:[#allocation2 + $0x78] sm:$0xff] %v237
    %374 = vst [vmem:[#allocation2 + $0x80] sm:$0xff] %v239
    %375 = vst [vmem:[#allocation2 + $0x88] sm:$0xff] %v345
    %376 = vst [vmem:[#allocation2 + $0x90] sm:$0xff] %v243
    %377 = vst [vmem:[#allocation2 + $0x98] sm:$0xff] %v245
    %378 = vst [vmem:[#allocation2 + $0xa0] sm:$0xff] %v350
    %379 = vst [vmem:[#allocation2 + $0xa8] sm:$0xff] %v249
    %380 = vst [vmem:[#allocation2 + $0xb0] sm:$0xff] %v251
    %381 = vst [vmem:[#allocation2 + $0xb8] sm:$0xff] %v355
    %v382 = vld [vmem:[%s3] sm:$0x1]
    %v383 = vlaneseq
    %v384 = vshrl.u32 %v383, 7
    %v385 = vsub.s32 0, %v384
    %v386 = vrot.slane %v382, %v385
    %v387 = vld [vmem:[%s3 + $0x1] sm:$0x1]
    %v388 = vlaneseq
    %v389 = vshrl.u32 %v388, 7
    %v390 = vsub.s32 0, %v389
    %v391 = vrot.slane %v387, %v390
    %v392 = vld [vmem:[%s3 + $0x2] sm:$0x1]
    %v393 = vlaneseq
    %v394 = vshrl.u32 %v393, 7
    %v395 = vsub.s32 0, %v394
    %v396 = vrot.slane %v392, %v395
    %v397 = vld [vmem:[%s3 + $0x3] sm:$0x1]
    %v398 = vlaneseq
    %v399 = vshrl.u32 %v398, 7
    %v400 = vsub.s32 0, %v399
    %v401 = vrot.slane %v397, %v400
    %v402 = vld [vmem:[#allocation2] ss:$8 sm:$0x7]
    %s403 = scalar_lea.vmem [#allocation2], 24
    %v404 = vld [vmem:[%s403] ss:$8 sm:$0x7]
    %s405 = scalar_lea.vmem [#allocation2], 48
    %v406 = vld [vmem:[%s405] ss:$8 sm:$0x7]
    %s407 = scalar_lea.vmem [#allocation2], 72
    %v408 = vld [vmem:[%s407] ss:$8 sm:$0x7]
    %s409 = scalar_lea.vmem [#allocation2], 96
    %v410 = vld [vmem:[%s409] ss:$8 sm:$0x7]
    %s411 = scalar_lea.vmem [#allocation2], 120
    %v412 = vld [vmem:[%s411] ss:$8 sm:$0x7]
    %s413 = scalar_lea.vmem [#allocation2], 144
    %v414 = vld [vmem:[%s413] ss:$8 sm:$0x7]
    %s415 = scalar_lea.vmem [#allocation2], 168
    %v416 = vld [vmem:[%s415] ss:$8 sm:$0x7]
    %417 = vmatprep.subr.mxu0 %v47
    %418 = vmatpush1.msra.mxu0 %v46
    %419 = vmatprep.subr.mxu0 %v50
    %420 = vmatpush1.msra.mxu0 %v49
    %421 = vmatprep.subr.mxu0 %v53
    %422 = vmatpush1.msra.mxu0 %v52
    %423 = vmatprep.subr.mxu0 %v56
    %424 = vmatpush1.msra.mxu0 %v55
    %425 = vmatprep.subr.mxu0 %v59
    %426 = vmatpush1.msra.mxu0 %v58
    %427 = vmatprep.subr.mxu0 %v62
    %428 = vmatpush1.msra.mxu0 %v61
    %429 = vmatprep.subr.mxu0 %v65
    %430 = vmatpush1.msra.mxu0 %v64
    %431 = vmatprep.subr.mxu0 %v68
    %432 = vmatpush1.msra.mxu0 %v67
    %433 = vmatprep.subr.mxu0 %v71
    %434 = vmatpush1.msra.mxu0 %v70
    %435 = vmatprep.subr.mxu0 %v74
    %436 = vmatpush1.msra.mxu0 %v73
    %437 = vmatprep.subr.mxu0 %v77
    %438 = vmatpush1.msra.mxu0 %v76
    %439 = vmatprep.subr.mxu0 %v80
    %440 = vmatpush1.msra.mxu0 %v79
    %441 = vmatprep.subr.mxu0 %v83
    %442 = vmatpush1.msra.mxu0 %v82
    %443 = vmatprep.subr.mxu0 %v86
    %444 = vmatpush1.msra.mxu0 %v85
    %445 = vmatprep.subr.mxu0 %v89
    %446 = vmatpush1.msra.mxu0 %v88
    %447 = vmatprep.subr.mxu0 %v92
    %448 = vmatpush1.msra.mxu0 %v91
    %449 = vmatprep.subr.mxu0 0.0
    %450 = vmatpush1.msra.mxu0 0.0
    %451 = vmatprep.subr.mxu0 0.0
    %452 = vmatpush1.msra.mxu0 0.0
    %453 = vmatprep.subr.mxu0 0.0
    %454 = vmatpush1.msra.mxu0 0.0
    %455 = vmatprep.subr.mxu0 0.0
    %456 = vmatpush1.msra.mxu0 0.0
    %457 = vmatprep.subr.mxu0 0.0
    %458 = vmatpush1.msra.mxu0 0.0
    %459 = vmatprep.subr.mxu0 0.0
    %460 = vmatpush1.msra.mxu0 0.0
    %461 = vmatprep.subr.mxu0 0.0
    %462 = vmatpush1.msra.mxu0 0.0
    %463 = vmatprep.subr.mxu0 0.0
    %464 = vmatpush1.msra.mxu0 0.0
    %465 = vmatprep.subr.mxu0 0.0
    %466 = vmatpush1.msra.mxu0 0.0
    %467 = vmatprep.subr.mxu0 0.0
    %468 = vmatpush1.msra.mxu0 0.0
    %469 = vmatprep.subr.mxu0 0.0
    %470 = vmatpush1.msra.mxu0 0.0
    %471 = vmatprep.subr.mxu0 0.0
    %472 = vmatpush1.msra.mxu0 0.0
    %473 = vmatprep.subr.mxu0 0.0
    %474 = vmatpush1.msra.mxu0 0.0
    %475 = vmatprep.subr.mxu0 0.0
    %476 = vmatpush1.msra.mxu0 0.0
    %477 = vmatprep.subr.mxu0 0.0
    %478 = vmatpush1.msra.mxu0 0.0
    %479 = vmatprep.subr.mxu0 0.0
    %480 = vmatpush1.msra.mxu0 0.0
    %481 = vmatprep.mubr.f32.mxu0 0.0
    %482 = vmatmul.mubr.f32.gmra.mrb[0].mxu0 0.0
    %v483 = vpop.f32.mrb[0].mxu0
    %v484 = vadd.f32 0.0, %v483
    %v485 = vpop.f32.mrb[0].mxu0
    %v486 = vadd.f32 0.0, %v485
    %487 = vdwg.mxu0
    %488 = vmatprep.subr.mxu0 0.0
    %489 = vmatpush1.msra.mxu0 %v48
    %490 = vmatprep.subr.mxu0 0.0
    %491 = vmatpush1.msra.mxu0 %v51
    %492 = vmatprep.subr.mxu0 0.0
    %493 = vmatpush1.msra.mxu0 %v54
    %494 = vmatprep.subr.mxu0 0.0
    %495 = vmatpush1.msra.mxu0 %v57
    %496 = vmatprep.subr.mxu0 0.0
    %497 = vmatpush1.msra.mxu0 %v60
    %498 = vmatprep.subr.mxu0 0.0
    %499 = vmatpush1.msra.mxu0 %v63
    %500 = vmatprep.subr.mxu0 0.0
    %501 = vmatpush1.msra.mxu0 %v66
    %502 = vmatprep.subr.mxu0 0.0
    %503 = vmatpush1.msra.mxu0 %v69
    %504 = vmatprep.subr.mxu0 0.0
    %505 = vmatpush1.msra.mxu0 %v72
    %506 = vmatprep.subr.mxu0 0.0
    %507 = vmatpush1.msra.mxu0 %v75
    %508 = vmatprep.subr.mxu0 0.0
    %509 = vmatpush1.msra.mxu0 %v78
    %510 = vmatprep.subr.mxu0 0.0
    %511 = vmatpush1.msra.mxu0 %v81
    %512 = vmatprep.subr.mxu0 0.0
    %513 = vmatpush1.msra.mxu0 %v84
    %514 = vmatprep.subr.mxu0 0.0
    %515 = vmatpush1.msra.mxu0 %v87
    %516 = vmatprep.subr.mxu0 0.0
    %517 = vmatpush1.msra.mxu0 %v90
    %518 = vmatprep.subr.mxu0 0.0
    %519 = vmatpush1.msra.mxu0 %v93
    %520 = vmatprep.subr.mxu0 0.0
    %521 = vmatpush1.msra.mxu0 0.0
    %522 = vmatprep.subr.mxu0 0.0
    %523 = vmatpush1.msra.mxu0 0.0
    %524 = vmatprep.subr.mxu0 0.0
    %525 = vmatpush1.msra.mxu0 0.0
    %526 = vmatprep.subr.mxu0 0.0
    %527 = vmatpush1.msra.mxu0 0.0
    %528 = vmatprep.subr.mxu0 0.0
    %529 = vmatpush1.msra.mxu0 0.0
    %530 = vmatprep.subr.mxu0 0.0
    %531 = vmatpush1.msra.mxu0 0.0
    %532 = vmatprep.subr.mxu0 0.0
    %533 = vmatpush1.msra.mxu0 0.0
    %534 = vmatprep.subr.mxu0 0.0
    %535 = vmatpush1.msra.mxu0 0.0
    %536 = vmatprep.subr.mxu0 0.0
    %537 = vmatpush1.msra.mxu0 0.0
    %538 = vmatprep.subr.mxu0 0.0
    %539 = vmatpush1.msra.mxu0 0.0
    %540 = vmatprep.subr.mxu0 0.0
    %541 = vmatpush1.msra.mxu0 0.0
    %542 = vmatprep.subr.mxu0 0.0
    %543 = vmatpush1.msra.mxu0 0.0
    %544 = vmatprep.subr.mxu0 0.0
    %545 = vmatpush1.msra.mxu0 0.0
    %546 = vmatprep.subr.mxu0 0.0
    %547 = vmatpush1.msra.mxu0 0.0
    %548 = vmatprep.subr.mxu0 0.0
    %549 = vmatpush1.msra.mxu0 0.0
    %550 = vmatprep.subr.mxu0 0.0
    %551 = vmatpush1.msra.mxu0 0.0
    %552 = vmatprep.mubr.f32.mxu0 0.0
    %553 = vmatmul.mubr.f32.gmra.mrb[0].mxu0 0.0
    %v554 = vpop.f32.mrb[0].mxu0
    %v555 = vadd.f32 0.0, %v554
    %v556 = vpop.f32.mrb[0].mxu0
    %557 = vdwg.mxu0
    %v559 = vcombine.high %v484, %v484
    %v561 = vunpack.c.l.s4 1966171168
    %v562 = vunpack.c.0.s8 %v561
    %v563 = vlaneseq
    %v564 = vshrl.u32 %v563, 7
    %v565 = vsub.s32 %v562, %v564
    %v566 = vrot.slane %v484, %v565
    %v568 = vunpack.c.l.s4 1966171168
    %v569 = vunpack.c.0.s8 %v568
    %v570 = vlaneseq
    %v571 = vshrl.u32 %v570, 7
    %v572 = vsub.s32 %v569, %v571
    %v573 = vrot.slane %v559, %v572
    %v574 = vcombine.high %v566, %v566
    %v575 = vcombine.high %v573, %v573
    %v577 = vunpack.c.l.s4 1966171168
    %v578 = vunpack.c.0.s8 %v577
    %v579 = vlaneseq
    %v580 = vshrl.u32 %v579, 7
    %v581 = vsub.s32 %v578, %v580
    %v582 = vrot.slane %v566, %v581
    %v584 = vunpack.c.l.s4 1966171168
    %v585 = vunpack.c.0.s8 %v584
    %v586 = vlaneseq
    %v587 = vshrl.u32 %v586, 7
    %v588 = vsub.s32 %v585, %v587
    %v589 = vrot.slane %v573, %v588
    %v591 = vunpack.c.l.s4 1966171168
    %v592 = vunpack.c.0.s8 %v591
    %v593 = vlaneseq
    %v594 = vshrl.u32 %v593, 7
    %v595 = vsub.s32 %v592, %v594
    %v596 = vrot.slane %v574, %v595
    %v598 = vunpack.c.l.s4 1966171168
    %v599 = vunpack.c.0.s8 %v598
    %v600 = vlaneseq
    %v601 = vshrl.u32 %v600, 7
    %v602 = vsub.s32 %v599, %v601
    %v603 = vrot.slane %v575, %v602
    %v604 = vcombine.high %v582, %v582
    %v605 = vcombine.high %v589, %v589
    %v606 = vcombine.high %v596, %v596
    %v607 = vcombine.high %v603, %v603
    %v616 = vadd.f32 %v402, %v582
    %v617 = vadd.f32 %v404, %v596
    %v618 = vadd.f32 %v406, %v604
    %v619 = vadd.f32 %v408, %v606
    %v620 = vadd.f32 %v410, %v589
    %v621 = vadd.f32 %v412, %v603
    %v622 = vadd.f32 %v414, %v605
    %v623 = vadd.f32 %v416, %v607
    %v625 = vcombine.high %v386, %v386
    %v627 = vunpack.c.l.s4 1966171168
    %v628 = vunpack.c.0.s8 %v627
    %v629 = vlaneseq
    %v630 = vshrl.u32 %v629, 7
    %v631 = vsub.s32 %v628, %v630
    %v632 = vrot.slane %v386, %v631
    %v634 = vunpack.c.l.s4 1966171168
    %v635 = vunpack.c.0.s8 %v634
    %v636 = vlaneseq
    %v637 = vshrl.u32 %v636, 7
    %v638 = vsub.s32 %v635, %v637
    %v639 = vrot.slane %v625, %v638
    %v640 = vcombine.high %v632, %v632
    %v641 = vcombine.high %v639, %v639
    %v643 = vunpack.c.l.s4 1966171168
    %v644 = vunpack.c.0.s8 %v643
    %v645 = vlaneseq
    %v646 = vshrl.u32 %v645, 7
    %v647 = vsub.s32 %v644, %v646
    %v648 = vrot.slane %v632, %v647
    %v650 = vunpack.c.l.s4 1966171168
    %v651 = vunpack.c.0.s8 %v650
    %v652 = vlaneseq
    %v653 = vshrl.u32 %v652, 7
    %v654 = vsub.s32 %v651, %v653
    %v655 = vrot.slane %v639, %v654
    %v657 = vunpack.c.l.s4 1966171168
    %v658 = vunpack.c.0.s8 %v657
    %v659 = vlaneseq
    %v660 = vshrl.u32 %v659, 7
    %v661 = vsub.s32 %v658, %v660
    %v662 = vrot.slane %v640, %v661
    %v664 = vunpack.c.l.s4 1966171168
    %v665 = vunpack.c.0.s8 %v664
    %v666 = vlaneseq
    %v667 = vshrl.u32 %v666, 7
    %v668 = vsub.s32 %v665, %v667
    %v669 = vrot.slane %v641, %v668
    %v670 = vcombine.high %v648, %v648
    %v671 = vcombine.high %v655, %v655
    %v672 = vcombine.high %v662, %v662
    %v673 = vcombine.high %v669, %v669
    %v682 = vadd.f32 %v616, %v648
    %v683 = vadd.f32 %v617, %v662
    %v684 = vadd.f32 %v618, %v670
    %v685 = vadd.f32 %v619, %v672
    %v686 = vadd.f32 %v620, %v655
    %v687 = vadd.f32 %v621, %v669
    %v688 = vadd.f32 %v622, %v671
    %v689 = vadd.f32 %v623, %v673
    %v690 = vxor.u32 %v682, 2147483648
    %v691 = vxor.u32 %v683, 2147483648
    %v692 = vxor.u32 %v684, 2147483648
    %v693 = vxor.u32 %v685, 2147483648
    %v694 = vxor.u32 %v686, 2147483648
    %v695 = vxor.u32 %v687, 2147483648
    %v696 = vxor.u32 %v688, 2147483648
    %v697 = vxor.u32 %v689, 2147483648
    %v698 = vmul.f32 %v690, 1.442695
    %v699 = vpow.pop %v698
    %v700 = vmul.f32 %v691, 1.442695
    %v701 = vpow.pop %v700
    %v702 = vmul.f32 %v692, 1.442695
    %v703 = vpow.pop %v702
    %v704 = vmul.f32 %v693, 1.442695
    %v705 = vpow.pop %v704
    %v706 = vmul.f32 %v694, 1.442695
    %v707 = vpow.pop %v706
    %v708 = vmul.f32 %v695, 1.442695
    %v709 = vpow.pop %v708
    %v710 = vmul.f32 %v696, 1.442695
    %v711 = vpow.pop %v710
    %v712 = vmul.f32 %v697, 1.442695
    %v713 = vpow.pop %v712
    %v714 = vadd.f32 %v699, 1.0
    %v715 = vadd.f32 %v701, 1.0
    %v716 = vadd.f32 %v703, 1.0
    %v717 = vadd.f32 %v705, 1.0
    %v718 = vadd.f32 %v707, 1.0
    %v719 = vadd.f32 %v709, 1.0
    %v720 = vadd.f32 %v711, 1.0
    %v721 = vadd.f32 %v713, 1.0
    %v722 = vrcp.pop %v714
    %v723 = vmul.f32 1.0, %v722
    %v724 = vrcp.pop %v715
    %v725 = vmul.f32 1.0, %v724
    %v726 = vrcp.pop %v716
    %v727 = vmul.f32 1.0, %v726
    %v728 = vrcp.pop %v717
    %v729 = vmul.f32 1.0, %v728
    %v730 = vrcp.pop %v718
    %v731 = vmul.f32 1.0, %v730
    %v732 = vrcp.pop %v719
    %v733 = vmul.f32 1.0, %v732
    %v734 = vrcp.pop %v720
    %v735 = vmul.f32 1.0, %v734
    %v736 = vrcp.pop %v721
    %v737 = vmul.f32 1.0, %v736
    %v746 = vrot.slane %v402, 1
    %v747 = vrot.slane %v404, 1
    %v748 = vrot.slane %v406, 1
    %v749 = vrot.slane %v408, 1
    %v750 = vrot.slane %v410, 1
    %v751 = vrot.slane %v412, 1
    %v752 = vrot.slane %v414, 1
    %v753 = vrot.slane %v416, 1
    %v763 = vcombine.high %v486, %v486
    %v765 = vunpack.c.l.s4 1966171168
    %v766 = vunpack.c.0.s8 %v765
    %v767 = vlaneseq
    %v768 = vshrl.u32 %v767, 7
    %v769 = vsub.s32 %v766, %v768
    %v770 = vrot.slane %v486, %v769
    %v772 = vunpack.c.l.s4 1966171168
    %v773 = vunpack.c.0.s8 %v772
    %v774 = vlaneseq
    %v775 = vshrl.u32 %v774, 7
    %v776 = vsub.s32 %v773, %v775
    %v777 = vrot.slane %v763, %v776
    %v778 = vcombine.high %v770, %v770
    %v779 = vcombine.high %v777, %v777
    %v781 = vunpack.c.l.s4 1966171168
    %v782 = vunpack.c.0.s8 %v781
    %v783 = vlaneseq
    %v784 = vshrl.u32 %v783, 7
    %v785 = vsub.s32 %v782, %v784
    %v786 = vrot.slane %v770, %v785
    %v788 = vunpack.c.l.s4 1966171168
    %v789 = vunpack.c.0.s8 %v788
    %v790 = vlaneseq
    %v791 = vshrl.u32 %v790, 7
    %v792 = vsub.s32 %v789, %v791
    %v793 = vrot.slane %v777, %v792
    %v795 = vunpack.c.l.s4 1966171168
    %v796 = vunpack.c.0.s8 %v795
    %v797 = vlaneseq
    %v798 = vshrl.u32 %v797, 7
    %v799 = vsub.s32 %v796, %v798
    %v800 = vrot.slane %v778, %v799
    %v802 = vunpack.c.l.s4 1966171168
    %v803 = vunpack.c.0.s8 %v802
    %v804 = vlaneseq
    %v805 = vshrl.u32 %v804, 7
    %v806 = vsub.s32 %v803, %v805
    %v807 = vrot.slane %v779, %v806
    %v808 = vcombine.high %v786, %v786
    %v809 = vcombine.high %v793, %v793
    %v810 = vcombine.high %v800, %v800
    %v811 = vcombine.high %v807, %v807
    %v820 = vadd.f32 %v746, %v786
    %v821 = vadd.f32 %v747, %v800
    %v822 = vadd.f32 %v748, %v808
    %v823 = vadd.f32 %v749, %v810
    %v824 = vadd.f32 %v750, %v793
    %v825 = vadd.f32 %v751, %v807
    %v826 = vadd.f32 %v752, %v809
    %v827 = vadd.f32 %v753, %v811
    %v829 = vcombine.high %v391, %v391
    %v831 = vunpack.c.l.s4 1966171168
    %v832 = vunpack.c.0.s8 %v831
    %v833 = vlaneseq
    %v834 = vshrl.u32 %v833, 7
    %v835 = vsub.s32 %v832, %v834
    %v836 = vrot.slane %v391, %v835
    %v838 = vunpack.c.l.s4 1966171168
    %v839 = vunpack.c.0.s8 %v838
    %v840 = vlaneseq
    %v841 = vshrl.u32 %v840, 7
    %v842 = vsub.s32 %v839, %v841
    %v843 = vrot.slane %v829, %v842
    %v844 = vcombine.high %v836, %v836
    %v845 = vcombine.high %v843, %v843
    %v847 = vunpack.c.l.s4 1966171168
    %v848 = vunpack.c.0.s8 %v847
    %v849 = vlaneseq
    %v850 = vshrl.u32 %v849, 7
    %v851 = vsub.s32 %v848, %v850
    %v852 = vrot.slane %v836, %v851
    %v854 = vunpack.c.l.s4 1966171168
    %v855 = vunpack.c.0.s8 %v854
    %v856 = vlaneseq
    %v857 = vshrl.u32 %v856, 7
    %v858 = vsub.s32 %v855, %v857
    %v859 = vrot.slane %v843, %v858
    %v861 = vunpack.c.l.s4 1966171168
    %v862 = vunpack.c.0.s8 %v861
    %v863 = vlaneseq
    %v864 = vshrl.u32 %v863, 7
    %v865 = vsub.s32 %v862, %v864
    %v866 = vrot.slane %v844, %v865
    %v868 = vunpack.c.l.s4 1966171168
    %v869 = vunpack.c.0.s8 %v868
    %v870 = vlaneseq
    %v871 = vshrl.u32 %v870, 7
    %v872 = vsub.s32 %v869, %v871
    %v873 = vrot.slane %v845, %v872
    %v874 = vcombine.high %v852, %v852
    %v875 = vcombine.high %v859, %v859
    %v876 = vcombine.high %v866, %v866
    %v877 = vcombine.high %v873, %v873
    %v886 = vadd.f32 %v820, %v852
    %v887 = vadd.f32 %v821, %v866
    %v888 = vadd.f32 %v822, %v874
    %v889 = vadd.f32 %v823, %v876
    %v890 = vadd.f32 %v824, %v859
    %v891 = vadd.f32 %v825, %v873
    %v892 = vadd.f32 %v826, %v875
    %v893 = vadd.f32 %v827, %v877
    %v894 = vxor.u32 %v886, 2147483648
    %v895 = vxor.u32 %v887, 2147483648
    %v896 = vxor.u32 %v888, 2147483648
    %v897 = vxor.u32 %v889, 2147483648
    %v898 = vxor.u32 %v890, 2147483648
    %v899 = vxor.u32 %v891, 2147483648
    %v900 = vxor.u32 %v892, 2147483648
    %v901 = vxor.u32 %v893, 2147483648
    %v902 = vmul.f32 %v894, 1.442695
    %v903 = vpow.pop %v902
    %v904 = vmul.f32 %v895, 1.442695
    %v905 = vpow.pop %v904
    %v906 = vmul.f32 %v896, 1.442695
    %v907 = vpow.pop %v906
    %v908 = vmul.f32 %v897, 1.442695
    %v909 = vpow.pop %v908
    %v910 = vmul.f32 %v898, 1.442695
    %v911 = vpow.pop %v910
    %v912 = vmul.f32 %v899, 1.442695
    %v913 = vpow.pop %v912
    %v914 = vmul.f32 %v900, 1.442695
    %v915 = vpow.pop %v914
    %v916 = vmul.f32 %v901, 1.442695
    %v917 = vpow.pop %v916
    %v918 = vadd.f32 %v903, 1.0
    %v919 = vadd.f32 %v905, 1.0
    %v920 = vadd.f32 %v907, 1.0
    %v921 = vadd.f32 %v909, 1.0
    %v922 = vadd.f32 %v911, 1.0
    %v923 = vadd.f32 %v913, 1.0
    %v924 = vadd.f32 %v915, 1.0
    %v925 = vadd.f32 %v917, 1.0
    %v926 = vrcp.pop %v918
    %v927 = vmul.f32 1.0, %v926
    %v928 = vrcp.pop %v919
    %v929 = vmul.f32 1.0, %v928
    %v930 = vrcp.pop %v920
    %v931 = vmul.f32 1.0, %v930
    %v932 = vrcp.pop %v921
    %v933 = vmul.f32 1.0, %v932
    %v934 = vrcp.pop %v922
    %v935 = vmul.f32 1.0, %v934
    %v936 = vrcp.pop %v923
    %v937 = vmul.f32 1.0, %v936
    %v938 = vrcp.pop %v924
    %v939 = vmul.f32 1.0, %v938
    %v940 = vrcp.pop %v925
    %v941 = vmul.f32 1.0, %v940
    %v942 = vrot.slane %v402, 2
    %v943 = vrot.slane %v404, 2
    %v944 = vrot.slane %v406, 2
    %v945 = vrot.slane %v408, 2
    %v946 = vrot.slane %v410, 2
    %v947 = vrot.slane %v412, 2
    %v948 = vrot.slane %v414, 2
    %v949 = vrot.slane %v416, 2
    %v959 = vcombine.high %v396, %v396
    %v961 = vunpack.c.l.s4 1966171168
    %v962 = vunpack.c.0.s8 %v961
    %v963 = vlaneseq
    %v964 = vshrl.u32 %v963, 7
    %v965 = vsub.s32 %v962, %v964
    %v966 = vrot.slane %v396, %v965
    %v968 = vunpack.c.l.s4 1966171168
    %v969 = vunpack.c.0.s8 %v968
    %v970 = vlaneseq
    %v971 = vshrl.u32 %v970, 7
    %v972 = vsub.s32 %v969, %v971
    %v973 = vrot.slane %v959, %v972
    %v974 = vcombine.high %v966, %v966
    %v975 = vcombine.high %v973, %v973
    %v977 = vunpack.c.l.s4 1966171168
    %v978 = vunpack.c.0.s8 %v977
    %v979 = vlaneseq
    %v980 = vshrl.u32 %v979, 7
    %v981 = vsub.s32 %v978, %v980
    %v982 = vrot.slane %v966, %v981
    %v984 = vunpack.c.l.s4 1966171168
    %v985 = vunpack.c.0.s8 %v984
    %v986 = vlaneseq
    %v987 = vshrl.u32 %v986, 7
    %v988 = vsub.s32 %v985, %v987
    %v989 = vrot.slane %v973, %v988
    %v991 = vunpack.c.l.s4 1966171168
    %v992 = vunpack.c.0.s8 %v991
    %v993 = vlaneseq
    %v994 = vshrl.u32 %v993, 7
    %v995 = vsub.s32 %v992, %v994
    %v996 = vrot.slane %v974, %v995
    %v998 = vunpack.c.l.s4 1966171168
    %v999 = vunpack.c.0.s8 %v998
    %v1000 = vlaneseq
    %v1001 = vshrl.u32 %v1000, 7
    %v1002 = vsub.s32 %v999, %v1001
    %v1003 = vrot.slane %v975, %v1002
    %v1004 = vcombine.high %v982, %v982
    %v1005 = vcombine.high %v989, %v989
    %v1006 = vcombine.high %v996, %v996
    %v1007 = vcombine.high %v1003, %v1003
    %v1016 = vadd.f32 %v942, %v982
    %v1017 = vadd.f32 %v943, %v996
    %v1018 = vadd.f32 %v944, %v1004
    %v1019 = vadd.f32 %v945, %v1006
    %v1020 = vadd.f32 %v946, %v989
    %v1021 = vadd.f32 %v947, %v1003
    %v1022 = vadd.f32 %v948, %v1005
    %v1023 = vadd.f32 %v949, %v1007
    %v1024 = vadd.f32 %v555, %v401
    %v1026 = vcombine.high %v1024, %v1024
    %v1028 = vunpack.c.l.s4 1966171168
    %v1029 = vunpack.c.0.s8 %v1028
    %v1030 = vlaneseq
    %v1031 = vshrl.u32 %v1030, 7
    %v1032 = vsub.s32 %v1029, %v1031
    %v1033 = vrot.slane %v1024, %v1032
    %v1035 = vunpack.c.l.s4 1966171168
    %v1036 = vunpack.c.0.s8 %v1035
    %v1037 = vlaneseq
    %v1038 = vshrl.u32 %v1037, 7
    %v1039 = vsub.s32 %v1036, %v1038
    %v1040 = vrot.slane %v1026, %v1039
    %v1041 = vcombine.high %v1033, %v1033
    %v1042 = vcombine.high %v1040, %v1040
    %v1044 = vunpack.c.l.s4 1966171168
    %v1045 = vunpack.c.0.s8 %v1044
    %v1046 = vlaneseq
    %v1047 = vshrl.u32 %v1046, 7
    %v1048 = vsub.s32 %v1045, %v1047
    %v1049 = vrot.slane %v1033, %v1048
    %v1051 = vunpack.c.l.s4 1966171168
    %v1052 = vunpack.c.0.s8 %v1051
    %v1053 = vlaneseq
    %v1054 = vshrl.u32 %v1053, 7
    %v1055 = vsub.s32 %v1052, %v1054
    %v1056 = vrot.slane %v1040, %v1055
    %v1058 = vunpack.c.l.s4 1966171168
    %v1059 = vunpack.c.0.s8 %v1058
    %v1060 = vlaneseq
    %v1061 = vshrl.u32 %v1060, 7
    %v1062 = vsub.s32 %v1059, %v1061
    %v1063 = vrot.slane %v1041, %v1062
    %v1065 = vunpack.c.l.s4 1966171168
    %v1066 = vunpack.c.0.s8 %v1065
    %v1067 = vlaneseq
    %v1068 = vshrl.u32 %v1067, 7
    %v1069 = vsub.s32 %v1066, %v1068
    %v1070 = vrot.slane %v1042, %v1069
    %v1071 = vcombine.high %v1049, %v1049
    %v1072 = vcombine.high %v1056, %v1056
    %v1073 = vcombine.high %v1063, %v1063
    %v1074 = vcombine.high %v1070, %v1070
    %v1083 = vmul.f32 %v723, %v1049
    %v1084 = vmul.f32 %v725, %v1063
    %v1085 = vmul.f32 %v727, %v1071
    %v1086 = vmul.f32 %v729, %v1073
    %v1087 = vmul.f32 %v731, %v1056
    %v1088 = vmul.f32 %v733, %v1070
    %v1089 = vmul.f32 %v735, %v1072
    %v1090 = vmul.f32 %v737, %v1074
    %v1091 = vadd.f32 %v1016, %v1083
    %v1092 = vadd.f32 %v1017, %v1084
    %v1093 = vadd.f32 %v1018, %v1085
    %v1094 = vadd.f32 %v1019, %v1086
    %v1095 = vadd.f32 %v1020, %v1087
    %v1096 = vadd.f32 %v1021, %v1088
    %v1097 = vadd.f32 %v1022, %v1089
    %v1098 = vadd.f32 %v1023, %v1090
    %v1099 = vtanh.pop %v1091
    %v1100 = vtanh.pop %v1092
    %v1101 = vtanh.pop %v1093
    %v1102 = vtanh.pop %v1094
    %v1103 = vtanh.pop %v1095
    %v1104 = vtanh.pop %v1096
    %v1105 = vtanh.pop %v1097
    %v1106 = vtanh.pop %v1098
    %v1107 = vsub.f32 1.0, %v927
    %v1108 = vsub.f32 1.0, %v929
    %v1109 = vsub.f32 1.0, %v931
    %v1110 = vsub.f32 1.0, %v933
    %v1111 = vsub.f32 1.0, %v935
    %v1112 = vsub.f32 1.0, %v937
    %v1113 = vsub.f32 1.0, %v939
    %v1114 = vsub.f32 1.0, %v941
    %v1115 = vmul.f32 %v1107, %v1099
    %v1116 = vmul.f32 %v1108, %v1100
    %v1117 = vmul.f32 %v1109, %v1101
    %v1118 = vmul.f32 %v1110, %v1102
    %v1119 = vmul.f32 %v1111, %v1103
    %v1120 = vmul.f32 %v1112, %v1104
    %v1121 = vmul.f32 %v1113, %v1105
    %v1122 = vmul.f32 %v1114, %v1106
    %v1123 = vmul.f32 %v927, 0.0
    %v1124 = vmul.f32 %v929, 0.0
    %v1125 = vmul.f32 %v931, 0.0
    %v1126 = vmul.f32 %v933, 0.0
    %v1127 = vmul.f32 %v935, 0.0
    %v1128 = vmul.f32 %v937, 0.0
    %v1129 = vmul.f32 %v939, 0.0
    %v1130 = vmul.f32 %v941, 0.0
    %v1131 = vadd.f32 %v1115, %v1123
    %v1132 = vadd.f32 %v1116, %v1124
    %v1133 = vadd.f32 %v1117, %v1125
    %v1134 = vadd.f32 %v1118, %v1126
    %v1135 = vadd.f32 %v1119, %v1127
    %v1136 = vadd.f32 %v1120, %v1128
    %v1137 = vadd.f32 %v1121, %v1129
    %v1138 = vadd.f32 %v1122, %v1130
    %s1139 = scalar_lea.vmem [#allocation2], 1
    %v1140 = vld [vmem:[%s1139] ss:$8 sm:$0x7]
    %s1141 = scalar_lea.vmem [#allocation2], 25
    %v1142 = vld [vmem:[%s1141] ss:$8 sm:$0x7]
    %s1143 = scalar_lea.vmem [#allocation2], 49
    %v1144 = vld [vmem:[%s1143] ss:$8 sm:$0x7]
    %s1145 = scalar_lea.vmem [#allocation2], 73
    %v1146 = vld [vmem:[%s1145] ss:$8 sm:$0x7]
    %s1147 = scalar_lea.vmem [#allocation2], 97
    %v1148 = vld [vmem:[%s1147] ss:$8 sm:$0x7]
    %s1149 = scalar_lea.vmem [#allocation2], 121
    %v1150 = vld [vmem:[%s1149] ss:$8 sm:$0x7]
    %s1151 = scalar_lea.vmem [#allocation2], 145
    %v1152 = vld [vmem:[%s1151] ss:$8 sm:$0x7]
    %s1153 = scalar_lea.vmem [#allocation2], 169
    %v1154 = vld [vmem:[%s1153] ss:$8 sm:$0x7]
    %v1163 = vcombine.low %v1131, %v1132
    %v1164 = vcombine.low %v1133, %v1134
    %v1165 = vcombine.low %v1135, %v1136
    %v1166 = vcombine.low %v1137, %v1138
    %v1168 = vunpack.c.l.s4 1966171168
    %v1169 = vunpack.c.0.s8 %v1168
    %v1170 = vlaneseq
    %v1171 = vshrl.u32 %v1170, 7
    %v1172 = vsub.s32 %v1169, %v1171
    %v1173 = vrot.slane %v1163, %v1172
    %v1175 = vunpack.c.l.s4 1966171168
    %v1176 = vunpack.c.0.s8 %v1175
    %v1177 = vlaneseq
    %v1178 = vshrl.u32 %v1177, 7
    %v1179 = vsub.s32 %v1176, %v1178
    %v1180 = vrot.slane %v1164, %v1179
    %v1182 = vunpack.c.l.s4 1966171168
    %v1183 = vunpack.c.0.s8 %v1182
    %v1184 = vlaneseq
    %v1185 = vshrl.u32 %v1184, 7
    %v1186 = vsub.s32 %v1183, %v1185
    %v1187 = vrot.slane %v1165, %v1186
    %v1189 = vunpack.c.l.s4 1966171168
    %v1190 = vunpack.c.0.s8 %v1189
    %v1191 = vlaneseq
    %v1192 = vshrl.u32 %v1191, 7
    %v1193 = vsub.s32 %v1190, %v1192
    %v1194 = vrot.slane %v1166, %v1193
    %v1195 = vcombine.low %v1173, %v1180
    %v1196 = vcombine.low %v1187, %v1194
    %v1198 = vunpack.c.l.s4 1966171168
    %v1199 = vunpack.c.0.s8 %v1198
    %v1200 = vlaneseq
    %v1201 = vshrl.u32 %v1200, 7
    %v1202 = vsub.s32 %v1199, %v1201
    %v1203 = vrot.slane %v1195, %v1202
    %v1205 = vunpack.c.l.s4 1966171168
    %v1206 = vunpack.c.0.s8 %v1205
    %v1207 = vlaneseq
    %v1208 = vshrl.u32 %v1207, 7
    %v1209 = vsub.s32 %v1206, %v1208
    %v1210 = vrot.slane %v1196, %v1209
    %v1211 = vcombine.low %v1203, %v1210
    %1213 = vmatprep.subr.mxu0 %v47
    %1214 = vmatpush1.msra.mxu0 %v46
    %1215 = vmatprep.subr.mxu0 %v50
    %1216 = vmatpush1.msra.mxu0 %v49
    %1217 = vmatprep.subr.mxu0 %v53
    %1218 = vmatpush1.msra.mxu0 %v52
    %1219 = vmatprep.subr.mxu0 %v56
    %1220 = vmatpush1.msra.mxu0 %v55
    %1221 = vmatprep.subr.mxu0 %v59
    %1222 = vmatpush1.msra.mxu0 %v58
    %1223 = vmatprep.subr.mxu0 %v62
    %1224 = vmatpush1.msra.mxu0 %v61
    %1225 = vmatprep.subr.mxu0 %v65
    %1226 = vmatpush1.msra.mxu0 %v64
    %1227 = vmatprep.subr.mxu0 %v68
    %1228 = vmatpush1.msra.mxu0 %v67
    %1229 = vmatprep.subr.mxu0 %v71
    %1230 = vmatpush1.msra.mxu0 %v70
    %1231 = vmatprep.subr.mxu0 %v74
    %1232 = vmatpush1.msra.mxu0 %v73
    %1233 = vmatprep.subr.mxu0 %v77
    %1234 = vmatpush1.msra.mxu0 %v76
    %1235 = vmatprep.subr.mxu0 %v80
    %1236 = vmatpush1.msra.mxu0 %v79
    %1237 = vmatprep.subr.mxu0 %v83
    %1238 = vmatpush1.msra.mxu0 %v82
    %1239 = vmatprep.subr.mxu0 %v86
    %1240 = vmatpush1.msra.mxu0 %v85
    %1241 = vmatprep.subr.mxu0 %v89
    %1242 = vmatpush1.msra.mxu0 %v88
    %1243 = vmatprep.subr.mxu0 %v92
    %1244 = vmatpush1.msra.mxu0 %v91
    %1245 = vmatprep.subr.mxu0 0.0
    %1246 = vmatpush1.msra.mxu0 0.0
    %1247 = vmatprep.subr.mxu0 0.0
    %1248 = vmatpush1.msra.mxu0 0.0
    %1249 = vmatprep.subr.mxu0 0.0
    %1250 = vmatpush1.msra.mxu0 0.0
    %1251 = vmatprep.subr.mxu0 0.0
    %1252 = vmatpush1.msra.mxu0 0.0
    %1253 = vmatprep.subr.mxu0 0.0
    %1254 = vmatpush1.msra.mxu0 0.0
    %1255 = vmatprep.subr.mxu0 0.0
    %1256 = vmatpush1.msra.mxu0 0.0
    %1257 = vmatprep.subr.mxu0 0.0
    %1258 = vmatpush1.msra.mxu0 0.0
    %1259 = vmatprep.subr.mxu0 0.0
    %1260 = vmatpush1.msra.mxu0 0.0
    %1261 = vmatprep.subr.mxu0 0.0
    %1262 = vmatpush1.msra.mxu0 0.0
    %1263 = vmatprep.subr.mxu0 0.0
    %1264 = vmatpush1.msra.mxu0 0.0
    %1265 = vmatprep.subr.mxu0 0.0
    %1266 = vmatpush1.msra.mxu0 0.0
    %1267 = vmatprep.subr.mxu0 0.0
    %1268 = vmatpush1.msra.mxu0 0.0
    %1269 = vmatprep.subr.mxu0 0.0
    %1270 = vmatpush1.msra.mxu0 0.0
    %1271 = vmatprep.subr.mxu0 0.0
    %1272 = vmatpush1.msra.mxu0 0.0
    %1273 = vmatprep.subr.mxu0 0.0
    %1274 = vmatpush1.msra.mxu0 0.0
    %1275 = vmatprep.subr.mxu0 0.0
    %1276 = vmatpush1.msra.mxu0 0.0
    %1277 = vmatprep.mubr.f32.mxu0 0.0
    %1278 = vmatmul.mubr.f32.gmra.mrb[0].mxu0 %v1211
    %v1279 = vpop.f32.mrb[0].mxu0
    %v1280 = vadd.f32 0.0, %v1279
    %v1281 = vpop.f32.mrb[0].mxu0
    %v1282 = vadd.f32 0.0, %v1281
    %1283 = vdwg.mxu0
    %1284 = vmatprep.subr.mxu0 0.0
    %1285 = vmatpush1.msra.mxu0 %v48
    %1286 = vmatprep.subr.mxu0 0.0
    %1287 = vmatpush1.msra.mxu0 %v51
    %1288 = vmatprep.subr.mxu0 0.0
    %1289 = vmatpush1.msra.mxu0 %v54
    %1290 = vmatprep.subr.mxu0 0.0
    %1291 = vmatpush1.msra.mxu0 %v57
    %1292 = vmatprep.subr.mxu0 0.0
    %1293 = vmatpush1.msra.mxu0 %v60
    %1294 = vmatprep.subr.mxu0 0.0
    %1295 = vmatpush1.msra.mxu0 %v63
    %1296 = vmatprep.subr.mxu0 0.0
    %1297 = vmatpush1.msra.mxu0 %v66
    %1298 = vmatprep.subr.mxu0 0.0
    %1299 = vmatpush1.msra.mxu0 %v69
    %1300 = vmatprep.subr.mxu0 0.0
    %1301 = vmatpush1.msra.mxu0 %v72
    %1302 = vmatprep.subr.mxu0 0.0
    %1303 = vmatpush1.msra.mxu0 %v75
    %1304 = vmatprep.subr.mxu0 0.0
    %1305 = vmatpush1.msra.mxu0 %v78
    %1306 = vmatprep.subr.mxu0 0.0
    %1307 = vmatpush1.msra.mxu0 %v81
    %1308 = vmatprep.subr.mxu0 0.0
    %1309 = vmatpush1.msra.mxu0 %v84
    %1310 = vmatprep.subr.mxu0 0.0
    %1311 = vmatpush1.msra.mxu0 %v87
    %1312 = vmatprep.subr.mxu0 0.0
    %1313 = vmatpush1.msra.mxu0 %v90
    %1314 = vmatprep.subr.mxu0 0.0
    %1315 = vmatpush1.msra.mxu0 %v93
    %1316 = vmatprep.subr.mxu0 0.0
    %1317 = vmatpush1.msra.mxu0 0.0
    %1318 = vmatprep.subr.mxu0 0.0
    %1319 = vmatpush1.msra.mxu0 0.0
    %1320 = vmatprep.subr.mxu0 0.0
    %1321 = vmatpush1.msra.mxu0 0.0
    %1322 = vmatprep.subr.mxu0 0.0
    %1323 = vmatpush1.msra.mxu0 0.0
    %1324 = vmatprep.subr.mxu0 0.0
    %1325 = vmatpush1.msra.mxu0 0.0
    %1326 = vmatprep.subr.mxu0 0.0
    %1327 = vmatpush1.msra.mxu0 0.0
    %1328 = vmatprep.subr.mxu0 0.0
    %1329 = vmatpush1.msra.mxu0 0.0
    %1330 = vmatprep.subr.mxu0 0.0
    %1331 = vmatpush1.msra.mxu0 0.0
    %1332 = vmatprep.subr.mxu0 0.0
    %1333 = vmatpush1.msra.mxu0 0.0
    %1334 = vmatprep.subr.mxu0 0.0
    %1335 = vmatpush1.msra.mxu0 0.0
    %1336 = vmatprep.subr.mxu0 0.0
    %1337 = vmatpush1.msra.mxu0 0.0
    %1338 = vmatprep.subr.mxu0 0.0
    %1339 = vmatpush1.msra.mxu0 0.0
    %1340 = vmatprep.subr.mxu0 0.0
    %1341 = vmatpush1.msra.mxu0 0.0
    %1342 = vmatprep.subr.mxu0 0.0
    %1343 = vmatpush1.msra.mxu0 0.0
    %1344 = vmatprep.subr.mxu0 0.0
    %1345 = vmatpush1.msra.mxu0 0.0
    %1346 = vmatprep.subr.mxu0 0.0
    %1347 = vmatpush1.msra.mxu0 0.0
    %1348 = vmatprep.mubr.f32.mxu0 0.0
    %1349 = vmatmul.mubr.f32.gmra.mrb[0].mxu0 %v1211
    %v1350 = vpop.f32.mrb[0].mxu0
    %v1351 = vadd.f32 0.0, %v1350
    %v1352 = vpop.f32.mrb[0].mxu0
    %1353 = vdwg.mxu0
    %v1355 = vcombine.high %v1280, %v1280
    %v1357 = vunpack.c.l.s4 1966171168
    %v1358 = vunpack.c.0.s8 %v1357
    %v1359 = vlaneseq
    %v1360 = vshrl.u32 %v1359, 7
    %v1361 = vsub.s32 %v1358, %v1360
    %v1362 = vrot.slane %v1280, %v1361
    %v1364 = vunpack.c.l.s4 1966171168
    %v1365 = vunpack.c.0.s8 %v1364
    %v1366 = vlaneseq
    %v1367 = vshrl.u32 %v1366, 7
    %v1368 = vsub.s32 %v1365, %v1367
    %v1369 = vrot.slane %v1355, %v1368
    %v1370 = vcombine.high %v1362, %v1362
    %v1371 = vcombine.high %v1369, %v1369
    %v1373 = vunpack.c.l.s4 1966171168
    %v1374 = vunpack.c.0.s8 %v1373
    %v1375 = vlaneseq
    %v1376 = vshrl.u32 %v1375, 7
    %v1377 = vsub.s32 %v1374, %v1376
    %v1378 = vrot.slane %v1362, %v1377
    %v1380 = vunpack.c.l.s4 1966171168
    %v1381 = vunpack.c.0.s8 %v1380
    %v1382 = vlaneseq
    %v1383 = vshrl.u32 %v1382, 7
    %v1384 = vsub.s32 %v1381, %v1383
    %v1385 = vrot.slane %v1369, %v1384
    %v1387 = vunpack.c.l.s4 1966171168
    %v1388 = vunpack.c.0.s8 %v1387
    %v1389 = vlaneseq
    %v1390 = vshrl.u32 %v1389, 7
    %v1391 = vsub.s32 %v1388, %v1390
    %v1392 = vrot.slane %v1370, %v1391
    %v1394 = vunpack.c.l.s4 1966171168
    %v1395 = vunpack.c.0.s8 %v1394
    %v1396 = vlaneseq
    %v1397 = vshrl.u32 %v1396, 7
    %v1398 = vsub.s32 %v1395, %v1397
    %v1399 = vrot.slane %v1371, %v1398
    %v1400 = vcombine.high %v1378, %v1378
    %v1401 = vcombine.high %v1385, %v1385
    %v1402 = vcombine.high %v1392, %v1392
    %v1403 = vcombine.high %v1399, %v1399
    %v1412 = vadd.f32 %v1140, %v1378
    %v1413 = vadd.f32 %v1142, %v1392
    %v1414 = vadd.f32 %v1144, %v1400
    %v1415 = vadd.f32 %v1146, %v1402
    %v1416 = vadd.f32 %v1148, %v1385
    %v1417 = vadd.f32 %v1150, %v1399
    %v1418 = vadd.f32 %v1152, %v1401
    %v1419 = vadd.f32 %v1154, %v1403
    %v1420 = vadd.f32 %v1412, %v648
    %v1421 = vadd.f32 %v1413, %v662
    %v1422 = vadd.f32 %v1414, %v670
    %v1423 = vadd.f32 %v1415, %v672
    %v1424 = vadd.f32 %v1416, %v655
    %v1425 = vadd.f32 %v1417, %v669
    %v1426 = vadd.f32 %v1418, %v671
    %v1427 = vadd.f32 %v1419, %v673
    %v1428 = vxor.u32 %v1420, 2147483648
    %v1429 = vxor.u32 %v1421, 2147483648
    %v1430 = vxor.u32 %v1422, 2147483648
    %v1431 = vxor.u32 %v1423, 2147483648
    %v1432 = vxor.u32 %v1424, 2147483648
    %v1433 = vxor.u32 %v1425, 2147483648
    %v1434 = vxor.u32 %v1426, 2147483648
    %v1435 = vxor.u32 %v1427, 2147483648
    %v1436 = vmul.f32 %v1428, 1.442695
    %v1437 = vpow.pop %v1436
    %v1438 = vmul.f32 %v1429, 1.442695
    %v1439 = vpow.pop %v1438
    %v1440 = vmul.f32 %v1430, 1.442695
    %v1441 = vpow.pop %v1440
    %v1442 = vmul.f32 %v1431, 1.442695
    %v1443 = vpow.pop %v1442
    %v1444 = vmul.f32 %v1432, 1.442695
    %v1445 = vpow.pop %v1444
    %v1446 = vmul.f32 %v1433, 1.442695
    %v1447 = vpow.pop %v1446
    %v1448 = vmul.f32 %v1434, 1.442695
    %v1449 = vpow.pop %v1448
    %v1450 = vmul.f32 %v1435, 1.442695
    %v1451 = vpow.pop %v1450
    %v1452 = vadd.f32 %v1437, 1.0
    %v1453 = vadd.f32 %v1439, 1.0
    %v1454 = vadd.f32 %v1441, 1.0
    %v1455 = vadd.f32 %v1443, 1.0
    %v1456 = vadd.f32 %v1445, 1.0
    %v1457 = vadd.f32 %v1447, 1.0
    %v1458 = vadd.f32 %v1449, 1.0
    %v1459 = vadd.f32 %v1451, 1.0
    %v1460 = vrcp.pop %v1452
    %v1461 = vmul.f32 1.0, %v1460
    %v1462 = vrcp.pop %v1453
    %v1463 = vmul.f32 1.0, %v1462
    %v1464 = vrcp.pop %v1454
    %v1465 = vmul.f32 1.0, %v1464
    %v1466 = vrcp.pop %v1455
    %v1467 = vmul.f32 1.0, %v1466
    %v1468 = vrcp.pop %v1456
    %v1469 = vmul.f32 1.0, %v1468
    %v1470 = vrcp.pop %v1457
    %v1471 = vmul.f32 1.0, %v1470
    %v1472 = vrcp.pop %v1458
    %v1473 = vmul.f32 1.0, %v1472
    %v1474 = vrcp.pop %v1459
    %v1475 = vmul.f32 1.0, %v1474
    %v1484 = vrot.slane %v1140, 1
    %v1485 = vrot.slane %v1142, 1
    %v1486 = vrot.slane %v1144, 1
    %v1487 = vrot.slane %v1146, 1
    %v1488 = vrot.slane %v1148, 1
    %v1489 = vrot.slane %v1150, 1
    %v1490 = vrot.slane %v1152, 1
    %v1491 = vrot.slane %v1154, 1
    %v1501 = vcombine.high %v1282, %v1282
    %v1503 = vunpack.c.l.s4 1966171168
    %v1504 = vunpack.c.0.s8 %v1503
    %v1505 = vlaneseq
    %v1506 = vshrl.u32 %v1505, 7
    %v1507 = vsub.s32 %v1504, %v1506
    %v1508 = vrot.slane %v1282, %v1507
    %v1510 = vunpack.c.l.s4 1966171168
    %v1511 = vunpack.c.0.s8 %v1510
    %v1512 = vlaneseq
    %v1513 = vshrl.u32 %v1512, 7
    %v1514 = vsub.s32 %v1511, %v1513
    %v1515 = vrot.slane %v1501, %v1514
    %v1516 = vcombine.high %v1508, %v1508
    %v1517 = vcombine.high %v1515, %v1515
    %v1519 = vunpack.c.l.s4 1966171168
    %v1520 = vunpack.c.0.s8 %v1519
    %v1521 = vlaneseq
    %v1522 = vshrl.u32 %v1521, 7
    %v1523 = vsub.s32 %v1520, %v1522
    %v1524 = vrot.slane %v1508, %v1523
    %v1526 = vunpack.c.l.s4 1966171168
    %v1527 = vunpack.c.0.s8 %v1526
    %v1528 = vlaneseq
    %v1529 = vshrl.u32 %v1528, 7
    %v1530 = vsub.s32 %v1527, %v1529
    %v1531 = vrot.slane %v1515, %v1530
    %v1533 = vunpack.c.l.s4 1966171168
    %v1534 = vunpack.c.0.s8 %v1533
    %v1535 = vlaneseq
    %v1536 = vshrl.u32 %v1535, 7
    %v1537 = vsub.s32 %v1534, %v1536
    %v1538 = vrot.slane %v1516, %v1537
    %v1540 = vunpack.c.l.s4 1966171168
    %v1541 = vunpack.c.0.s8 %v1540
    %v1542 = vlaneseq
    %v1543 = vshrl.u32 %v1542, 7
    %v1544 = vsub.s32 %v1541, %v1543
    %v1545 = vrot.slane %v1517, %v1544
    %v1546 = vcombine.high %v1524, %v1524
    %v1547 = vcombine.high %v1531, %v1531
    %v1548 = vcombine.high %v1538, %v1538
    %v1549 = vcombine.high %v1545, %v1545
    %v1558 = vadd.f32 %v1484, %v1524
    %v1559 = vadd.f32 %v1485, %v1538
    %v1560 = vadd.f32 %v1486, %v1546
    %v1561 = vadd.f32 %v1487, %v1548
    %v1562 = vadd.f32 %v1488, %v1531
    %v1563 = vadd.f32 %v1489, %v1545
    %v1564 = vadd.f32 %v1490, %v1547
    %v1565 = vadd.f32 %v1491, %v1549
    %v1566 = vadd.f32 %v1558, %v852
    %v1567 = vadd.f32 %v1559, %v866
    %v1568 = vadd.f32 %v1560, %v874
    %v1569 = vadd.f32 %v1561, %v876
    %v1570 = vadd.f32 %v1562, %v859
    %v1571 = vadd.f32 %v1563, %v873
    %v1572 = vadd.f32 %v1564, %v875
    %v1573 = vadd.f32 %v1565, %v877
    %v1574 = vxor.u32 %v1566, 2147483648
    %v1575 = vxor.u32 %v1567, 2147483648
    %v1576 = vxor.u32 %v1568, 2147483648
    %v1577 = vxor.u32 %v1569, 2147483648
    %v1578 = vxor.u32 %v1570, 2147483648
    %v1579 = vxor.u32 %v1571, 2147483648
    %v1580 = vxor.u32 %v1572, 2147483648
    %v1581 = vxor.u32 %v1573, 2147483648
    %v1582 = vmul.f32 %v1574, 1.442695
    %v1583 = vpow.pop %v1582
    %v1584 = vmul.f32 %v1575, 1.442695
    %v1585 = vpow.pop %v1584
    %v1586 = vmul.f32 %v1576, 1.442695
    %v1587 = vpow.pop %v1586
    %v1588 = vmul.f32 %v1577, 1.442695
    %v1589 = vpow.pop %v1588
    %v1590 = vmul.f32 %v1578, 1.442695
    %v1591 = vpow.pop %v1590
    %v1592 = vmul.f32 %v1579, 1.442695
    %v1593 = vpow.pop %v1592
    %v1594 = vmul.f32 %v1580, 1.442695
    %v1595 = vpow.pop %v1594
    %v1596 = vmul.f32 %v1581, 1.442695
    %v1597 = vpow.pop %v1596
    %v1598 = vadd.f32 %v1583, 1.0
    %v1599 = vadd.f32 %v1585, 1.0
    %v1600 = vadd.f32 %v1587, 1.0
    %v1601 = vadd.f32 %v1589, 1.0
    %v1602 = vadd.f32 %v1591, 1.0
    %v1603 = vadd.f32 %v1593, 1.0
    %v1604 = vadd.f32 %v1595, 1.0
    %v1605 = vadd.f32 %v1597, 1.0
    %v1606 = vrcp.pop %v1598
    %v1607 = vmul.f32 1.0, %v1606
    %v1608 = vrcp.pop %v1599
    %v1609 = vmul.f32 1.0, %v1608
    %v1610 = vrcp.pop %v1600
    %v1611 = vmul.f32 1.0, %v1610
    %v1612 = vrcp.pop %v1601
    %v1613 = vmul.f32 1.0, %v1612
    %v1614 = vrcp.pop %v1602
    %v1615 = vmul.f32 1.0, %v1614
    %v1616 = vrcp.pop %v1603
    %v1617 = vmul.f32 1.0, %v1616
    %v1618 = vrcp.pop %v1604
    %v1619 = vmul.f32 1.0, %v1618
    %v1620 = vrcp.pop %v1605
    %v1621 = vmul.f32 1.0, %v1620
    %v1622 = vrot.slane %v1140, 2
    %v1623 = vrot.slane %v1142, 2
    %v1624 = vrot.slane %v1144, 2
    %v1625 = vrot.slane %v1146, 2
    %v1626 = vrot.slane %v1148, 2
    %v1627 = vrot.slane %v1150, 2
    %v1628 = vrot.slane %v1152, 2
    %v1629 = vrot.slane %v1154, 2
    %v1638 = vadd.f32 %v1622, %v982
    %v1639 = vadd.f32 %v1623, %v996
    %v1640 = vadd.f32 %v1624, %v1004
    %v1641 = vadd.f32 %v1625, %v1006
    %v1642 = vadd.f32 %v1626, %v989
    %v1643 = vadd.f32 %v1627, %v1003
    %v1644 = vadd.f32 %v1628, %v1005
    %v1645 = vadd.f32 %v1629, %v1007
    %v1646 = vadd.f32 %v1351, %v401
    %v1648 = vcombine.high %v1646, %v1646
    %v1650 = vunpack.c.l.s4 1966171168
    %v1651 = vunpack.c.0.s8 %v1650
    %v1652 = vlaneseq
    %v1653 = vshrl.u32 %v1652, 7
    %v1654 = vsub.s32 %v1651, %v1653
    %v1655 = vrot.slane %v1646, %v1654
    %v1657 = vunpack.c.l.s4 1966171168
    %v1658 = vunpack.c.0.s8 %v1657
    %v1659 = vlaneseq
    %v1660 = vshrl.u32 %v1659, 7
    %v1661 = vsub.s32 %v1658, %v1660
    %v1662 = vrot.slane %v1648, %v1661
    %v1663 = vcombine.high %v1655, %v1655
    %v1664 = vcombine.high %v1662, %v1662
    %v1666 = vunpack.c.l.s4 1966171168
    %v1667 = vunpack.c.0.s8 %v1666
    %v1668 = vlaneseq
    %v1669 = vshrl.u32 %v1668, 7
    %v1670 = vsub.s32 %v1667, %v1669
    %v1671 = vrot.slane %v1655, %v1670
    %v1673 = vunpack.c.l.s4 1966171168
    %v1674 = vunpack.c.0.s8 %v1673
    %v1675 = vlaneseq
    %v1676 = vshrl.u32 %v1675, 7
    %v1677 = vsub.s32 %v1674, %v1676
    %v1678 = vrot.slane %v1662, %v1677
    %v1680 = vunpack.c.l.s4 1966171168
    %v1681 = vunpack.c.0.s8 %v1680
    %v1682 = vlaneseq
    %v1683 = vshrl.u32 %v1682, 7
    %v1684 = vsub.s32 %v1681, %v1683
    %v1685 = vrot.slane %v1663, %v1684
    %v1687 = vunpack.c.l.s4 1966171168
    %v1688 = vunpack.c.0.s8 %v1687
    %v1689 = vlaneseq
    %v1690 = vshrl.u32 %v1689, 7
    %v1691 = vsub.s32 %v1688, %v1690
    %v1692 = vrot.slane %v1664, %v1691
    %v1693 = vcombine.high %v1671, %v1671
    %v1694 = vcombine.high %v1678, %v1678
    %v1695 = vcombine.high %v1685, %v1685
    %v1696 = vcombine.high %v1692, %v1692
    %v1705 = vmul.f32 %v1461, %v1671
    %v1706 = vmul.f32 %v1463, %v1685
    %v1707 = vmul.f32 %v1465, %v1693
    %v1708 = vmul.f32 %v1467, %v1695
    %v1709 = vmul.f32 %v1469, %v1678
    %v1710 = vmul.f32 %v1471, %v1692
    %v1711 = vmul.f32 %v1473, %v1694
    %v1712 = vmul.f32 %v1475, %v1696
    %v1713 = vadd.f32 %v1638, %v1705
    %v1714 = vadd.f32 %v1639, %v1706
    %v1715 = vadd.f32 %v1640, %v1707
    %v1716 = vadd.f32 %v1641, %v1708
    %v1717 = vadd.f32 %v1642, %v1709
    %v1718 = vadd.f32 %v1643, %v1710
    %v1719 = vadd.f32 %v1644, %v1711
    %v1720 = vadd.f32 %v1645, %v1712
    %v1721 = vtanh.pop %v1713
    %v1722 = vtanh.pop %v1714
    %v1723 = vtanh.pop %v1715
    %v1724 = vtanh.pop %v1716
    %v1725 = vtanh.pop %v1717
    %v1726 = vtanh.pop %v1718
    %v1727 = vtanh.pop %v1719
    %v1728 = vtanh.pop %v1720
    %v1729 = vsub.f32 1.0, %v1607
    %v1730 = vsub.f32 1.0, %v1609
    %v1731 = vsub.f32 1.0, %v1611
    %v1732 = vsub.f32 1.0, %v1613
    %v1733 = vsub.f32 1.0, %v1615
    %v1734 = vsub.f32 1.0, %v1617
    %v1735 = vsub.f32 1.0, %v1619
    %v1736 = vsub.f32 1.0, %v1621
    %v1737 = vmul.f32 %v1729, %v1721
    %v1738 = vmul.f32 %v1730, %v1722
    %v1739 = vmul.f32 %v1731, %v1723
    %v1740 = vmul.f32 %v1732, %v1724
    %v1741 = vmul.f32 %v1733, %v1725
    %v1742 = vmul.f32 %v1734, %v1726
    %v1743 = vmul.f32 %v1735, %v1727
    %v1744 = vmul.f32 %v1736, %v1728
    %v1745 = vmul.f32 %v1607, %v1131
    %v1746 = vmul.f32 %v1609, %v1132
    %v1747 = vmul.f32 %v1611, %v1133
    %v1748 = vmul.f32 %v1613, %v1134
    %v1749 = vmul.f32 %v1615, %v1135
    %v1750 = vmul.f32 %v1617, %v1136
    %v1751 = vmul.f32 %v1619, %v1137
    %v1752 = vmul.f32 %v1621, %v1138
    %v1753 = vadd.f32 %v1737, %v1745
    %v1754 = vadd.f32 %v1738, %v1746
    %v1755 = vadd.f32 %v1739, %v1747
    %v1756 = vadd.f32 %v1740, %v1748
    %v1757 = vadd.f32 %v1741, %v1749
    %v1758 = vadd.f32 %v1742, %v1750
    %v1759 = vadd.f32 %v1743, %v1751
    %v1760 = vadd.f32 %v1744, %v1752
    %s1761 = scalar_lea.vmem [#allocation2], 2
    %v1762 = vld [vmem:[%s1761] ss:$8 sm:$0x7]
    %s1763 = scalar_lea.vmem [#allocation2], 26
    %v1764 = vld [vmem:[%s1763] ss:$8 sm:$0x7]
    %s1765 = scalar_lea.vmem [#allocation2], 50
    %v1766 = vld [vmem:[%s1765] ss:$8 sm:$0x7]
    %s1767 = scalar_lea.vmem [#allocation2], 74
    %v1768 = vld [vmem:[%s1767] ss:$8 sm:$0x7]
    %s1769 = scalar_lea.vmem [#allocation2], 98
    %v1770 = vld [vmem:[%s1769] ss:$8 sm:$0x7]
    %s1771 = scalar_lea.vmem [#allocation2], 122
    %v1772 = vld [vmem:[%s1771] ss:$8 sm:$0x7]
    %s1773 = scalar_lea.vmem [#allocation2], 146
    %v1774 = vld [vmem:[%s1773] ss:$8 sm:$0x7]
    %s1775 = scalar_lea.vmem [#allocation2], 170
    %v1776 = vld [vmem:[%s1775] ss:$8 sm:$0x7]
    %v1785 = vcombine.low %v1753, %v1754
    %v1786 = vcombine.low %v1755, %v1756
    %v1787 = vcombine.low %v1757, %v1758
    %v1788 = vcombine.low %v1759, %v1760
    %v1790 = vunpack.c.l.s4 1966171168
    %v1791 = vunpack.c.0.s8 %v1790
    %v1792 = vlaneseq
    %v1793 = vshrl.u32 %v1792, 7
    %v1794 = vsub.s32 %v1791, %v1793
    %v1795 = vrot.slane %v1785, %v1794
    %v1797 = vunpack.c.l.s4 1966171168
    %v1798 = vunpack.c.0.s8 %v1797
    %v1799 = vlaneseq
    %v1800 = vshrl.u32 %v1799, 7
    %v1801 = vsub.s32 %v1798, %v1800
    %v1802 = vrot.slane %v1786, %v1801
    %v1804 = vunpack.c.l.s4 1966171168
    %v1805 = vunpack.c.0.s8 %v1804
    %v1806 = vlaneseq
    %v1807 = vshrl.u32 %v1806, 7
    %v1808 = vsub.s32 %v1805, %v1807
    %v1809 = vrot.slane %v1787, %v1808
    %v1811 = vunpack.c.l.s4 1966171168
    %v1812 = vunpack.c.0.s8 %v1811
    %v1813 = vlaneseq
    %v1814 = vshrl.u32 %v1813, 7
    %v1815 = vsub.s32 %v1812, %v1814
    %v1816 = vrot.slane %v1788, %v1815
    %v1817 = vcombine.low %v1795, %v1802
    %v1818 = vcombine.low %v1809, %v1816
    %v1820 = vunpack.c.l.s4 1966171168
    %v1821 = vunpack.c.0.s8 %v1820
    %v1822 = vlaneseq
    %v1823 = vshrl.u32 %v1822, 7
    %v1824 = vsub.s32 %v1821, %v1823
    %v1825 = vrot.slane %v1817, %v1824
    %v1827 = vunpack.c.l.s4 1966171168
    %v1828 = vunpack.c.0.s8 %v1827
    %v1829 = vlaneseq
    %v1830 = vshrl.u32 %v1829, 7
    %v1831 = vsub.s32 %v1828, %v1830
    %v1832 = vrot.slane %v1818, %v1831
    %v1833 = vcombine.low %v1825, %v1832
    %1835 = vmatprep.subr.mxu0 %v47
    %1836 = vmatpush1.msra.mxu0 %v46
    %1837 = vmatprep.subr.mxu0 %v50
    %1838 = vmatpush1.msra.mxu0 %v49
    %1839 = vmatprep.subr.mxu0 %v53
    %1840 = vmatpush1.msra.mxu0 %v52
    %1841 = vmatprep.subr.mxu0 %v56
    %1842 = vmatpush1.msra.mxu0 %v55
    %1843 = vmatprep.subr.mxu0 %v59
    %1844 = vmatpush1.msra.mxu0 %v58
    %1845 = vmatprep.subr.mxu0 %v62
    %1846 = vmatpush1.msra.mxu0 %v61
    %1847 = vmatprep.subr.mxu0 %v65
    %1848 = vmatpush1.msra.mxu0 %v64
    %1849 = vmatprep.subr.mxu0 %v68
    %1850 = vmatpush1.msra.mxu0 %v67
    %1851 = vmatprep.subr.mxu0 %v71
    %1852 = vmatpush1.msra.mxu0 %v70
    %1853 = vmatprep.subr.mxu0 %v74
    %1854 = vmatpush1.msra.mxu0 %v73
    %1855 = vmatprep.subr.mxu0 %v77
    %1856 = vmatpush1.msra.mxu0 %v76
    %1857 = vmatprep.subr.mxu0 %v80
    %1858 = vmatpush1.msra.mxu0 %v79
    %1859 = vmatprep.subr.mxu0 %v83
    %1860 = vmatpush1.msra.mxu0 %v82
    %1861 = vmatprep.subr.mxu0 %v86
    %1862 = vmatpush1.msra.mxu0 %v85
    %1863 = vmatprep.subr.mxu0 %v89
    %1864 = vmatpush1.msra.mxu0 %v88
    %1865 = vmatprep.subr.mxu0 %v92
    %1866 = vmatpush1.msra.mxu0 %v91
    %1867 = vmatprep.subr.mxu0 0.0
    %1868 = vmatpush1.msra.mxu0 0.0
    %1869 = vmatprep.subr.mxu0 0.0
    %1870 = vmatpush1.msra.mxu0 0.0
    %1871 = vmatprep.subr.mxu0 0.0
    %1872 = vmatpush1.msra.mxu0 0.0
    %1873 = vmatprep.subr.mxu0 0.0
    %1874 = vmatpush1.msra.mxu0 0.0
    %1875 = vmatprep.subr.mxu0 0.0
    %1876 = vmatpush1.msra.mxu0 0.0
    %1877 = vmatprep.subr.mxu0 0.0
    %1878 = vmatpush1.msra.mxu0 0.0
    %1879 = vmatprep.subr.mxu0 0.0
    %1880 = vmatpush1.msra.mxu0 0.0
    %1881 = vmatprep.subr.mxu0 0.0
    %1882 = vmatpush1.msra.mxu0 0.0
    %1883 = vmatprep.subr.mxu0 0.0
    %1884 = vmatpush1.msra.mxu0 0.0
    %1885 = vmatprep.subr.mxu0 0.0
    %1886 = vmatpush1.msra.mxu0 0.0
    %1887 = vmatprep.subr.mxu0 0.0
    %1888 = vmatpush1.msra.mxu0 0.0
    %1889 = vmatprep.subr.mxu0 0.0
    %1890 = vmatpush1.msra.mxu0 0.0
    %1891 = vmatprep.subr.mxu0 0.0
    %1892 = vmatpush1.msra.mxu0 0.0
    %1893 = vmatprep.subr.mxu0 0.0
    %1894 = vmatpush1.msra.mxu0 0.0
    %1895 = vmatprep.subr.mxu0 0.0
    %1896 = vmatpush1.msra.mxu0 0.0
    %1897 = vmatprep.subr.mxu0 0.0
    %1898 = vmatpush1.msra.mxu0 0.0
    %1899 = vmatprep.mubr.f32.mxu0 0.0
    %1900 = vmatmul.mubr.f32.gmra.mrb[0].mxu0 %v1833
    %v1901 = vpop.f32.mrb[0].mxu0
    %v1902 = vadd.f32 0.0, %v1901
    %v1903 = vpop.f32.mrb[0].mxu0
    %v1904 = vadd.f32 0.0, %v1903
    %1905 = vdwg.mxu0
    %1906 = vmatprep.subr.mxu0 0.0
    %1907 = vmatpush1.msra.mxu0 %v48
    %1908 = vmatprep.subr.mxu0 0.0
    %1909 = vmatpush1.msra.mxu0 %v51
    %1910 = vmatprep.subr.mxu0 0.0
    %1911 = vmatpush1.msra.mxu0 %v54
    %1912 = vmatprep.subr.mxu0 0.0
    %1913 = vmatpush1.msra.mxu0 %v57
    %1914 = vmatprep.subr.mxu0 0.0
    %1915 = vmatpush1.msra.mxu0 %v60
    %1916 = vmatprep.subr.mxu0 0.0
    %1917 = vmatpush1.msra.mxu0 %v63
    %1918 = vmatprep.subr.mxu0 0.0
    %1919 = vmatpush1.msra.mxu0 %v66
    %1920 = vmatprep.subr.mxu0 0.0
    %1921 = vmatpush1.msra.mxu0 %v69
    %1922 = vmatprep.subr.mxu0 0.0
    %1923 = vmatpush1.msra.mxu0 %v72
    %1924 = vmatprep.subr.mxu0 0.0
    %1925 = vmatpush1.msra.mxu0 %v75
    %1926 = vmatprep.subr.mxu0 0.0
    %1927 = vmatpush1.msra.mxu0 %v78
    %1928 = vmatprep.subr.mxu0 0.0
    %1929 = vmatpush1.msra.mxu0 %v81
    %1930 = vmatprep.subr.mxu0 0.0
    %1931 = vmatpush1.msra.mxu0 %v84
    %1932 = vmatprep.subr.mxu0 0.0
    %1933 = vmatpush1.msra.mxu0 %v87
    %1934 = vmatprep.subr.mxu0 0.0
    %1935 = vmatpush1.msra.mxu0 %v90
    %1936 = vmatprep.subr.mxu0 0.0
    %1937 = vmatpush1.msra.mxu0 %v93
    %1938 = vmatprep.subr.mxu0 0.0
    %1939 = vmatpush1.msra.mxu0 0.0
    %1940 = vmatprep.subr.mxu0 0.0
    %1941 = vmatpush1.msra.mxu0 0.0
    %1942 = vmatprep.subr.mxu0 0.0
    %1943 = vmatpush1.msra.mxu0 0.0
    %1944 = vmatprep.subr.mxu0 0.0
    %1945 = vmatpush1.msra.mxu0 0.0
    %1946 = vmatprep.subr.mxu0 0.0
    %1947 = vmatpush1.msra.mxu0 0.0
    %1948 = vmatprep.subr.mxu0 0.0
    %1949 = vmatpush1.msra.mxu0 0.0
    %1950 = vmatprep.subr.mxu0 0.0
    %1951 = vmatpush1.msra.mxu0 0.0
    %1952 = vmatprep.subr.mxu0 0.0
    %1953 = vmatpush1.msra.mxu0 0.0
    %1954 = vmatprep.subr.mxu0 0.0
    %1955 = vmatpush1.msra.mxu0 0.0
    %1956 = vmatprep.subr.mxu0 0.0
    %1957 = vmatpush1.msra.mxu0 0.0
    %1958 = vmatprep.subr.mxu0 0.0
    %1959 = vmatpush1.msra.mxu0 0.0
    %1960 = vmatprep.subr.mxu0 0.0
    %1961 = vmatpush1.msra.mxu0 0.0
    %1962 = vmatprep.subr.mxu0 0.0
    %1963 = vmatpush1.msra.mxu0 0.0
    %1964 = vmatprep.subr.mxu0 0.0
    %1965 = vmatpush1.msra.mxu0 0.0
    %1966 = vmatprep.subr.mxu0 0.0
    %1967 = vmatpush1.msra.mxu0 0.0
    %1968 = vmatprep.subr.mxu0 0.0
    %1969 = vmatpush1.msra.mxu0 0.0
    %1970 = vmatprep.mubr.f32.mxu0 0.0
    %1971 = vmatmul.mubr.f32.gmra.mrb[0].mxu0 %v1833
    %v1972 = vpop.f32.mrb[0].mxu0
    %v1973 = vadd.f32 0.0, %v1972
    %v1974 = vpop.f32.mrb[0].mxu0
    %1975 = vdwg.mxu0
    %v1977 = vcombine.high %v1902, %v1902
    %v1979 = vunpack.c.l.s4 1966171168
    %v1980 = vunpack.c.0.s8 %v1979
    %v1981 = vlaneseq
    %v1982 = vshrl.u32 %v1981, 7
    %v1983 = vsub.s32 %v1980, %v1982
    %v1984 = vrot.slane %v1902, %v1983
    %v1986 = vunpack.c.l.s4 1966171168
    %v1987 = vunpack.c.0.s8 %v1986
    %v1988 = vlaneseq
    %v1989 = vshrl.u32 %v1988, 7
    %v1990 = vsub.s32 %v1987, %v1989
    %v1991 = vrot.slane %v1977, %v1990
    %v1992 = vcombine.high %v1984, %v1984
    %v1993 = vcombine.high %v1991, %v1991
    %v1995 = vunpack.c.l.s4 1966171168
    %v1996 = vunpack.c.0.s8 %v1995
    %v1997 = vlaneseq
    %v1998 = vshrl.u32 %v1997, 7
    %v1999 = vsub.s32 %v1996, %v1998
    %v2000 = vrot.slane %v1984, %v1999
    %v2002 = vunpack.c.l.s4 1966171168
    %v2003 = vunpack.c.0.s8 %v2002
    %v2004 = vlaneseq
    %v2005 = vshrl.u32 %v2004, 7
    %v2006 = vsub.s32 %v2003, %v2005
    %v2007 = vrot.slane %v1991, %v2006
    %v2009 = vunpack.c.l.s4 1966171168
    %v2010 = vunpack.c.0.s8 %v2009
    %v2011 = vlaneseq
    %v2012 = vshrl.u32 %v2011, 7
    %v2013 = vsub.s32 %v2010, %v2012
    %v2014 = vrot.slane %v1992, %v2013
    %v2016 = vunpack.c.l.s4 1966171168
    %v2017 = vunpack.c.0.s8 %v2016
    %v2018 = vlaneseq
    %v2019 = vshrl.u32 %v2018, 7
    %v2020 = vsub.s32 %v2017, %v2019
    %v2021 = vrot.slane %v1993, %v2020
    %v2022 = vcombine.high %v2000, %v2000
    %v2023 = vcombine.high %v2007, %v2007
    %v2024 = vcombine.high %v2014, %v2014
    %v2025 = vcombine.high %v2021, %v2021
    %v2034 = vadd.f32 %v1762, %v2000
    %v2035 = vadd.f32 %v1764, %v2014
    %v2036 = vadd.f32 %v1766, %v2022
    %v2037 = vadd.f32 %v1768, %v2024
    %v2038 = vadd.f32 %v1770, %v2007
    %v2039 = vadd.f32 %v1772, %v2021
    %v2040 = vadd.f32 %v1774, %v2023
    %v2041 = vadd.f32 %v1776, %v2025
    %v2042 = vadd.f32 %v2034, %v648
    %v2043 = vadd.f32 %v2035, %v662
    %v2044 = vadd.f32 %v2036, %v670
    %v2045 = vadd.f32 %v2037, %v672
    %v2046 = vadd.f32 %v2038, %v655
    %v2047 = vadd.f32 %v2039, %v669
    %v2048 = vadd.f32 %v2040, %v671
    %v2049 = vadd.f32 %v2041, %v673
    %v2050 = vxor.u32 %v2042, 2147483648
    %v2051 = vxor.u32 %v2043, 2147483648
    %v2052 = vxor.u32 %v2044, 2147483648
    %v2053 = vxor.u32 %v2045, 2147483648
    %v2054 = vxor.u32 %v2046, 2147483648
    %v2055 = vxor.u32 %v2047, 2147483648
    %v2056 = vxor.u32 %v2048, 2147483648
    %v2057 = vxor.u32 %v2049, 2147483648
    %v2058 = vmul.f32 %v2050, 1.442695
    %v2059 = vpow.pop %v2058
    %v2060 = vmul.f32 %v2051, 1.442695
    %v2061 = vpow.pop %v2060
    %v2062 = vmul.f32 %v2052, 1.442695
    %v2063 = vpow.pop %v2062
    %v2064 = vmul.f32 %v2053, 1.442695
    %v2065 = vpow.pop %v2064
    %v2066 = vmul.f32 %v2054, 1.442695
    %v2067 = vpow.pop %v2066
    %v2068 = vmul.f32 %v2055, 1.442695
    %v2069 = vpow.pop %v2068
    %v2070 = vmul.f32 %v2056, 1.442695
    %v2071 = vpow.pop %v2070
    %v2072 = vmul.f32 %v2057, 1.442695
    %v2073 = vpow.pop %v2072
    %v2074 = vadd.f32 %v2059, 1.0
    %v2075 = vadd.f32 %v2061, 1.0
    %v2076 = vadd.f32 %v2063, 1.0
    %v2077 = vadd.f32 %v2065, 1.0
    %v2078 = vadd.f32 %v2067, 1.0
    %v2079 = vadd.f32 %v2069, 1.0
    %v2080 = vadd.f32 %v2071, 1.0
    %v2081 = vadd.f32 %v2073, 1.0
    %v2082 = vrcp.pop %v2074
    %v2083 = vmul.f32 1.0, %v2082
    %v2084 = vrcp.pop %v2075
    %v2085 = vmul.f32 1.0, %v2084
    %v2086 = vrcp.pop %v2076
    %v2087 = vmul.f32 1.0, %v2086
    %v2088 = vrcp.pop %v2077
    %v2089 = vmul.f32 1.0, %v2088
    %v2090 = vrcp.pop %v2078
    %v2091 = vmul.f32 1.0, %v2090
    %v2092 = vrcp.pop %v2079
    %v2093 = vmul.f32 1.0, %v2092
    %v2094 = vrcp.pop %v2080
    %v2095 = vmul.f32 1.0, %v2094
    %v2096 = vrcp.pop %v2081
    %v2097 = vmul.f32 1.0, %v2096
    %v2106 = vrot.slane %v1762, 1
    %v2107 = vrot.slane %v1764, 1
    %v2108 = vrot.slane %v1766, 1
    %v2109 = vrot.slane %v1768, 1
    %v2110 = vrot.slane %v1770, 1
    %v2111 = vrot.slane %v1772, 1
    %v2112 = vrot.slane %v1774, 1
    %v2113 = vrot.slane %v1776, 1
    %v2123 = vcombine.high %v1904, %v1904
    %v2125 = vunpack.c.l.s4 1966171168
    %v2126 = vunpack.c.0.s8 %v2125
    %v2127 = vlaneseq
    %v2128 = vshrl.u32 %v2127, 7
    %v2129 = vsub.s32 %v2126, %v2128
    %v2130 = vrot.slane %v1904, %v2129
    %v2132 = vunpack.c.l.s4 1966171168
    %v2133 = vunpack.c.0.s8 %v2132
    %v2134 = vlaneseq
    %v2135 = vshrl.u32 %v2134, 7
    %v2136 = vsub.s32 %v2133, %v2135
    %v2137 = vrot.slane %v2123, %v2136
    %v2138 = vcombine.high %v2130, %v2130
    %v2139 = vcombine.high %v2137, %v2137
    %v2141 = vunpack.c.l.s4 1966171168
    %v2142 = vunpack.c.0.s8 %v2141
    %v2143 = vlaneseq
    %v2144 = vshrl.u32 %v2143, 7
    %v2145 = vsub.s32 %v2142, %v2144
    %v2146 = vrot.slane %v2130, %v2145
    %v2148 = vunpack.c.l.s4 1966171168
    %v2149 = vunpack.c.0.s8 %v2148
    %v2150 = vlaneseq
    %v2151 = vshrl.u32 %v2150, 7
    %v2152 = vsub.s32 %v2149, %v2151
    %v2153 = vrot.slane %v2137, %v2152
    %v2155 = vunpack.c.l.s4 1966171168
    %v2156 = vunpack.c.0.s8 %v2155
    %v2157 = vlaneseq
    %v2158 = vshrl.u32 %v2157, 7
    %v2159 = vsub.s32 %v2156, %v2158
    %v2160 = vrot.slane %v2138, %v2159
    %v2162 = vunpack.c.l.s4 1966171168
    %v2163 = vunpack.c.0.s8 %v2162
    %v2164 = vlaneseq
    %v2165 = vshrl.u32 %v2164, 7
    %v2166 = vsub.s32 %v2163, %v2165
    %v2167 = vrot.slane %v2139, %v2166
    %v2168 = vcombine.high %v2146, %v2146
    %v2169 = vcombine.high %v2153, %v2153
    %v2170 = vcombine.high %v2160, %v2160
    %v2171 = vcombine.high %v2167, %v2167
    %v2180 = vadd.f32 %v2106, %v2146
    %v2181 = vadd.f32 %v2107, %v2160
    %v2182 = vadd.f32 %v2108, %v2168
    %v2183 = vadd.f32 %v2109, %v2170
    %v2184 = vadd.f32 %v2110, %v2153
    %v2185 = vadd.f32 %v2111, %v2167
    %v2186 = vadd.f32 %v2112, %v2169
    %v2187 = vadd.f32 %v2113, %v2171
    %v2188 = vadd.f32 %v2180, %v852
    %v2189 = vadd.f32 %v2181, %v866
    %v2190 = vadd.f32 %v2182, %v874
    %v2191 = vadd.f32 %v2183, %v876
    %v2192 = vadd.f32 %v2184, %v859
    %v2193 = vadd.f32 %v2185, %v873
    %v2194 = vadd.f32 %v2186, %v875
    %v2195 = vadd.f32 %v2187, %v877
    %v2196 = vxor.u32 %v2188, 2147483648
    %v2197 = vxor.u32 %v2189, 2147483648
    %v2198 = vxor.u32 %v2190, 2147483648
    %v2199 = vxor.u32 %v2191, 2147483648
    %v2200 = vxor.u32 %v2192, 2147483648
    %v2201 = vxor.u32 %v2193, 2147483648
    %v2202 = vxor.u32 %v2194, 2147483648
    %v2203 = vxor.u32 %v2195, 2147483648
    %v2204 = vmul.f32 %v2196, 1.442695
    %v2205 = vpow.pop %v2204
    %v2206 = vmul.f32 %v2197, 1.442695
    %v2207 = vpow.pop %v2206
    %v2208 = vmul.f32 %v2198, 1.442695
    %v2209 = vpow.pop %v2208
    %v2210 = vmul.f32 %v2199, 1.442695
    %v2211 = vpow.pop %v2210
    %v2212 = vmul.f32 %v2200, 1.442695
    %v2213 = vpow.pop %v2212
    %v2214 = vmul.f32 %v2201, 1.442695
    %v2215 = vpow.pop %v2214
    %v2216 = vmul.f32 %v2202, 1.442695
    %v2217 = vpow.pop %v2216
    %v2218 = vmul.f32 %v2203, 1.442695
    %v2219 = vpow.pop %v2218
    %v2220 = vadd.f32 %v2205, 1.0
    %v2221 = vadd.f32 %v2207, 1.0
    %v2222 = vadd.f32 %v2209, 1.0
    %v2223 = vadd.f32 %v2211, 1.0
    %v2224 = vadd.f32 %v2213, 1.0
    %v2225 = vadd.f32 %v2215, 1.0
    %v2226 = vadd.f32 %v2217, 1.0
    %v2227 = vadd.f32 %v2219, 1.0
    %v2228 = vrcp.pop %v2220
    %v2229 = vmul.f32 1.0, %v2228
    %v2230 = vrcp.pop %v2221
    %v2231 = vmul.f32 1.0, %v2230
    %v2232 = vrcp.pop %v2222
    %v2233 = vmul.f32 1.0, %v2232
    %v2234 = vrcp.pop %v2223
    %v2235 = vmul.f32 1.0, %v2234
    %v2236 = vrcp.pop %v2224
    %v2237 = vmul.f32 1.0, %v2236
    %v2238 = vrcp.pop %v2225
    %v2239 = vmul.f32 1.0, %v2238
    %v2240 = vrcp.pop %v2226
    %v2241 = vmul.f32 1.0, %v2240
    %v2242 = vrcp.pop %v2227
    %v2243 = vmul.f32 1.0, %v2242
    %v2244 = vrot.slane %v1762, 2
    %v2245 = vrot.slane %v1764, 2
    %v2246 = vrot.slane %v1766, 2
    %v2247 = vrot.slane %v1768, 2
    %v2248 = vrot.slane %v1770, 2
    %v2249 = vrot.slane %v1772, 2
    %v2250 = vrot.slane %v1774, 2
    %v2251 = vrot.slane %v1776, 2
    %v2260 = vadd.f32 %v2244, %v982
    %v2261 = vadd.f32 %v2245, %v996
    %v2262 = vadd.f32 %v2246, %v1004
    %v2263 = vadd.f32 %v2247, %v1006
    %v2264 = vadd.f32 %v2248, %v989
    %v2265 = vadd.f32 %v2249, %v1003
    %v2266 = vadd.f32 %v2250, %v1005
    %v2267 = vadd.f32 %v2251, %v1007
    %v2268 = vadd.f32 %v1973, %v401
    %v2270 = vcombine.high %v2268, %v2268
    %v2272 = vunpack.c.l.s4 1966171168
    %v2273 = vunpack.c.0.s8 %v2272
    %v2274 = vlaneseq
    %v2275 = vshrl.u32 %v2274, 7
    %v2276 = vsub.s32 %v2273, %v2275
    %v2277 = vrot.slane %v2268, %v2276
    %v2279 = vunpack.c.l.s4 1966171168
    %v2280 = vunpack.c.0.s8 %v2279
    %v2281 = vlaneseq
    %v2282 = vshrl.u32 %v2281, 7
    %v2283 = vsub.s32 %v2280, %v2282
    %v2284 = vrot.slane %v2270, %v2283
    %v2285 = vcombine.high %v2277, %v2277
    %v2286 = vcombine.high %v2284, %v2284
    %v2288 = vunpack.c.l.s4 1966171168
    %v2289 = vunpack.c.0.s8 %v2288
    %v2290 = vlaneseq
    %v2291 = vshrl.u32 %v2290, 7
    %v2292 = vsub.s32 %v2289, %v2291
    %v2293 = vrot.slane %v2277, %v2292
    %v2295 = vunpack.c.l.s4 1966171168
    %v2296 = vunpack.c.0.s8 %v2295
    %v2297 = vlaneseq
    %v2298 = vshrl.u32 %v2297, 7
    %v2299 = vsub.s32 %v2296, %v2298
    %v2300 = vrot.slane %v2284, %v2299
    %v2302 = vunpack.c.l.s4 1966171168
    %v2303 = vunpack.c.0.s8 %v2302
    %v2304 = vlaneseq
    %v2305 = vshrl.u32 %v2304, 7
    %v2306 = vsub.s32 %v2303, %v2305
    %v2307 = vrot.slane %v2285, %v2306
    %v2309 = vunpack.c.l.s4 1966171168
    %v2310 = vunpack.c.0.s8 %v2309
    %v2311 = vlaneseq
    %v2312 = vshrl.u32 %v2311, 7
    %v2313 = vsub.s32 %v2310, %v2312
    %v2314 = vrot.slane %v2286, %v2313
    %v2315 = vcombine.high %v2293, %v2293
    %v2316 = vcombine.high %v2300, %v2300
    %v2317 = vcombine.high %v2307, %v2307
    %v2318 = vcombine.high %v2314, %v2314
    %v2327 = vmul.f32 %v2083, %v2293
    %v2328 = vmul.f32 %v2085, %v2307
    %v2329 = vmul.f32 %v2087, %v2315
    %v2330 = vmul.f32 %v2089, %v2317
    %v2331 = vmul.f32 %v2091, %v2300
    %v2332 = vmul.f32 %v2093, %v2314
    %v2333 = vmul.f32 %v2095, %v2316
    %v2334 = vmul.f32 %v2097, %v2318
    %v2335 = vadd.f32 %v2260, %v2327
    %v2336 = vadd.f32 %v2261, %v2328
    %v2337 = vadd.f32 %v2262, %v2329
    %v2338 = vadd.f32 %v2263, %v2330
    %v2339 = vadd.f32 %v2264, %v2331
    %v2340 = vadd.f32 %v2265, %v2332
    %v2341 = vadd.f32 %v2266, %v2333
    %v2342 = vadd.f32 %v2267, %v2334
    %v2343 = vtanh.pop %v2335
    %v2344 = vtanh.pop %v2336
    %v2345 = vtanh.pop %v2337
    %v2346 = vtanh.pop %v2338
    %v2347 = vtanh.pop %v2339
    %v2348 = vtanh.pop %v2340
    %v2349 = vtanh.pop %v2341
    %v2350 = vtanh.pop %v2342
    %v2351 = vsub.f32 1.0, %v2229
    %v2352 = vsub.f32 1.0, %v2231
    %v2353 = vsub.f32 1.0, %v2233
    %v2354 = vsub.f32 1.0, %v2235
    %v2355 = vsub.f32 1.0, %v2237
    %v2356 = vsub.f32 1.0, %v2239
    %v2357 = vsub.f32 1.0, %v2241
    %v2358 = vsub.f32 1.0, %v2243
    %v2359 = vmul.f32 %v2351, %v2343
    %v2360 = vmul.f32 %v2352, %v2344
    %v2361 = vmul.f32 %v2353, %v2345
    %v2362 = vmul.f32 %v2354, %v2346
    %v2363 = vmul.f32 %v2355, %v2347
    %v2364 = vmul.f32 %v2356, %v2348
    %v2365 = vmul.f32 %v2357, %v2349
    %v2366 = vmul.f32 %v2358, %v2350
    %v2367 = vmul.f32 %v2229, %v1753
    %v2368 = vmul.f32 %v2231, %v1754
    %v2369 = vmul.f32 %v2233, %v1755
    %v2370 = vmul.f32 %v2235, %v1756
    %v2371 = vmul.f32 %v2237, %v1757
    %v2372 = vmul.f32 %v2239, %v1758
    %v2373 = vmul.f32 %v2241, %v1759
    %v2374 = vmul.f32 %v2243, %v1760
    %v2375 = vadd.f32 %v2359, %v2367
    %v2376 = vadd.f32 %v2360, %v2368
    %v2377 = vadd.f32 %v2361, %v2369
    %v2378 = vadd.f32 %v2362, %v2370
    %v2379 = vadd.f32 %v2363, %v2371
    %v2380 = vadd.f32 %v2364, %v2372
    %v2381 = vadd.f32 %v2365, %v2373
    %v2382 = vadd.f32 %v2366, %v2374
    %s2383 = scalar_lea.vmem [#allocation2], 3
    %v2384 = vld [vmem:[%s2383] ss:$8 sm:$0x7]
    %s2385 = scalar_lea.vmem [#allocation2], 27
    %v2386 = vld [vmem:[%s2385] ss:$8 sm:$0x7]
    %s2387 = scalar_lea.vmem [#allocation2], 51
    %v2388 = vld [vmem:[%s2387] ss:$8 sm:$0x7]
    %s2389 = scalar_lea.vmem [#allocation2], 75
    %v2390 = vld [vmem:[%s2389] ss:$8 sm:$0x7]
    %s2391 = scalar_lea.vmem [#allocation2], 99
    %v2392 = vld [vmem:[%s2391] ss:$8 sm:$0x7]
    %s2393 = scalar_lea.vmem [#allocation2], 123
    %v2394 = vld [vmem:[%s2393] ss:$8 sm:$0x7]
    %s2395 = scalar_lea.vmem [#allocation2], 147
    %v2396 = vld [vmem:[%s2395] ss:$8 sm:$0x7]
    %s2397 = scalar_lea.vmem [#allocation2], 171
    %v2398 = vld [vmem:[%s2397] ss:$8 sm:$0x7]
    %v2407 = vcombine.low %v2375, %v2376
    %v2408 = vcombine.low %v2377, %v2378
    %v2409 = vcombine.low %v2379, %v2380
    %v2410 = vcombine.low %v2381, %v2382
    %v2412 = vunpack.c.l.s4 1966171168
    %v2413 = vunpack.c.0.s8 %v2412
    %v2414 = vlaneseq
    %v2415 = vshrl.u32 %v2414, 7
    %v2416 = vsub.s32 %v2413, %v2415
    %v2417 = vrot.slane %v2407, %v2416
    %v2419 = vunpack.c.l.s4 1966171168
    %v2420 = vunpack.c.0.s8 %v2419
    %v2421 = vlaneseq
    %v2422 = vshrl.u32 %v2421, 7
    %v2423 = vsub.s32 %v2420, %v2422
    %v2424 = vrot.slane %v2408, %v2423
    %v2426 = vunpack.c.l.s4 1966171168
    %v2427 = vunpack.c.0.s8 %v2426
    %v2428 = vlaneseq
    %v2429 = vshrl.u32 %v2428, 7
    %v2430 = vsub.s32 %v2427, %v2429
    %v2431 = vrot.slane %v2409, %v2430
    %v2433 = vunpack.c.l.s4 1966171168
    %v2434 = vunpack.c.0.s8 %v2433
    %v2435 = vlaneseq
    %v2436 = vshrl.u32 %v2435, 7
    %v2437 = vsub.s32 %v2434, %v2436
    %v2438 = vrot.slane %v2410, %v2437
    %v2439 = vcombine.low %v2417, %v2424
    %v2440 = vcombine.low %v2431, %v2438
    %v2442 = vunpack.c.l.s4 1966171168
    %v2443 = vunpack.c.0.s8 %v2442
    %v2444 = vlaneseq
    %v2445 = vshrl.u32 %v2444, 7
    %v2446 = vsub.s32 %v2443, %v2445
    %v2447 = vrot.slane %v2439, %v2446
    %v2449 = vunpack.c.l.s4 1966171168
    %v2450 = vunpack.c.0.s8 %v2449
    %v2451 = vlaneseq
    %v2452 = vshrl.u32 %v2451, 7
    %v2453 = vsub.s32 %v2450, %v2452
    %v2454 = vrot.slane %v2440, %v2453
    %v2455 = vcombine.low %v2447, %v2454
    %2457 = vmatprep.subr.mxu0 %v47
    %2458 = vmatpush1.msra.mxu0 %v46
    %2459 = vmatprep.subr.mxu0 %v50
    %2460 = vmatpush1.msra.mxu0 %v49
    %2461 = vmatprep.subr.mxu0 %v53
    %2462 = vmatpush1.msra.mxu0 %v52
    %2463 = vmatprep.subr.mxu0 %v56
    %2464 = vmatpush1.msra.mxu0 %v55
    %2465 = vmatprep.subr.mxu0 %v59
    %2466 = vmatpush1.msra.mxu0 %v58
    %2467 = vmatprep.subr.mxu0 %v62
    %2468 = vmatpush1.msra.mxu0 %v61
    %2469 = vmatprep.subr.mxu0 %v65
    %2470 = vmatpush1.msra.mxu0 %v64
    %2471 = vmatprep.subr.mxu0 %v68
    %2472 = vmatpush1.msra.mxu0 %v67
    %2473 = vmatprep.subr.mxu0 %v71
    %2474 = vmatpush1.msra.mxu0 %v70
    %2475 = vmatprep.subr.mxu0 %v74
    %2476 = vmatpush1.msra.mxu0 %v73
    %2477 = vmatprep.subr.mxu0 %v77
    %2478 = vmatpush1.msra.mxu0 %v76
    %2479 = vmatprep.subr.mxu0 %v80
    %2480 = vmatpush1.msra.mxu0 %v79
    %2481 = vmatprep.subr.mxu0 %v83
    %2482 = vmatpush1.msra.mxu0 %v82
    %2483 = vmatprep.subr.mxu0 %v86
    %2484 = vmatpush1.msra.mxu0 %v85
    %2485 = vmatprep.subr.mxu0 %v89
    %2486 = vmatpush1.msra.mxu0 %v88
    %2487 = vmatprep.subr.mxu0 %v92
    %2488 = vmatpush1.msra.mxu0 %v91
    %2489 = vmatprep.subr.mxu0 0.0
    %2490 = vmatpush1.msra.mxu0 0.0
    %2491 = vmatprep.subr.mxu0 0.0
    %2492 = vmatpush1.msra.mxu0 0.0
    %2493 = vmatprep.subr.mxu0 0.0
    %2494 = vmatpush1.msra.mxu0 0.0
    %2495 = vmatprep.subr.mxu0 0.0
    %2496 = vmatpush1.msra.mxu0 0.0
    %2497 = vmatprep.subr.mxu0 0.0
    %2498 = vmatpush1.msra.mxu0 0.0
    %2499 = vmatprep.subr.mxu0 0.0
    %2500 = vmatpush1.msra.mxu0 0.0
    %2501 = vmatprep.subr.mxu0 0.0
    %2502 = vmatpush1.msra.mxu0 0.0
    %2503 = vmatprep.subr.mxu0 0.0
    %2504 = vmatpush1.msra.mxu0 0.0
    %2505 = vmatprep.subr.mxu0 0.0
    %2506 = vmatpush1.msra.mxu0 0.0
    %2507 = vmatprep.subr.mxu0 0.0
    %2508 = vmatpush1.msra.mxu0 0.0
    %2509 = vmatprep.subr.mxu0 0.0
    %2510 = vmatpush1.msra.mxu0 0.0
    %2511 = vmatprep.subr.mxu0 0.0
    %2512 = vmatpush1.msra.mxu0 0.0
    %2513 = vmatprep.subr.mxu0 0.0
    %2514 = vmatpush1.msra.mxu0 0.0
    %2515 = vmatprep.subr.mxu0 0.0
    %2516 = vmatpush1.msra.mxu0 0.0
    %2517 = vmatprep.subr.mxu0 0.0
    %2518 = vmatpush1.msra.mxu0 0.0
    %2519 = vmatprep.subr.mxu0 0.0
    %2520 = vmatpush1.msra.mxu0 0.0
    %2521 = vmatprep.mubr.f32.mxu0 0.0
    %2522 = vmatmul.mubr.f32.gmra.mrb[0].mxu0 %v2455
    %v2523 = vpop.f32.mrb[0].mxu0
    %v2524 = vadd.f32 0.0, %v2523
    %v2525 = vpop.f32.mrb[0].mxu0
    %v2526 = vadd.f32 0.0, %v2525
    %2527 = vdwg.mxu0
    %2528 = vmatprep.subr.mxu0 0.0
    %2529 = vmatpush1.msra.mxu0 %v48
    %2530 = vmatprep.subr.mxu0 0.0
    %2531 = vmatpush1.msra.mxu0 %v51
    %2532 = vmatprep.subr.mxu0 0.0
    %2533 = vmatpush1.msra.mxu0 %v54
    %2534 = vmatprep.subr.mxu0 0.0
    %2535 = vmatpush1.msra.mxu0 %v57
    %2536 = vmatprep.subr.mxu0 0.0
    %2537 = vmatpush1.msra.mxu0 %v60
    %2538 = vmatprep.subr.mxu0 0.0
    %2539 = vmatpush1.msra.mxu0 %v63
    %2540 = vmatprep.subr.mxu0 0.0
    %2541 = vmatpush1.msra.mxu0 %v66
    %2542 = vmatprep.subr.mxu0 0.0
    %2543 = vmatpush1.msra.mxu0 %v69
    %2544 = vmatprep.subr.mxu0 0.0
    %2545 = vmatpush1.msra.mxu0 %v72
    %2546 = vmatprep.subr.mxu0 0.0
    %2547 = vmatpush1.msra.mxu0 %v75
    %2548 = vmatprep.subr.mxu0 0.0
    %2549 = vmatpush1.msra.mxu0 %v78
    %2550 = vmatprep.subr.mxu0 0.0
    %2551 = vmatpush1.msra.mxu0 %v81
    %2552 = vmatprep.subr.mxu0 0.0
    %2553 = vmatpush1.msra.mxu0 %v84
    %2554 = vmatprep.subr.mxu0 0.0
    %2555 = vmatpush1.msra.mxu0 %v87
    %2556 = vmatprep.subr.mxu0 0.0
    %2557 = vmatpush1.msra.mxu0 %v90
    %2558 = vmatprep.subr.mxu0 0.0
    %2559 = vmatpush1.msra.mxu0 %v93
    %2560 = vmatprep.subr.mxu0 0.0
    %2561 = vmatpush1.msra.mxu0 0.0
    %2562 = vmatprep.subr.mxu0 0.0
    %2563 = vmatpush1.msra.mxu0 0.0
    %2564 = vmatprep.subr.mxu0 0.0
    %2565 = vmatpush1.msra.mxu0 0.0
    %2566 = vmatprep.subr.mxu0 0.0
    %2567 = vmatpush1.msra.mxu0 0.0
    %2568 = vmatprep.subr.mxu0 0.0
    %2569 = vmatpush1.msra.mxu0 0.0
    %2570 = vmatprep.subr.mxu0 0.0
    %2571 = vmatpush1.msra.mxu0 0.0
    %2572 = vmatprep.subr.mxu0 0.0
    %2573 = vmatpush1.msra.mxu0 0.0
    %2574 = vmatprep.subr.mxu0 0.0
    %2575 = vmatpush1.msra.mxu0 0.0
    %2576 = vmatprep.subr.mxu0 0.0
    %2577 = vmatpush1.msra.mxu0 0.0
    %2578 = vmatprep.subr.mxu0 0.0
    %2579 = vmatpush1.msra.mxu0 0.0
    %2580 = vmatprep.subr.mxu0 0.0
    %2581 = vmatpush1.msra.mxu0 0.0
    %2582 = vmatprep.subr.mxu0 0.0
    %2583 = vmatpush1.msra.mxu0 0.0
    %2584 = vmatprep.subr.mxu0 0.0
    %2585 = vmatpush1.msra.mxu0 0.0
    %2586 = vmatprep.subr.mxu0 0.0
    %2587 = vmatpush1.msra.mxu0 0.0
    %2588 = vmatprep.subr.mxu0 0.0
    %2589 = vmatpush1.msra.mxu0 0.0
    %2590 = vmatprep.subr.mxu0 0.0
    %2591 = vmatpush1.msra.mxu0 0.0
    %2592 = vmatprep.mubr.f32.mxu0 0.0
    %2593 = vmatmul.mubr.f32.gmra.mrb[0].mxu0 %v2455
    %v2594 = vpop.f32.mrb[0].mxu0
    %v2595 = vadd.f32 0.0, %v2594
    %v2596 = vpop.f32.mrb[0].mxu0
    %2597 = vdwg.mxu0
    %v2599 = vcombine.high %v2524, %v2524
    %v2601 = vunpack.c.l.s4 1966171168
    %v2602 = vunpack.c.0.s8 %v2601
    %v2603 = vlaneseq
    %v2604 = vshrl.u32 %v2603, 7
    %v2605 = vsub.s32 %v2602, %v2604
    %v2606 = vrot.slane %v2524, %v2605
    %v2608 = vunpack.c.l.s4 1966171168
    %v2609 = vunpack.c.0.s8 %v2608
    %v2610 = vlaneseq
    %v2611 = vshrl.u32 %v2610, 7
    %v2612 = vsub.s32 %v2609, %v2611
    %v2613 = vrot.slane %v2599, %v2612
    %v2614 = vcombine.high %v2606, %v2606
    %v2615 = vcombine.high %v2613, %v2613
    %v2617 = vunpack.c.l.s4 1966171168
    %v2618 = vunpack.c.0.s8 %v2617
    %v2619 = vlaneseq
    %v2620 = vshrl.u32 %v2619, 7
    %v2621 = vsub.s32 %v2618, %v2620
    %v2622 = vrot.slane %v2606, %v2621
    %v2624 = vunpack.c.l.s4 1966171168
    %v2625 = vunpack.c.0.s8 %v2624
    %v2626 = vlaneseq
    %v2627 = vshrl.u32 %v2626, 7
    %v2628 = vsub.s32 %v2625, %v2627
    %v2629 = vrot.slane %v2613, %v2628
    %v2631 = vunpack.c.l.s4 1966171168
    %v2632 = vunpack.c.0.s8 %v2631
    %v2633 = vlaneseq
    %v2634 = vshrl.u32 %v2633, 7
    %v2635 = vsub.s32 %v2632, %v2634
    %v2636 = vrot.slane %v2614, %v2635
    %v2638 = vunpack.c.l.s4 1966171168
    %v2639 = vunpack.c.0.s8 %v2638
    %v2640 = vlaneseq
    %v2641 = vshrl.u32 %v2640, 7
    %v2642 = vsub.s32 %v2639, %v2641
    %v2643 = vrot.slane %v2615, %v2642
    %v2644 = vcombine.high %v2622, %v2622
    %v2645 = vcombine.high %v2629, %v2629
    %v2646 = vcombine.high %v2636, %v2636
    %v2647 = vcombine.high %v2643, %v2643
    %v2656 = vadd.f32 %v2384, %v2622
    %v2657 = vadd.f32 %v2386, %v2636
    %v2658 = vadd.f32 %v2388, %v2644
    %v2659 = vadd.f32 %v2390, %v2646
    %v2660 = vadd.f32 %v2392, %v2629
    %v2661 = vadd.f32 %v2394, %v2643
    %v2662 = vadd.f32 %v2396, %v2645
    %v2663 = vadd.f32 %v2398, %v2647
    %v2664 = vadd.f32 %v2656, %v648
    %v2665 = vadd.f32 %v2657, %v662
    %v2666 = vadd.f32 %v2658, %v670
    %v2667 = vadd.f32 %v2659, %v672
    %v2668 = vadd.f32 %v2660, %v655
    %v2669 = vadd.f32 %v2661, %v669
    %v2670 = vadd.f32 %v2662, %v671
    %v2671 = vadd.f32 %v2663, %v673
    %v2672 = vxor.u32 %v2664, 2147483648
    %v2673 = vxor.u32 %v2665, 2147483648
    %v2674 = vxor.u32 %v2666, 2147483648
    %v2675 = vxor.u32 %v2667, 2147483648
    %v2676 = vxor.u32 %v2668, 2147483648
    %v2677 = vxor.u32 %v2669, 2147483648
    %v2678 = vxor.u32 %v2670, 2147483648
    %v2679 = vxor.u32 %v2671, 2147483648
    %v2680 = vmul.f32 %v2672, 1.442695
    %v2681 = vpow.pop %v2680
    %v2682 = vmul.f32 %v2673, 1.442695
    %v2683 = vpow.pop %v2682
    %v2684 = vmul.f32 %v2674, 1.442695
    %v2685 = vpow.pop %v2684
    %v2686 = vmul.f32 %v2675, 1.442695
    %v2687 = vpow.pop %v2686
    %v2688 = vmul.f32 %v2676, 1.442695
    %v2689 = vpow.pop %v2688
    %v2690 = vmul.f32 %v2677, 1.442695
    %v2691 = vpow.pop %v2690
    %v2692 = vmul.f32 %v2678, 1.442695
    %v2693 = vpow.pop %v2692
    %v2694 = vmul.f32 %v2679, 1.442695
    %v2695 = vpow.pop %v2694
    %v2696 = vadd.f32 %v2681, 1.0
    %v2697 = vadd.f32 %v2683, 1.0
    %v2698 = vadd.f32 %v2685, 1.0
    %v2699 = vadd.f32 %v2687, 1.0
    %v2700 = vadd.f32 %v2689, 1.0
    %v2701 = vadd.f32 %v2691, 1.0
    %v2702 = vadd.f32 %v2693, 1.0
    %v2703 = vadd.f32 %v2695, 1.0
    %v2704 = vrcp.pop %v2696
    %v2705 = vmul.f32 1.0, %v2704
    %v2706 = vrcp.pop %v2697
    %v2707 = vmul.f32 1.0, %v2706
    %v2708 = vrcp.pop %v2698
    %v2709 = vmul.f32 1.0, %v2708
    %v2710 = vrcp.pop %v2699
    %v2711 = vmul.f32 1.0, %v2710
    %v2712 = vrcp.pop %v2700
    %v2713 = vmul.f32 1.0, %v2712
    %v2714 = vrcp.pop %v2701
    %v2715 = vmul.f32 1.0, %v2714
    %v2716 = vrcp.pop %v2702
    %v2717 = vmul.f32 1.0, %v2716
    %v2718 = vrcp.pop %v2703
    %v2719 = vmul.f32 1.0, %v2718
    %v2728 = vrot.slane %v2384, 1
    %v2729 = vrot.slane %v2386, 1
    %v2730 = vrot.slane %v2388, 1
    %v2731 = vrot.slane %v2390, 1
    %v2732 = vrot.slane %v2392, 1
    %v2733 = vrot.slane %v2394, 1
    %v2734 = vrot.slane %v2396, 1
    %v2735 = vrot.slane %v2398, 1
    %v2745 = vcombine.high %v2526, %v2526
    %v2747 = vunpack.c.l.s4 1966171168
    %v2748 = vunpack.c.0.s8 %v2747
    %v2749 = vlaneseq
    %v2750 = vshrl.u32 %v2749, 7
    %v2751 = vsub.s32 %v2748, %v2750
    %v2752 = vrot.slane %v2526, %v2751
    %v2754 = vunpack.c.l.s4 1966171168
    %v2755 = vunpack.c.0.s8 %v2754
    %v2756 = vlaneseq
    %v2757 = vshrl.u32 %v2756, 7
    %v2758 = vsub.s32 %v2755, %v2757
    %v2759 = vrot.slane %v2745, %v2758
    %v2760 = vcombine.high %v2752, %v2752
    %v2761 = vcombine.high %v2759, %v2759
    %v2763 = vunpack.c.l.s4 1966171168
    %v2764 = vunpack.c.0.s8 %v2763
    %v2765 = vlaneseq
    %v2766 = vshrl.u32 %v2765, 7
    %v2767 = vsub.s32 %v2764, %v2766
    %v2768 = vrot.slane %v2752, %v2767
    %v2770 = vunpack.c.l.s4 1966171168
    %v2771 = vunpack.c.0.s8 %v2770
    %v2772 = vlaneseq
    %v2773 = vshrl.u32 %v2772, 7
    %v2774 = vsub.s32 %v2771, %v2773
    %v2775 = vrot.slane %v2759, %v2774
    %v2777 = vunpack.c.l.s4 1966171168
    %v2778 = vunpack.c.0.s8 %v2777
    %v2779 = vlaneseq
    %v2780 = vshrl.u32 %v2779, 7
    %v2781 = vsub.s32 %v2778, %v2780
    %v2782 = vrot.slane %v2760, %v2781
    %v2784 = vunpack.c.l.s4 1966171168
    %v2785 = vunpack.c.0.s8 %v2784
    %v2786 = vlaneseq
    %v2787 = vshrl.u32 %v2786, 7
    %v2788 = vsub.s32 %v2785, %v2787
    %v2789 = vrot.slane %v2761, %v2788
    %v2790 = vcombine.high %v2768, %v2768
    %v2791 = vcombine.high %v2775, %v2775
    %v2792 = vcombine.high %v2782, %v2782
    %v2793 = vcombine.high %v2789, %v2789
    %v2802 = vadd.f32 %v2728, %v2768
    %v2803 = vadd.f32 %v2729, %v2782
    %v2804 = vadd.f32 %v2730, %v2790
    %v2805 = vadd.f32 %v2731, %v2792
    %v2806 = vadd.f32 %v2732, %v2775
    %v2807 = vadd.f32 %v2733, %v2789
    %v2808 = vadd.f32 %v2734, %v2791
    %v2809 = vadd.f32 %v2735, %v2793
    %v2810 = vadd.f32 %v2802, %v852
    %v2811 = vadd.f32 %v2803, %v866
    %v2812 = vadd.f32 %v2804, %v874
    %v2813 = vadd.f32 %v2805, %v876
    %v2814 = vadd.f32 %v2806, %v859
    %v2815 = vadd.f32 %v2807, %v873
    %v2816 = vadd.f32 %v2808, %v875
    %v2817 = vadd.f32 %v2809, %v877
    %v2818 = vxor.u32 %v2810, 2147483648
    %v2819 = vxor.u32 %v2811, 2147483648
    %v2820 = vxor.u32 %v2812, 2147483648
    %v2821 = vxor.u32 %v2813, 2147483648
    %v2822 = vxor.u32 %v2814, 2147483648
    %v2823 = vxor.u32 %v2815, 2147483648
    %v2824 = vxor.u32 %v2816, 2147483648
    %v2825 = vxor.u32 %v2817, 2147483648
    %v2826 = vmul.f32 %v2818, 1.442695
    %v2827 = vpow.pop %v2826
    %v2828 = vmul.f32 %v2819, 1.442695
    %v2829 = vpow.pop %v2828
    %v2830 = vmul.f32 %v2820, 1.442695
    %v2831 = vpow.pop %v2830
    %v2832 = vmul.f32 %v2821, 1.442695
    %v2833 = vpow.pop %v2832
    %v2834 = vmul.f32 %v2822, 1.442695
    %v2835 = vpow.pop %v2834
    %v2836 = vmul.f32 %v2823, 1.442695
    %v2837 = vpow.pop %v2836
    %v2838 = vmul.f32 %v2824, 1.442695
    %v2839 = vpow.pop %v2838
    %v2840 = vmul.f32 %v2825, 1.442695
    %v2841 = vpow.pop %v2840
    %v2842 = vadd.f32 %v2827, 1.0
    %v2843 = vadd.f32 %v2829, 1.0
    %v2844 = vadd.f32 %v2831, 1.0
    %v2845 = vadd.f32 %v2833, 1.0
    %v2846 = vadd.f32 %v2835, 1.0
    %v2847 = vadd.f32 %v2837, 1.0
    %v2848 = vadd.f32 %v2839, 1.0
    %v2849 = vadd.f32 %v2841, 1.0
    %v2850 = vrcp.pop %v2842
    %v2851 = vmul.f32 1.0, %v2850
    %v2852 = vrcp.pop %v2843
    %v2853 = vmul.f32 1.0, %v2852
    %v2854 = vrcp.pop %v2844
    %v2855 = vmul.f32 1.0, %v2854
    %v2856 = vrcp.pop %v2845
    %v2857 = vmul.f32 1.0, %v2856
    %v2858 = vrcp.pop %v2846
    %v2859 = vmul.f32 1.0, %v2858
    %v2860 = vrcp.pop %v2847
    %v2861 = vmul.f32 1.0, %v2860
    %v2862 = vrcp.pop %v2848
    %v2863 = vmul.f32 1.0, %v2862
    %v2864 = vrcp.pop %v2849
    %v2865 = vmul.f32 1.0, %v2864
    %v2866 = vrot.slane %v2384, 2
    %v2867 = vrot.slane %v2386, 2
    %v2868 = vrot.slane %v2388, 2
    %v2869 = vrot.slane %v2390, 2
    %v2870 = vrot.slane %v2392, 2
    %v2871 = vrot.slane %v2394, 2
    %v2872 = vrot.slane %v2396, 2
    %v2873 = vrot.slane %v2398, 2
    %v2882 = vadd.f32 %v2866, %v982
    %v2883 = vadd.f32 %v2867, %v996
    %v2884 = vadd.f32 %v2868, %v1004
    %v2885 = vadd.f32 %v2869, %v1006
    %v2886 = vadd.f32 %v2870, %v989
    %v2887 = vadd.f32 %v2871, %v1003
    %v2888 = vadd.f32 %v2872, %v1005
    %v2889 = vadd.f32 %v2873, %v1007
    %v2890 = vadd.f32 %v2595, %v401
    %v2892 = vcombine.high %v2890, %v2890
    %v2894 = vunpack.c.l.s4 1966171168
    %v2895 = vunpack.c.0.s8 %v2894
    %v2896 = vlaneseq
    %v2897 = vshrl.u32 %v2896, 7
    %v2898 = vsub.s32 %v2895, %v2897
    %v2899 = vrot.slane %v2890, %v2898
    %v2901 = vunpack.c.l.s4 1966171168
    %v2902 = vunpack.c.0.s8 %v2901
    %v2903 = vlaneseq
    %v2904 = vshrl.u32 %v2903, 7
    %v2905 = vsub.s32 %v2902, %v2904
    %v2906 = vrot.slane %v2892, %v2905
    %v2907 = vcombine.high %v2899, %v2899
    %v2908 = vcombine.high %v2906, %v2906
    %v2910 = vunpack.c.l.s4 1966171168
    %v2911 = vunpack.c.0.s8 %v2910
    %v2912 = vlaneseq
    %v2913 = vshrl.u32 %v2912, 7
    %v2914 = vsub.s32 %v2911, %v2913
    %v2915 = vrot.slane %v2899, %v2914
    %v2917 = vunpack.c.l.s4 1966171168
    %v2918 = vunpack.c.0.s8 %v2917
    %v2919 = vlaneseq
    %v2920 = vshrl.u32 %v2919, 7
    %v2921 = vsub.s32 %v2918, %v2920
    %v2922 = vrot.slane %v2906, %v2921
    %v2924 = vunpack.c.l.s4 1966171168
    %v2925 = vunpack.c.0.s8 %v2924
    %v2926 = vlaneseq
    %v2927 = vshrl.u32 %v2926, 7
    %v2928 = vsub.s32 %v2925, %v2927
    %v2929 = vrot.slane %v2907, %v2928
    %v2931 = vunpack.c.l.s4 1966171168
    %v2932 = vunpack.c.0.s8 %v2931
    %v2933 = vlaneseq
    %v2934 = vshrl.u32 %v2933, 7
    %v2935 = vsub.s32 %v2932, %v2934
    %v2936 = vrot.slane %v2908, %v2935
    %v2937 = vcombine.high %v2915, %v2915
    %v2938 = vcombine.high %v2922, %v2922
    %v2939 = vcombine.high %v2929, %v2929
    %v2940 = vcombine.high %v2936, %v2936
    %v2949 = vmul.f32 %v2705, %v2915
    %v2950 = vmul.f32 %v2707, %v2929
    %v2951 = vmul.f32 %v2709, %v2937
    %v2952 = vmul.f32 %v2711, %v2939
    %v2953 = vmul.f32 %v2713, %v2922
    %v2954 = vmul.f32 %v2715, %v2936
    %v2955 = vmul.f32 %v2717, %v2938
    %v2956 = vmul.f32 %v2719, %v2940
    %v2957 = vadd.f32 %v2882, %v2949
    %v2958 = vadd.f32 %v2883, %v2950
    %v2959 = vadd.f32 %v2884, %v2951
    %v2960 = vadd.f32 %v2885, %v2952
    %v2961 = vadd.f32 %v2886, %v2953
    %v2962 = vadd.f32 %v2887, %v2954
    %v2963 = vadd.f32 %v2888, %v2955
    %v2964 = vadd.f32 %v2889, %v2956
    %v2965 = vtanh.pop %v2957
    %v2966 = vtanh.pop %v2958
    %v2967 = vtanh.pop %v2959
    %v2968 = vtanh.pop %v2960
    %v2969 = vtanh.pop %v2961
    %v2970 = vtanh.pop %v2962
    %v2971 = vtanh.pop %v2963
    %v2972 = vtanh.pop %v2964
    %v2973 = vsub.f32 1.0, %v2851
    %v2974 = vsub.f32 1.0, %v2853
    %v2975 = vsub.f32 1.0, %v2855
    %v2976 = vsub.f32 1.0, %v2857
    %v2977 = vsub.f32 1.0, %v2859
    %v2978 = vsub.f32 1.0, %v2861
    %v2979 = vsub.f32 1.0, %v2863
    %v2980 = vsub.f32 1.0, %v2865
    %v2981 = vmul.f32 %v2973, %v2965
    %v2982 = vmul.f32 %v2974, %v2966
    %v2983 = vmul.f32 %v2975, %v2967
    %v2984 = vmul.f32 %v2976, %v2968
    %v2985 = vmul.f32 %v2977, %v2969
    %v2986 = vmul.f32 %v2978, %v2970
    %v2987 = vmul.f32 %v2979, %v2971
    %v2988 = vmul.f32 %v2980, %v2972
    %v2989 = vmul.f32 %v2851, %v2375
    %v2990 = vmul.f32 %v2853, %v2376
    %v2991 = vmul.f32 %v2855, %v2377
    %v2992 = vmul.f32 %v2857, %v2378
    %v2993 = vmul.f32 %v2859, %v2379
    %v2994 = vmul.f32 %v2861, %v2380
    %v2995 = vmul.f32 %v2863, %v2381
    %v2996 = vmul.f32 %v2865, %v2382
    %v2997 = vadd.f32 %v2981, %v2989
    %v2998 = vadd.f32 %v2982, %v2990
    %v2999 = vadd.f32 %v2983, %v2991
    %v3000 = vadd.f32 %v2984, %v2992
    %v3001 = vadd.f32 %v2985, %v2993
    %v3002 = vadd.f32 %v2986, %v2994
    %v3003 = vadd.f32 %v2987, %v2995
    %v3004 = vadd.f32 %v2988, %v2996
    %s3005 = scalar_lea.vmem [#allocation2], 4
    %v3006 = vld [vmem:[%s3005] ss:$8 sm:$0x7]
    %s3007 = scalar_lea.vmem [#allocation2], 28
    %v3008 = vld [vmem:[%s3007] ss:$8 sm:$0x7]
    %s3009 = scalar_lea.vmem [#allocation2], 52
    %v3010 = vld [vmem:[%s3009] ss:$8 sm:$0x7]
    %s3011 = scalar_lea.vmem [#allocation2], 76
    %v3012 = vld [vmem:[%s3011] ss:$8 sm:$0x7]
    %s3013 = scalar_lea.vmem [#allocation2], 100
    %v3014 = vld [vmem:[%s3013] ss:$8 sm:$0x7]
    %s3015 = scalar_lea.vmem [#allocation2], 124
    %v3016 = vld [vmem:[%s3015] ss:$8 sm:$0x7]
    %s3017 = scalar_lea.vmem [#allocation2], 148
    %v3018 = vld [vmem:[%s3017] ss:$8 sm:$0x7]
    %s3019 = scalar_lea.vmem [#allocation2], 172
    %v3020 = vld [vmem:[%s3019] ss:$8 sm:$0x7]
    %v3029 = vcombine.low %v2997, %v2998
    %v3030 = vcombine.low %v2999, %v3000
    %v3031 = vcombine.low %v3001, %v3002
    %v3032 = vcombine.low %v3003, %v3004
    %v3034 = vunpack.c.l.s4 1966171168
    %v3035 = vunpack.c.0.s8 %v3034
    %v3036 = vlaneseq
    %v3037 = vshrl.u32 %v3036, 7
    %v3038 = vsub.s32 %v3035, %v3037
    %v3039 = vrot.slane %v3029, %v3038
    %v3041 = vunpack.c.l.s4 1966171168
    %v3042 = vunpack.c.0.s8 %v3041
    %v3043 = vlaneseq
    %v3044 = vshrl.u32 %v3043, 7
    %v3045 = vsub.s32 %v3042, %v3044
    %v3046 = vrot.slane %v3030, %v3045
    %v3048 = vunpack.c.l.s4 1966171168
    %v3049 = vunpack.c.0.s8 %v3048
    %v3050 = vlaneseq
    %v3051 = vshrl.u32 %v3050, 7
    %v3052 = vsub.s32 %v3049, %v3051
    %v3053 = vrot.slane %v3031, %v3052
    %v3055 = vunpack.c.l.s4 1966171168
    %v3056 = vunpack.c.0.s8 %v3055
    %v3057 = vlaneseq
    %v3058 = vshrl.u32 %v3057, 7
    %v3059 = vsub.s32 %v3056, %v3058
    %v3060 = vrot.slane %v3032, %v3059
    %v3061 = vcombine.low %v3039, %v3046
    %v3062 = vcombine.low %v3053, %v3060
    %v3064 = vunpack.c.l.s4 1966171168
    %v3065 = vunpack.c.0.s8 %v3064
    %v3066 = vlaneseq
    %v3067 = vshrl.u32 %v3066, 7
    %v3068 = vsub.s32 %v3065, %v3067
    %v3069 = vrot.slane %v3061, %v3068
    %v3071 = vunpack.c.l.s4 1966171168
    %v3072 = vunpack.c.0.s8 %v3071
    %v3073 = vlaneseq
    %v3074 = vshrl.u32 %v3073, 7
    %v3075 = vsub.s32 %v3072, %v3074
    %v3076 = vrot.slane %v3062, %v3075
    %v3077 = vcombine.low %v3069, %v3076
    %3079 = vmatprep.subr.mxu0 %v47
    %3080 = vmatpush1.msra.mxu0 %v46
    %3081 = vmatprep.subr.mxu0 %v50
    %3082 = vmatpush1.msra.mxu0 %v49
    %3083 = vmatprep.subr.mxu0 %v53
    %3084 = vmatpush1.msra.mxu0 %v52
    %3085 = vmatprep.subr.mxu0 %v56
    %3086 = vmatpush1.msra.mxu0 %v55
    %3087 = vmatprep.subr.mxu0 %v59
    %3088 = vmatpush1.msra.mxu0 %v58
    %3089 = vmatprep.subr.mxu0 %v62
    %3090 = vmatpush1.msra.mxu0 %v61
    %3091 = vmatprep.subr.mxu0 %v65
    %3092 = vmatpush1.msra.mxu0 %v64
    %3093 = vmatprep.subr.mxu0 %v68
    %3094 = vmatpush1.msra.mxu0 %v67
    %3095 = vmatprep.subr.mxu0 %v71
    %3096 = vmatpush1.msra.mxu0 %v70
    %3097 = vmatprep.subr.mxu0 %v74
    %3098 = vmatpush1.msra.mxu0 %v73
    %3099 = vmatprep.subr.mxu0 %v77
    %3100 = vmatpush1.msra.mxu0 %v76
    %3101 = vmatprep.subr.mxu0 %v80
    %3102 = vmatpush1.msra.mxu0 %v79
    %3103 = vmatprep.subr.mxu0 %v83
    %3104 = vmatpush1.msra.mxu0 %v82
    %3105 = vmatprep.subr.mxu0 %v86
    %3106 = vmatpush1.msra.mxu0 %v85
    %3107 = vmatprep.subr.mxu0 %v89
    %3108 = vmatpush1.msra.mxu0 %v88
    %3109 = vmatprep.subr.mxu0 %v92
    %3110 = vmatpush1.msra.mxu0 %v91
    %3111 = vmatprep.subr.mxu0 0.0
    %3112 = vmatpush1.msra.mxu0 0.0
    %3113 = vmatprep.subr.mxu0 0.0
    %3114 = vmatpush1.msra.mxu0 0.0
    %3115 = vmatprep.subr.mxu0 0.0
    %3116 = vmatpush1.msra.mxu0 0.0
    %3117 = vmatprep.subr.mxu0 0.0
    %3118 = vmatpush1.msra.mxu0 0.0
    %3119 = vmatprep.subr.mxu0 0.0
    %3120 = vmatpush1.msra.mxu0 0.0
    %3121 = vmatprep.subr.mxu0 0.0
    %3122 = vmatpush1.msra.mxu0 0.0
    %3123 = vmatprep.subr.mxu0 0.0
    %3124 = vmatpush1.msra.mxu0 0.0
    %3125 = vmatprep.subr.mxu0 0.0
    %3126 = vmatpush1.msra.mxu0 0.0
    %3127 = vmatprep.subr.mxu0 0.0
    %3128 = vmatpush1.msra.mxu0 0.0
    %3129 = vmatprep.subr.mxu0 0.0
    %3130 = vmatpush1.msra.mxu0 0.0
    %3131 = vmatprep.subr.mxu0 0.0
    %3132 = vmatpush1.msra.mxu0 0.0
    %3133 = vmatprep.subr.mxu0 0.0
    %3134 = vmatpush1.msra.mxu0 0.0
    %3135 = vmatprep.subr.mxu0 0.0
    %3136 = vmatpush1.msra.mxu0 0.0
    %3137 = vmatprep.subr.mxu0 0.0
    %3138 = vmatpush1.msra.mxu0 0.0
    %3139 = vmatprep.subr.mxu0 0.0
    %3140 = vmatpush1.msra.mxu0 0.0
    %3141 = vmatprep.subr.mxu0 0.0
    %3142 = vmatpush1.msra.mxu0 0.0
    %3143 = vmatprep.mubr.f32.mxu0 0.0
    %3144 = vmatmul.mubr.f32.gmra.mrb[0].mxu0 %v3077
    %v3145 = vpop.f32.mrb[0].mxu0
    %v3146 = vadd.f32 0.0, %v3145
    %v3147 = vpop.f32.mrb[0].mxu0
    %v3148 = vadd.f32 0.0, %v3147
    %3149 = vdwg.mxu0
    %3150 = vmatprep.subr.mxu0 0.0
    %3151 = vmatpush1.msra.mxu0 %v48
    %3152 = vmatprep.subr.mxu0 0.0
    %3153 = vmatpush1.msra.mxu0 %v51
    %3154 = vmatprep.subr.mxu0 0.0
    %3155 = vmatpush1.msra.mxu0 %v54
    %3156 = vmatprep.subr.mxu0 0.0
    %3157 = vmatpush1.msra.mxu0 %v57
    %3158 = vmatprep.subr.mxu0 0.0
    %3159 = vmatpush1.msra.mxu0 %v60
    %3160 = vmatprep.subr.mxu0 0.0
    %3161 = vmatpush1.msra.mxu0 %v63
    %3162 = vmatprep.subr.mxu0 0.0
    %3163 = vmatpush1.msra.mxu0 %v66
    %3164 = vmatprep.subr.mxu0 0.0
    %3165 = vmatpush1.msra.mxu0 %v69
    %3166 = vmatprep.subr.mxu0 0.0
    %3167 = vmatpush1.msra.mxu0 %v72
    %3168 = vmatprep.subr.mxu0 0.0
    %3169 = vmatpush1.msra.mxu0 %v75
    %3170 = vmatprep.subr.mxu0 0.0
    %3171 = vmatpush1.msra.mxu0 %v78
    %3172 = vmatprep.subr.mxu0 0.0
    %3173 = vmatpush1.msra.mxu0 %v81
    %3174 = vmatprep.subr.mxu0 0.0
    %3175 = vmatpush1.msra.mxu0 %v84
    %3176 = vmatprep.subr.mxu0 0.0
    %3177 = vmatpush1.msra.mxu0 %v87
    %3178 = vmatprep.subr.mxu0 0.0
    %3179 = vmatpush1.msra.mxu0 %v90
    %3180 = vmatprep.subr.mxu0 0.0
    %3181 = vmatpush1.msra.mxu0 %v93
    %3182 = vmatprep.subr.mxu0 0.0
    %3183 = vmatpush1.msra.mxu0 0.0
    %3184 = vmatprep.subr.mxu0 0.0
    %3185 = vmatpush1.msra.mxu0 0.0
    %3186 = vmatprep.subr.mxu0 0.0
    %3187 = vmatpush1.msra.mxu0 0.0
    %3188 = vmatprep.subr.mxu0 0.0
    %3189 = vmatpush1.msra.mxu0 0.0
    %3190 = vmatprep.subr.mxu0 0.0
    %3191 = vmatpush1.msra.mxu0 0.0
    %3192 = vmatprep.subr.mxu0 0.0
    %3193 = vmatpush1.msra.mxu0 0.0
    %3194 = vmatprep.subr.mxu0 0.0
    %3195 = vmatpush1.msra.mxu0 0.0
    %3196 = vmatprep.subr.mxu0 0.0
    %3197 = vmatpush1.msra.mxu0 0.0
    %3198 = vmatprep.subr.mxu0 0.0
    %3199 = vmatpush1.msra.mxu0 0.0
    %3200 = vmatprep.subr.mxu0 0.0
    %3201 = vmatpush1.msra.mxu0 0.0
    %3202 = vmatprep.subr.mxu0 0.0
    %3203 = vmatpush1.msra.mxu0 0.0
    %3204 = vmatprep.subr.mxu0 0.0
    %3205 = vmatpush1.msra.mxu0 0.0
    %3206 = vmatprep.subr.mxu0 0.0
    %3207 = vmatpush1.msra.mxu0 0.0
    %3208 = vmatprep.subr.mxu0 0.0
    %3209 = vmatpush1.msra.mxu0 0.0
    %3210 = vmatprep.subr.mxu0 0.0
    %3211 = vmatpush1.msra.mxu0 0.0
    %3212 = vmatprep.subr.mxu0 0.0
    %3213 = vmatpush1.msra.mxu0 0.0
    %3214 = vmatprep.mubr.f32.mxu0 0.0
    %3215 = vmatmul.mubr.f32.gmra.mrb[0].mxu0 %v3077
    %v3216 = vpop.f32.mrb[0].mxu0
    %v3217 = vadd.f32 0.0, %v3216
    %v3218 = vpop.f32.mrb[0].mxu0
    %3219 = vdwg.mxu0
    %v3221 = vcombine.high %v3146, %v3146
    %v3223 = vunpack.c.l.s4 1966171168
    %v3224 = vunpack.c.0.s8 %v3223
    %v3225 = vlaneseq
    %v3226 = vshrl.u32 %v3225, 7
    %v3227 = vsub.s32 %v3224, %v3226
    %v3228 = vrot.slane %v3146, %v3227
    %v3230 = vunpack.c.l.s4 1966171168
    %v3231 = vunpack.c.0.s8 %v3230
    %v3232 = vlaneseq
    %v3233 = vshrl.u32 %v3232, 7
    %v3234 = vsub.s32 %v3231, %v3233
    %v3235 = vrot.slane %v3221, %v3234
    %v3236 = vcombine.high %v3228, %v3228
    %v3237 = vcombine.high %v3235, %v3235
    %v3239 = vunpack.c.l.s4 1966171168
    %v3240 = vunpack.c.0.s8 %v3239
    %v3241 = vlaneseq
    %v3242 = vshrl.u32 %v3241, 7
    %v3243 = vsub.s32 %v3240, %v3242
    %v3244 = vrot.slane %v3228, %v3243
    %v3246 = vunpack.c.l.s4 1966171168
    %v3247 = vunpack.c.0.s8 %v3246
    %v3248 = vlaneseq
    %v3249 = vshrl.u32 %v3248, 7
    %v3250 = vsub.s32 %v3247, %v3249
    %v3251 = vrot.slane %v3235, %v3250
    %v3253 = vunpack.c.l.s4 1966171168
    %v3254 = vunpack.c.0.s8 %v3253
    %v3255 = vlaneseq
    %v3256 = vshrl.u32 %v3255, 7
    %v3257 = vsub.s32 %v3254, %v3256
    %v3258 = vrot.slane %v3236, %v3257
    %v3260 = vunpack.c.l.s4 1966171168
    %v3261 = vunpack.c.0.s8 %v3260
    %v3262 = vlaneseq
    %v3263 = vshrl.u32 %v3262, 7
    %v3264 = vsub.s32 %v3261, %v3263
    %v3265 = vrot.slane %v3237, %v3264
    %v3266 = vcombine.high %v3244, %v3244
    %v3267 = vcombine.high %v3251, %v3251
    %v3268 = vcombine.high %v3258, %v3258
    %v3269 = vcombine.high %v3265, %v3265
    %v3278 = vadd.f32 %v3006, %v3244
    %v3279 = vadd.f32 %v3008, %v3258
    %v3280 = vadd.f32 %v3010, %v3266
    %v3281 = vadd.f32 %v3012, %v3268
    %v3282 = vadd.f32 %v3014, %v3251
    %v3283 = vadd.f32 %v3016, %v3265
    %v3284 = vadd.f32 %v3018, %v3267
    %v3285 = vadd.f32 %v3020, %v3269
    %v3286 = vadd.f32 %v3278, %v648
    %v3287 = vadd.f32 %v3279, %v662
    %v3288 = vadd.f32 %v3280, %v670
    %v3289 = vadd.f32 %v3281, %v672
    %v3290 = vadd.f32 %v3282, %v655
    %v3291 = vadd.f32 %v3283, %v669
    %v3292 = vadd.f32 %v3284, %v671
    %v3293 = vadd.f32 %v3285, %v673
    %v3294 = vxor.u32 %v3286, 2147483648
    %v3295 = vxor.u32 %v3287, 2147483648
    %v3296 = vxor.u32 %v3288, 2147483648
    %v3297 = vxor.u32 %v3289, 2147483648
    %v3298 = vxor.u32 %v3290, 2147483648
    %v3299 = vxor.u32 %v3291, 2147483648
    %v3300 = vxor.u32 %v3292, 2147483648
    %v3301 = vxor.u32 %v3293, 2147483648
    %v3302 = vmul.f32 %v3294, 1.442695
    %v3303 = vpow.pop %v3302
    %v3304 = vmul.f32 %v3295, 1.442695
    %v3305 = vpow.pop %v3304
    %v3306 = vmul.f32 %v3296, 1.442695
    %v3307 = vpow.pop %v3306
    %v3308 = vmul.f32 %v3297, 1.442695
    %v3309 = vpow.pop %v3308
    %v3310 = vmul.f32 %v3298, 1.442695
    %v3311 = vpow.pop %v3310
    %v3312 = vmul.f32 %v3299, 1.442695
    %v3313 = vpow.pop %v3312
    %v3314 = vmul.f32 %v3300, 1.442695
    %v3315 = vpow.pop %v3314
    %v3316 = vmul.f32 %v3301, 1.442695
    %v3317 = vpow.pop %v3316
    %v3318 = vadd.f32 %v3303, 1.0
    %v3319 = vadd.f32 %v3305, 1.0
    %v3320 = vadd.f32 %v3307, 1.0
    %v3321 = vadd.f32 %v3309, 1.0
    %v3322 = vadd.f32 %v3311, 1.0
    %v3323 = vadd.f32 %v3313, 1.0
    %v3324 = vadd.f32 %v3315, 1.0
    %v3325 = vadd.f32 %v3317, 1.0
    %v3326 = vrcp.pop %v3318
    %v3327 = vmul.f32 1.0, %v3326
    %v3328 = vrcp.pop %v3319
    %v3329 = vmul.f32 1.0, %v3328
    %v3330 = vrcp.pop %v3320
    %v3331 = vmul.f32 1.0, %v3330
    %v3332 = vrcp.pop %v3321
    %v3333 = vmul.f32 1.0, %v3332
    %v3334 = vrcp.pop %v3322
    %v3335 = vmul.f32 1.0, %v3334
    %v3336 = vrcp.pop %v3323
    %v3337 = vmul.f32 1.0, %v3336
    %v3338 = vrcp.pop %v3324
    %v3339 = vmul.f32 1.0, %v3338
    %v3340 = vrcp.pop %v3325
    %v3341 = vmul.f32 1.0, %v3340
    %v3350 = vrot.slane %v3006, 1
    %v3351 = vrot.slane %v3008, 1
    %v3352 = vrot.slane %v3010, 1
    %v3353 = vrot.slane %v3012, 1
    %v3354 = vrot.slane %v3014, 1
    %v3355 = vrot.slane %v3016, 1
    %v3356 = vrot.slane %v3018, 1
    %v3357 = vrot.slane %v3020, 1
    %v3367 = vcombine.high %v3148, %v3148
    %v3369 = vunpack.c.l.s4 1966171168
    %v3370 = vunpack.c.0.s8 %v3369
    %v3371 = vlaneseq
    %v3372 = vshrl.u32 %v3371, 7
    %v3373 = vsub.s32 %v3370, %v3372
    %v3374 = vrot.slane %v3148, %v3373
    %v3376 = vunpack.c.l.s4 1966171168
    %v3377 = vunpack.c.0.s8 %v3376
    %v3378 = vlaneseq
    %v3379 = vshrl.u32 %v3378, 7
    %v3380 = vsub.s32 %v3377, %v3379
    %v3381 = vrot.slane %v3367, %v3380
    %v3382 = vcombine.high %v3374, %v3374
    %v3383 = vcombine.high %v3381, %v3381
    %v3385 = vunpack.c.l.s4 1966171168
    %v3386 = vunpack.c.0.s8 %v3385
    %v3387 = vlaneseq
    %v3388 = vshrl.u32 %v3387, 7
    %v3389 = vsub.s32 %v3386, %v3388
    %v3390 = vrot.slane %v3374, %v3389
    %v3392 = vunpack.c.l.s4 1966171168
    %v3393 = vunpack.c.0.s8 %v3392
    %v3394 = vlaneseq
    %v3395 = vshrl.u32 %v3394, 7
    %v3396 = vsub.s32 %v3393, %v3395
    %v3397 = vrot.slane %v3381, %v3396
    %v3399 = vunpack.c.l.s4 1966171168
    %v3400 = vunpack.c.0.s8 %v3399
    %v3401 = vlaneseq
    %v3402 = vshrl.u32 %v3401, 7
    %v3403 = vsub.s32 %v3400, %v3402
    %v3404 = vrot.slane %v3382, %v3403
    %v3406 = vunpack.c.l.s4 1966171168
    %v3407 = vunpack.c.0.s8 %v3406
    %v3408 = vlaneseq
    %v3409 = vshrl.u32 %v3408, 7
    %v3410 = vsub.s32 %v3407, %v3409
    %v3411 = vrot.slane %v3383, %v3410
    %v3412 = vcombine.high %v3390, %v3390
    %v3413 = vcombine.high %v3397, %v3397
    %v3414 = vcombine.high %v3404, %v3404
    %v3415 = vcombine.high %v3411, %v3411
    %v3424 = vadd.f32 %v3350, %v3390
    %v3425 = vadd.f32 %v3351, %v3404
    %v3426 = vadd.f32 %v3352, %v3412
    %v3427 = vadd.f32 %v3353, %v3414
    %v3428 = vadd.f32 %v3354, %v3397
    %v3429 = vadd.f32 %v3355, %v3411
    %v3430 = vadd.f32 %v3356, %v3413
    %v3431 = vadd.f32 %v3357, %v3415
    %v3432 = vadd.f32 %v3424, %v852
    %v3433 = vadd.f32 %v3425, %v866
    %v3434 = vadd.f32 %v3426, %v874
    %v3435 = vadd.f32 %v3427, %v876
    %v3436 = vadd.f32 %v3428, %v859
    %v3437 = vadd.f32 %v3429, %v873
    %v3438 = vadd.f32 %v3430, %v875
    %v3439 = vadd.f32 %v3431, %v877
    %v3440 = vxor.u32 %v3432, 2147483648
    %v3441 = vxor.u32 %v3433, 2147483648
    %v3442 = vxor.u32 %v3434, 2147483648
    %v3443 = vxor.u32 %v3435, 2147483648
    %v3444 = vxor.u32 %v3436, 2147483648
    %v3445 = vxor.u32 %v3437, 2147483648
    %v3446 = vxor.u32 %v3438, 2147483648
    %v3447 = vxor.u32 %v3439, 2147483648
    %v3448 = vmul.f32 %v3440, 1.442695
    %v3449 = vpow.pop %v3448
    %v3450 = vmul.f32 %v3441, 1.442695
    %v3451 = vpow.pop %v3450
    %v3452 = vmul.f32 %v3442, 1.442695
    %v3453 = vpow.pop %v3452
    %v3454 = vmul.f32 %v3443, 1.442695
    %v3455 = vpow.pop %v3454
    %v3456 = vmul.f32 %v3444, 1.442695
    %v3457 = vpow.pop %v3456
    %v3458 = vmul.f32 %v3445, 1.442695
    %v3459 = vpow.pop %v3458
    %v3460 = vmul.f32 %v3446, 1.442695
    %v3461 = vpow.pop %v3460
    %v3462 = vmul.f32 %v3447, 1.442695
    %v3463 = vpow.pop %v3462
    %v3464 = vadd.f32 %v3449, 1.0
    %v3465 = vadd.f32 %v3451, 1.0
    %v3466 = vadd.f32 %v3453, 1.0
    %v3467 = vadd.f32 %v3455, 1.0
    %v3468 = vadd.f32 %v3457, 1.0
    %v3469 = vadd.f32 %v3459, 1.0
    %v3470 = vadd.f32 %v3461, 1.0
    %v3471 = vadd.f32 %v3463, 1.0
    %v3472 = vrcp.pop %v3464
    %v3473 = vmul.f32 1.0, %v3472
    %v3474 = vrcp.pop %v3465
    %v3475 = vmul.f32 1.0, %v3474
    %v3476 = vrcp.pop %v3466
    %v3477 = vmul.f32 1.0, %v3476
    %v3478 = vrcp.pop %v3467
    %v3479 = vmul.f32 1.0, %v3478
    %v3480 = vrcp.pop %v3468
    %v3481 = vmul.f32 1.0, %v3480
    %v3482 = vrcp.pop %v3469
    %v3483 = vmul.f32 1.0, %v3482
    %v3484 = vrcp.pop %v3470
    %v3485 = vmul.f32 1.0, %v3484
    %v3486 = vrcp.pop %v3471
    %v3487 = vmul.f32 1.0, %v3486
    %v3488 = vrot.slane %v3006, 2
    %v3489 = vrot.slane %v3008, 2
    %v3490 = vrot.slane %v3010, 2
    %v3491 = vrot.slane %v3012, 2
    %v3492 = vrot.slane %v3014, 2
    %v3493 = vrot.slane %v3016, 2
    %v3494 = vrot.slane %v3018, 2
    %v3495 = vrot.slane %v3020, 2
    %v3504 = vadd.f32 %v3488, %v982
    %v3505 = vadd.f32 %v3489, %v996
    %v3506 = vadd.f32 %v3490, %v1004
    %v3507 = vadd.f32 %v3491, %v1006
    %v3508 = vadd.f32 %v3492, %v989
    %v3509 = vadd.f32 %v3493, %v1003
    %v3510 = vadd.f32 %v3494, %v1005
    %v3511 = vadd.f32 %v3495, %v1007
    %v3512 = vadd.f32 %v3217, %v401
    %v3514 = vcombine.high %v3512, %v3512
    %v3516 = vunpack.c.l.s4 1966171168
    %v3517 = vunpack.c.0.s8 %v3516
    %v3518 = vlaneseq
    %v3519 = vshrl.u32 %v3518, 7
    %v3520 = vsub.s32 %v3517, %v3519
    %v3521 = vrot.slane %v3512, %v3520
    %v3523 = vunpack.c.l.s4 1966171168
    %v3524 = vunpack.c.0.s8 %v3523
    %v3525 = vlaneseq
    %v3526 = vshrl.u32 %v3525, 7
    %v3527 = vsub.s32 %v3524, %v3526
    %v3528 = vrot.slane %v3514, %v3527
    %v3529 = vcombine.high %v3521, %v3521
    %v3530 = vcombine.high %v3528, %v3528
    %v3532 = vunpack.c.l.s4 1966171168
    %v3533 = vunpack.c.0.s8 %v3532
    %v3534 = vlaneseq
    %v3535 = vshrl.u32 %v3534, 7
    %v3536 = vsub.s32 %v3533, %v3535
    %v3537 = vrot.slane %v3521, %v3536
    %v3539 = vunpack.c.l.s4 1966171168
    %v3540 = vunpack.c.0.s8 %v3539
    %v3541 = vlaneseq
    %v3542 = vshrl.u32 %v3541, 7
    %v3543 = vsub.s32 %v3540, %v3542
    %v3544 = vrot.slane %v3528, %v3543
    %v3546 = vunpack.c.l.s4 1966171168
    %v3547 = vunpack.c.0.s8 %v3546
    %v3548 = vlaneseq
    %v3549 = vshrl.u32 %v3548, 7
    %v3550 = vsub.s32 %v3547, %v3549
    %v3551 = vrot.slane %v3529, %v3550
    %v3553 = vunpack.c.l.s4 1966171168
    %v3554 = vunpack.c.0.s8 %v3553
    %v3555 = vlaneseq
    %v3556 = vshrl.u32 %v3555, 7
    %v3557 = vsub.s32 %v3554, %v3556
    %v3558 = vrot.slane %v3530, %v3557
    %v3559 = vcombine.high %v3537, %v3537
    %v3560 = vcombine.high %v3544, %v3544
    %v3561 = vcombine.high %v3551, %v3551
    %v3562 = vcombine.high %v3558, %v3558
    %v3571 = vmul.f32 %v3327, %v3537
    %v3572 = vmul.f32 %v3329, %v3551
    %v3573 = vmul.f32 %v3331, %v3559
    %v3574 = vmul.f32 %v3333, %v3561
    %v3575 = vmul.f32 %v3335, %v3544
    %v3576 = vmul.f32 %v3337, %v3558
    %v3577 = vmul.f32 %v3339, %v3560
    %v3578 = vmul.f32 %v3341, %v3562
    %v3579 = vadd.f32 %v3504, %v3571
    %v3580 = vadd.f32 %v3505, %v3572
    %v3581 = vadd.f32 %v3506, %v3573
    %v3582 = vadd.f32 %v3507, %v3574
    %v3583 = vadd.f32 %v3508, %v3575
    %v3584 = vadd.f32 %v3509, %v3576
    %v3585 = vadd.f32 %v3510, %v3577
    %v3586 = vadd.f32 %v3511, %v3578
    %v3587 = vtanh.pop %v3579
    %v3588 = vtanh.pop %v3580
    %v3589 = vtanh.pop %v3581
    %v3590 = vtanh.pop %v3582
    %v3591 = vtanh.pop %v3583
    %v3592 = vtanh.pop %v3584
    %v3593 = vtanh.pop %v3585
    %v3594 = vtanh.pop %v3586
    %v3595 = vsub.f32 1.0, %v3473
    %v3596 = vsub.f32 1.0, %v3475
    %v3597 = vsub.f32 1.0, %v3477
    %v3598 = vsub.f32 1.0, %v3479
    %v3599 = vsub.f32 1.0, %v3481
    %v3600 = vsub.f32 1.0, %v3483
    %v3601 = vsub.f32 1.0, %v3485
    %v3602 = vsub.f32 1.0, %v3487
    %v3603 = vmul.f32 %v3595, %v3587
    %v3604 = vmul.f32 %v3596, %v3588
    %v3605 = vmul.f32 %v3597, %v3589
    %v3606 = vmul.f32 %v3598, %v3590
    %v3607 = vmul.f32 %v3599, %v3591
    %v3608 = vmul.f32 %v3600, %v3592
    %v3609 = vmul.f32 %v3601, %v3593
    %v3610 = vmul.f32 %v3602, %v3594
    %v3611 = vmul.f32 %v3473, %v2997
    %v3612 = vmul.f32 %v3475, %v2998
    %v3613 = vmul.f32 %v3477, %v2999
    %v3614 = vmul.f32 %v3479, %v3000
    %v3615 = vmul.f32 %v3481, %v3001
    %v3616 = vmul.f32 %v3483, %v3002
    %v3617 = vmul.f32 %v3485, %v3003
    %v3618 = vmul.f32 %v3487, %v3004
    %v3619 = vadd.f32 %v3603, %v3611
    %v3620 = vadd.f32 %v3604, %v3612
    %v3621 = vadd.f32 %v3605, %v3613
    %v3622 = vadd.f32 %v3606, %v3614
    %v3623 = vadd.f32 %v3607, %v3615
    %v3624 = vadd.f32 %v3608, %v3616
    %v3625 = vadd.f32 %v3609, %v3617
    %v3626 = vadd.f32 %v3610, %v3618
    %s3627 = scalar_lea.vmem [#allocation2], 5
    %v3628 = vld [vmem:[%s3627] ss:$8 sm:$0x7]
    %s3629 = scalar_lea.vmem [#allocation2], 29
    %v3630 = vld [vmem:[%s3629] ss:$8 sm:$0x7]
    %s3631 = scalar_lea.vmem [#allocation2], 53
    %v3632 = vld [vmem:[%s3631] ss:$8 sm:$0x7]
    %s3633 = scalar_lea.vmem [#allocation2], 77
    %v3634 = vld [vmem:[%s3633] ss:$8 sm:$0x7]
    %s3635 = scalar_lea.vmem [#allocation2], 101
    %v3636 = vld [vmem:[%s3635] ss:$8 sm:$0x7]
    %s3637 = scalar_lea.vmem [#allocation2], 125
    %v3638 = vld [vmem:[%s3637] ss:$8 sm:$0x7]
    %s3639 = scalar_lea.vmem [#allocation2], 149
    %v3640 = vld [vmem:[%s3639] ss:$8 sm:$0x7]
    %s3641 = scalar_lea.vmem [#allocation2], 173
    %v3642 = vld [vmem:[%s3641] ss:$8 sm:$0x7]
    %v3651 = vcombine.low %v3619, %v3620
    %v3652 = vcombine.low %v3621, %v3622
    %v3653 = vcombine.low %v3623, %v3624
    %v3654 = vcombine.low %v3625, %v3626
    %v3656 = vunpack.c.l.s4 1966171168
    %v3657 = vunpack.c.0.s8 %v3656
    %v3658 = vlaneseq
    %v3659 = vshrl.u32 %v3658, 7
    %v3660 = vsub.s32 %v3657, %v3659
    %v3661 = vrot.slane %v3651, %v3660
    %v3663 = vunpack.c.l.s4 1966171168
    %v3664 = vunpack.c.0.s8 %v3663
    %v3665 = vlaneseq
    %v3666 = vshrl.u32 %v3665, 7
    %v3667 = vsub.s32 %v3664, %v3666
    %v3668 = vrot.slane %v3652, %v3667
    %v3670 = vunpack.c.l.s4 1966171168
    %v3671 = vunpack.c.0.s8 %v3670
    %v3672 = vlaneseq
    %v3673 = vshrl.u32 %v3672, 7
    %v3674 = vsub.s32 %v3671, %v3673
    %v3675 = vrot.slane %v3653, %v3674
    %v3677 = vunpack.c.l.s4 1966171168
    %v3678 = vunpack.c.0.s8 %v3677
    %v3679 = vlaneseq
    %v3680 = vshrl.u32 %v3679, 7
    %v3681 = vsub.s32 %v3678, %v3680
    %v3682 = vrot.slane %v3654, %v3681
    %v3683 = vcombine.low %v3661, %v3668
    %v3684 = vcombine.low %v3675, %v3682
    %v3686 = vunpack.c.l.s4 1966171168
    %v3687 = vunpack.c.0.s8 %v3686
    %v3688 = vlaneseq
    %v3689 = vshrl.u32 %v3688, 7
    %v3690 = vsub.s32 %v3687, %v3689
    %v3691 = vrot.slane %v3683, %v3690
    %v3693 = vunpack.c.l.s4 1966171168
    %v3694 = vunpack.c.0.s8 %v3693
    %v3695 = vlaneseq
    %v3696 = vshrl.u32 %v3695, 7
    %v3697 = vsub.s32 %v3694, %v3696
    %v3698 = vrot.slane %v3684, %v3697
    %v3699 = vcombine.low %v3691, %v3698
    %3701 = vmatprep.subr.mxu0 %v47
    %3702 = vmatpush1.msra.mxu0 %v46
    %3703 = vmatprep.subr.mxu0 %v50
    %3704 = vmatpush1.msra.mxu0 %v49
    %3705 = vmatprep.subr.mxu0 %v53
    %3706 = vmatpush1.msra.mxu0 %v52
    %3707 = vmatprep.subr.mxu0 %v56
    %3708 = vmatpush1.msra.mxu0 %v55
    %3709 = vmatprep.subr.mxu0 %v59
    %3710 = vmatpush1.msra.mxu0 %v58
    %3711 = vmatprep.subr.mxu0 %v62
    %3712 = vmatpush1.msra.mxu0 %v61
    %3713 = vmatprep.subr.mxu0 %v65
    %3714 = vmatpush1.msra.mxu0 %v64
    %3715 = vmatprep.subr.mxu0 %v68
    %3716 = vmatpush1.msra.mxu0 %v67
    %3717 = vmatprep.subr.mxu0 %v71
    %3718 = vmatpush1.msra.mxu0 %v70
    %3719 = vmatprep.subr.mxu0 %v74
    %3720 = vmatpush1.msra.mxu0 %v73
    %3721 = vmatprep.subr.mxu0 %v77
    %3722 = vmatpush1.msra.mxu0 %v76
    %3723 = vmatprep.subr.mxu0 %v80
    %3724 = vmatpush1.msra.mxu0 %v79
    %3725 = vmatprep.subr.mxu0 %v83
    %3726 = vmatpush1.msra.mxu0 %v82
    %3727 = vmatprep.subr.mxu0 %v86
    %3728 = vmatpush1.msra.mxu0 %v85
    %3729 = vmatprep.subr.mxu0 %v89
    %3730 = vmatpush1.msra.mxu0 %v88
    %3731 = vmatprep.subr.mxu0 %v92
    %3732 = vmatpush1.msra.mxu0 %v91
    %3733 = vmatprep.subr.mxu0 0.0
    %3734 = vmatpush1.msra.mxu0 0.0
    %3735 = vmatprep.subr.mxu0 0.0
    %3736 = vmatpush1.msra.mxu0 0.0
    %3737 = vmatprep.subr.mxu0 0.0
    %3738 = vmatpush1.msra.mxu0 0.0
    %3739 = vmatprep.subr.mxu0 0.0
    %3740 = vmatpush1.msra.mxu0 0.0
    %3741 = vmatprep.subr.mxu0 0.0
    %3742 = vmatpush1.msra.mxu0 0.0
    %3743 = vmatprep.subr.mxu0 0.0
    %3744 = vmatpush1.msra.mxu0 0.0
    %3745 = vmatprep.subr.mxu0 0.0
    %3746 = vmatpush1.msra.mxu0 0.0
    %3747 = vmatprep.subr.mxu0 0.0
    %3748 = vmatpush1.msra.mxu0 0.0
    %3749 = vmatprep.subr.mxu0 0.0
    %3750 = vmatpush1.msra.mxu0 0.0
    %3751 = vmatprep.subr.mxu0 0.0
    %3752 = vmatpush1.msra.mxu0 0.0
    %3753 = vmatprep.subr.mxu0 0.0
    %3754 = vmatpush1.msra.mxu0 0.0
    %3755 = vmatprep.subr.mxu0 0.0
    %3756 = vmatpush1.msra.mxu0 0.0
    %3757 = vmatprep.subr.mxu0 0.0
    %3758 = vmatpush1.msra.mxu0 0.0
    %3759 = vmatprep.subr.mxu0 0.0
    %3760 = vmatpush1.msra.mxu0 0.0
    %3761 = vmatprep.subr.mxu0 0.0
    %3762 = vmatpush1.msra.mxu0 0.0
    %3763 = vmatprep.subr.mxu0 0.0
    %3764 = vmatpush1.msra.mxu0 0.0
    %3765 = vmatprep.mubr.f32.mxu0 0.0
    %3766 = vmatmul.mubr.f32.gmra.mrb[0].mxu0 %v3699
    %v3767 = vpop.f32.mrb[0].mxu0
    %v3768 = vadd.f32 0.0, %v3767
    %v3769 = vpop.f32.mrb[0].mxu0
    %v3770 = vadd.f32 0.0, %v3769
    %3771 = vdwg.mxu0
    %3772 = vmatprep.subr.mxu0 0.0
    %3773 = vmatpush1.msra.mxu0 %v48
    %3774 = vmatprep.subr.mxu0 0.0
    %3775 = vmatpush1.msra.mxu0 %v51
    %3776 = vmatprep.subr.mxu0 0.0
    %3777 = vmatpush1.msra.mxu0 %v54
    %3778 = vmatprep.subr.mxu0 0.0
    %3779 = vmatpush1.msra.mxu0 %v57
    %3780 = vmatprep.subr.mxu0 0.0
    %3781 = vmatpush1.msra.mxu0 %v60
    %3782 = vmatprep.subr.mxu0 0.0
    %3783 = vmatpush1.msra.mxu0 %v63
    %3784 = vmatprep.subr.mxu0 0.0
    %3785 = vmatpush1.msra.mxu0 %v66
    %3786 = vmatprep.subr.mxu0 0.0
    %3787 = vmatpush1.msra.mxu0 %v69
    %3788 = vmatprep.subr.mxu0 0.0
    %3789 = vmatpush1.msra.mxu0 %v72
    %3790 = vmatprep.subr.mxu0 0.0
    %3791 = vmatpush1.msra.mxu0 %v75
    %3792 = vmatprep.subr.mxu0 0.0
    %3793 = vmatpush1.msra.mxu0 %v78
    %3794 = vmatprep.subr.mxu0 0.0
    %3795 = vmatpush1.msra.mxu0 %v81
    %3796 = vmatprep.subr.mxu0 0.0
    %3797 = vmatpush1.msra.mxu0 %v84
    %3798 = vmatprep.subr.mxu0 0.0
    %3799 = vmatpush1.msra.mxu0 %v87
    %3800 = vmatprep.subr.mxu0 0.0
    %3801 = vmatpush1.msra.mxu0 %v90
    %3802 = vmatprep.subr.mxu0 0.0
    %3803 = vmatpush1.msra.mxu0 %v93
    %3804 = vmatprep.subr.mxu0 0.0
    %3805 = vmatpush1.msra.mxu0 0.0
    %3806 = vmatprep.subr.mxu0 0.0
    %3807 = vmatpush1.msra.mxu0 0.0
    %3808 = vmatprep.subr.mxu0 0.0
    %3809 = vmatpush1.msra.mxu0 0.0
    %3810 = vmatprep.subr.mxu0 0.0
    %3811 = vmatpush1.msra.mxu0 0.0
    %3812 = vmatprep.subr.mxu0 0.0
    %3813 = vmatpush1.msra.mxu0 0.0
    %3814 = vmatprep.subr.mxu0 0.0
    %3815 = vmatpush1.msra.mxu0 0.0
    %3816 = vmatprep.subr.mxu0 0.0
    %3817 = vmatpush1.msra.mxu0 0.0
    %3818 = vmatprep.subr.mxu0 0.0
    %3819 = vmatpush1.msra.mxu0 0.0
    %3820 = vmatprep.subr.mxu0 0.0
    %3821 = vmatpush1.msra.mxu0 0.0
    %3822 = vmatprep.subr.mxu0 0.0
    %3823 = vmatpush1.msra.mxu0 0.0
    %3824 = vmatprep.subr.mxu0 0.0
    %3825 = vmatpush1.msra.mxu0 0.0
    %3826 = vmatprep.subr.mxu0 0.0
    %3827 = vmatpush1.msra.mxu0 0.0
    %3828 = vmatprep.subr.mxu0 0.0
    %3829 = vmatpush1.msra.mxu0 0.0
    %3830 = vmatprep.subr.mxu0 0.0
    %3831 = vmatpush1.msra.mxu0 0.0
    %3832 = vmatprep.subr.mxu0 0.0
    %3833 = vmatpush1.msra.mxu0 0.0
    %3834 = vmatprep.subr.mxu0 0.0
    %3835 = vmatpush1.msra.mxu0 0.0
    %3836 = vmatprep.mubr.f32.mxu0 0.0
    %3837 = vmatmul.mubr.f32.gmra.mrb[0].mxu0 %v3699
    %v3838 = vpop.f32.mrb[0].mxu0
    %v3839 = vadd.f32 0.0, %v3838
    %v3840 = vpop.f32.mrb[0].mxu0
    %3841 = vdwg.mxu0
    %v3843 = vcombine.high %v3768, %v3768
    %v3845 = vunpack.c.l.s4 1966171168
    %v3846 = vunpack.c.0.s8 %v3845
    %v3847 = vlaneseq
    %v3848 = vshrl.u32 %v3847, 7
    %v3849 = vsub.s32 %v3846, %v3848
    %v3850 = vrot.slane %v3768, %v3849
    %v3852 = vunpack.c.l.s4 1966171168
    %v3853 = vunpack.c.0.s8 %v3852
    %v3854 = vlaneseq
    %v3855 = vshrl.u32 %v3854, 7
    %v3856 = vsub.s32 %v3853, %v3855
    %v3857 = vrot.slane %v3843, %v3856
    %v3858 = vcombine.high %v3850, %v3850
    %v3859 = vcombine.high %v3857, %v3857
    %v3861 = vunpack.c.l.s4 1966171168
    %v3862 = vunpack.c.0.s8 %v3861
    %v3863 = vlaneseq
    %v3864 = vshrl.u32 %v3863, 7
    %v3865 = vsub.s32 %v3862, %v3864
    %v3866 = vrot.slane %v3850, %v3865
    %v3868 = vunpack.c.l.s4 1966171168
    %v3869 = vunpack.c.0.s8 %v3868
    %v3870 = vlaneseq
    %v3871 = vshrl.u32 %v3870, 7
    %v3872 = vsub.s32 %v3869, %v3871
    %v3873 = vrot.slane %v3857, %v3872
    %v3875 = vunpack.c.l.s4 1966171168
    %v3876 = vunpack.c.0.s8 %v3875
    %v3877 = vlaneseq
    %v3878 = vshrl.u32 %v3877, 7
    %v3879 = vsub.s32 %v3876, %v3878
    %v3880 = vrot.slane %v3858, %v3879
    %v3882 = vunpack.c.l.s4 1966171168
    %v3883 = vunpack.c.0.s8 %v3882
    %v3884 = vlaneseq
    %v3885 = vshrl.u32 %v3884, 7
    %v3886 = vsub.s32 %v3883, %v3885
    %v3887 = vrot.slane %v3859, %v3886
    %v3888 = vcombine.high %v3866, %v3866
    %v3889 = vcombine.high %v3873, %v3873
    %v3890 = vcombine.high %v3880, %v3880
    %v3891 = vcombine.high %v3887, %v3887
    %v3900 = vadd.f32 %v3628, %v3866
    %v3901 = vadd.f32 %v3630, %v3880
    %v3902 = vadd.f32 %v3632, %v3888
    %v3903 = vadd.f32 %v3634, %v3890
    %v3904 = vadd.f32 %v3636, %v3873
    %v3905 = vadd.f32 %v3638, %v3887
    %v3906 = vadd.f32 %v3640, %v3889
    %v3907 = vadd.f32 %v3642, %v3891
    %v3908 = vadd.f32 %v3900, %v648
    %v3909 = vadd.f32 %v3901, %v662
    %v3910 = vadd.f32 %v3902, %v670
    %v3911 = vadd.f32 %v3903, %v672
    %v3912 = vadd.f32 %v3904, %v655
    %v3913 = vadd.f32 %v3905, %v669
    %v3914 = vadd.f32 %v3906, %v671
    %v3915 = vadd.f32 %v3907, %v673
    %v3916 = vxor.u32 %v3908, 2147483648
    %v3917 = vxor.u32 %v3909, 2147483648
    %v3918 = vxor.u32 %v3910, 2147483648
    %v3919 = vxor.u32 %v3911, 2147483648
    %v3920 = vxor.u32 %v3912, 2147483648
    %v3921 = vxor.u32 %v3913, 2147483648
    %v3922 = vxor.u32 %v3914, 2147483648
    %v3923 = vxor.u32 %v3915, 2147483648
    %v3924 = vmul.f32 %v3916, 1.442695
    %v3925 = vpow.pop %v3924
    %v3926 = vmul.f32 %v3917, 1.442695
    %v3927 = vpow.pop %v3926
    %v3928 = vmul.f32 %v3918, 1.442695
    %v3929 = vpow.pop %v3928
    %v3930 = vmul.f32 %v3919, 1.442695
    %v3931 = vpow.pop %v3930
    %v3932 = vmul.f32 %v3920, 1.442695
    %v3933 = vpow.pop %v3932
    %v3934 = vmul.f32 %v3921, 1.442695
    %v3935 = vpow.pop %v3934
    %v3936 = vmul.f32 %v3922, 1.442695
    %v3937 = vpow.pop %v3936
    %v3938 = vmul.f32 %v3923, 1.442695
    %v3939 = vpow.pop %v3938
    %v3940 = vadd.f32 %v3925, 1.0
    %v3941 = vadd.f32 %v3927, 1.0
    %v3942 = vadd.f32 %v3929, 1.0
    %v3943 = vadd.f32 %v3931, 1.0
    %v3944 = vadd.f32 %v3933, 1.0
    %v3945 = vadd.f32 %v3935, 1.0
    %v3946 = vadd.f32 %v3937, 1.0
    %v3947 = vadd.f32 %v3939, 1.0
    %v3948 = vrcp.pop %v3940
    %v3949 = vmul.f32 1.0, %v3948
    %v3950 = vrcp.pop %v3941
    %v3951 = vmul.f32 1.0, %v3950
    %v3952 = vrcp.pop %v3942
    %v3953 = vmul.f32 1.0, %v3952
    %v3954 = vrcp.pop %v3943
    %v3955 = vmul.f32 1.0, %v3954
    %v3956 = vrcp.pop %v3944
    %v3957 = vmul.f32 1.0, %v3956
    %v3958 = vrcp.pop %v3945
    %v3959 = vmul.f32 1.0, %v3958
    %v3960 = vrcp.pop %v3946
    %v3961 = vmul.f32 1.0, %v3960
    %v3962 = vrcp.pop %v3947
    %v3963 = vmul.f32 1.0, %v3962
    %v3972 = vrot.slane %v3628, 1
    %v3973 = vrot.slane %v3630, 1
    %v3974 = vrot.slane %v3632, 1
    %v3975 = vrot.slane %v3634, 1
    %v3976 = vrot.slane %v3636, 1
    %v3977 = vrot.slane %v3638, 1
    %v3978 = vrot.slane %v3640, 1
    %v3979 = vrot.slane %v3642, 1
    %v3989 = vcombine.high %v3770, %v3770
    %v3991 = vunpack.c.l.s4 1966171168
    %v3992 = vunpack.c.0.s8 %v3991
    %v3993 = vlaneseq
    %v3994 = vshrl.u32 %v3993, 7
    %v3995 = vsub.s32 %v3992, %v3994
    %v3996 = vrot.slane %v3770, %v3995
    %v3998 = vunpack.c.l.s4 1966171168
    %v3999 = vunpack.c.0.s8 %v3998
    %v4000 = vlaneseq
    %v4001 = vshrl.u32 %v4000, 7
    %v4002 = vsub.s32 %v3999, %v4001
    %v4003 = vrot.slane %v3989, %v4002
    %v4004 = vcombine.high %v3996, %v3996
    %v4005 = vcombine.high %v4003, %v4003
    %v4007 = vunpack.c.l.s4 1966171168
    %v4008 = vunpack.c.0.s8 %v4007
    %v4009 = vlaneseq
    %v4010 = vshrl.u32 %v4009, 7
    %v4011 = vsub.s32 %v4008, %v4010
    %v4012 = vrot.slane %v3996, %v4011
    %v4014 = vunpack.c.l.s4 1966171168
    %v4015 = vunpack.c.0.s8 %v4014
    %v4016 = vlaneseq
    %v4017 = vshrl.u32 %v4016, 7
    %v4018 = vsub.s32 %v4015, %v4017
    %v4019 = vrot.slane %v4003, %v4018
    %v4021 = vunpack.c.l.s4 1966171168
    %v4022 = vunpack.c.0.s8 %v4021
    %v4023 = vlaneseq
    %v4024 = vshrl.u32 %v4023, 7
    %v4025 = vsub.s32 %v4022, %v4024
    %v4026 = vrot.slane %v4004, %v4025
    %v4028 = vunpack.c.l.s4 1966171168
    %v4029 = vunpack.c.0.s8 %v4028
    %v4030 = vlaneseq
    %v4031 = vshrl.u32 %v4030, 7
    %v4032 = vsub.s32 %v4029, %v4031
    %v4033 = vrot.slane %v4005, %v4032
    %v4034 = vcombine.high %v4012, %v4012
    %v4035 = vcombine.high %v4019, %v4019
    %v4036 = vcombine.high %v4026, %v4026
    %v4037 = vcombine.high %v4033, %v4033
    %v4046 = vadd.f32 %v3972, %v4012
    %v4047 = vadd.f32 %v3973, %v4026
    %v4048 = vadd.f32 %v3974, %v4034
    %v4049 = vadd.f32 %v3975, %v4036
    %v4050 = vadd.f32 %v3976, %v4019
    %v4051 = vadd.f32 %v3977, %v4033
    %v4052 = vadd.f32 %v3978, %v4035
    %v4053 = vadd.f32 %v3979, %v4037
    %v4054 = vadd.f32 %v4046, %v852
    %v4055 = vadd.f32 %v4047, %v866
    %v4056 = vadd.f32 %v4048, %v874
    %v4057 = vadd.f32 %v4049, %v876
    %v4058 = vadd.f32 %v4050, %v859
    %v4059 = vadd.f32 %v4051, %v873
    %v4060 = vadd.f32 %v4052, %v875
    %v4061 = vadd.f32 %v4053, %v877
    %v4062 = vxor.u32 %v4054, 2147483648
    %v4063 = vxor.u32 %v4055, 2147483648
    %v4064 = vxor.u32 %v4056, 2147483648
    %v4065 = vxor.u32 %v4057, 2147483648
    %v4066 = vxor.u32 %v4058, 2147483648
    %v4067 = vxor.u32 %v4059, 2147483648
    %v4068 = vxor.u32 %v4060, 2147483648
    %v4069 = vxor.u32 %v4061, 2147483648
    %v4070 = vmul.f32 %v4062, 1.442695
    %v4071 = vpow.pop %v4070
    %v4072 = vmul.f32 %v4063, 1.442695
    %v4073 = vpow.pop %v4072
    %v4074 = vmul.f32 %v4064, 1.442695
    %v4075 = vpow.pop %v4074
    %v4076 = vmul.f32 %v4065, 1.442695
    %v4077 = vpow.pop %v4076
    %v4078 = vmul.f32 %v4066, 1.442695
    %v4079 = vpow.pop %v4078
    %v4080 = vmul.f32 %v4067, 1.442695
    %v4081 = vpow.pop %v4080
    %v4082 = vmul.f32 %v4068, 1.442695
    %v4083 = vpow.pop %v4082
    %v4084 = vmul.f32 %v4069, 1.442695
    %v4085 = vpow.pop %v4084
    %v4086 = vadd.f32 %v4071, 1.0
    %v4087 = vadd.f32 %v4073, 1.0
    %v4088 = vadd.f32 %v4075, 1.0
    %v4089 = vadd.f32 %v4077, 1.0
    %v4090 = vadd.f32 %v4079, 1.0
    %v4091 = vadd.f32 %v4081, 1.0
    %v4092 = vadd.f32 %v4083, 1.0
    %v4093 = vadd.f32 %v4085, 1.0
    %v4094 = vrcp.pop %v4086
    %v4095 = vmul.f32 1.0, %v4094
    %v4096 = vrcp.pop %v4087
    %v4097 = vmul.f32 1.0, %v4096
    %v4098 = vrcp.pop %v4088
    %v4099 = vmul.f32 1.0, %v4098
    %v4100 = vrcp.pop %v4089
    %v4101 = vmul.f32 1.0, %v4100
    %v4102 = vrcp.pop %v4090
    %v4103 = vmul.f32 1.0, %v4102
    %v4104 = vrcp.pop %v4091
    %v4105 = vmul.f32 1.0, %v4104
    %v4106 = vrcp.pop %v4092
    %v4107 = vmul.f32 1.0, %v4106
    %v4108 = vrcp.pop %v4093
    %v4109 = vmul.f32 1.0, %v4108
    %v4110 = vrot.slane %v3628, 2
    %v4111 = vrot.slane %v3630, 2
    %v4112 = vrot.slane %v3632, 2
    %v4113 = vrot.slane %v3634, 2
    %v4114 = vrot.slane %v3636, 2
    %v4115 = vrot.slane %v3638, 2
    %v4116 = vrot.slane %v3640, 2
    %v4117 = vrot.slane %v3642, 2
    %v4126 = vadd.f32 %v4110, %v982
    %v4127 = vadd.f32 %v4111, %v996
    %v4128 = vadd.f32 %v4112, %v1004
    %v4129 = vadd.f32 %v4113, %v1006
    %v4130 = vadd.f32 %v4114, %v989
    %v4131 = vadd.f32 %v4115, %v1003
    %v4132 = vadd.f32 %v4116, %v1005
    %v4133 = vadd.f32 %v4117, %v1007
    %v4134 = vadd.f32 %v3839, %v401
    %v4136 = vcombine.high %v4134, %v4134
    %v4138 = vunpack.c.l.s4 1966171168
    %v4139 = vunpack.c.0.s8 %v4138
    %v4140 = vlaneseq
    %v4141 = vshrl.u32 %v4140, 7
    %v4142 = vsub.s32 %v4139, %v4141
    %v4143 = vrot.slane %v4134, %v4142
    %v4145 = vunpack.c.l.s4 1966171168
    %v4146 = vunpack.c.0.s8 %v4145
    %v4147 = vlaneseq
    %v4148 = vshrl.u32 %v4147, 7
    %v4149 = vsub.s32 %v4146, %v4148
    %v4150 = vrot.slane %v4136, %v4149
    %v4151 = vcombine.high %v4143, %v4143
    %v4152 = vcombine.high %v4150, %v4150
    %v4154 = vunpack.c.l.s4 1966171168
    %v4155 = vunpack.c.0.s8 %v4154
    %v4156 = vlaneseq
    %v4157 = vshrl.u32 %v4156, 7
    %v4158 = vsub.s32 %v4155, %v4157
    %v4159 = vrot.slane %v4143, %v4158
    %v4161 = vunpack.c.l.s4 1966171168
    %v4162 = vunpack.c.0.s8 %v4161
    %v4163 = vlaneseq
    %v4164 = vshrl.u32 %v4163, 7
    %v4165 = vsub.s32 %v4162, %v4164
    %v4166 = vrot.slane %v4150, %v4165
    %v4168 = vunpack.c.l.s4 1966171168
    %v4169 = vunpack.c.0.s8 %v4168
    %v4170 = vlaneseq
    %v4171 = vshrl.u32 %v4170, 7
    %v4172 = vsub.s32 %v4169, %v4171
    %v4173 = vrot.slane %v4151, %v4172
    %v4175 = vunpack.c.l.s4 1966171168
    %v4176 = vunpack.c.0.s8 %v4175
    %v4177 = vlaneseq
    %v4178 = vshrl.u32 %v4177, 7
    %v4179 = vsub.s32 %v4176, %v4178
    %v4180 = vrot.slane %v4152, %v4179
    %v4181 = vcombine.high %v4159, %v4159
    %v4182 = vcombine.high %v4166, %v4166
    %v4183 = vcombine.high %v4173, %v4173
    %v4184 = vcombine.high %v4180, %v4180
    %v4193 = vmul.f32 %v3949, %v4159
    %v4194 = vmul.f32 %v3951, %v4173
    %v4195 = vmul.f32 %v3953, %v4181
    %v4196 = vmul.f32 %v3955, %v4183
    %v4197 = vmul.f32 %v3957, %v4166
    %v4198 = vmul.f32 %v3959, %v4180
    %v4199 = vmul.f32 %v3961, %v4182
    %v4200 = vmul.f32 %v3963, %v4184
    %v4201 = vadd.f32 %v4126, %v4193
    %v4202 = vadd.f32 %v4127, %v4194
    %v4203 = vadd.f32 %v4128, %v4195
    %v4204 = vadd.f32 %v4129, %v4196
    %v4205 = vadd.f32 %v4130, %v4197
    %v4206 = vadd.f32 %v4131, %v4198
    %v4207 = vadd.f32 %v4132, %v4199
    %v4208 = vadd.f32 %v4133, %v4200
    %v4209 = vtanh.pop %v4201
    %v4210 = vtanh.pop %v4202
    %v4211 = vtanh.pop %v4203
    %v4212 = vtanh.pop %v4204
    %v4213 = vtanh.pop %v4205
    %v4214 = vtanh.pop %v4206
    %v4215 = vtanh.pop %v4207
    %v4216 = vtanh.pop %v4208
    %v4217 = vsub.f32 1.0, %v4095
    %v4218 = vsub.f32 1.0, %v4097
    %v4219 = vsub.f32 1.0, %v4099
    %v4220 = vsub.f32 1.0, %v4101
    %v4221 = vsub.f32 1.0, %v4103
    %v4222 = vsub.f32 1.0, %v4105
    %v4223 = vsub.f32 1.0, %v4107
    %v4224 = vsub.f32 1.0, %v4109
    %v4225 = vmul.f32 %v4217, %v4209
    %v4226 = vmul.f32 %v4218, %v4210
    %v4227 = vmul.f32 %v4219, %v4211
    %v4228 = vmul.f32 %v4220, %v4212
    %v4229 = vmul.f32 %v4221, %v4213
    %v4230 = vmul.f32 %v4222, %v4214
    %v4231 = vmul.f32 %v4223, %v4215
    %v4232 = vmul.f32 %v4224, %v4216
    %v4233 = vmul.f32 %v4095, %v3619
    %v4234 = vmul.f32 %v4097, %v3620
    %v4235 = vmul.f32 %v4099, %v3621
    %v4236 = vmul.f32 %v4101, %v3622
    %v4237 = vmul.f32 %v4103, %v3623
    %v4238 = vmul.f32 %v4105, %v3624
    %v4239 = vmul.f32 %v4107, %v3625
    %v4240 = vmul.f32 %v4109, %v3626
    %v4241 = vadd.f32 %v4225, %v4233
    %v4242 = vadd.f32 %v4226, %v4234
    %v4243 = vadd.f32 %v4227, %v4235
    %v4244 = vadd.f32 %v4228, %v4236
    %v4245 = vadd.f32 %v4229, %v4237
    %v4246 = vadd.f32 %v4230, %v4238
    %v4247 = vadd.f32 %v4231, %v4239
    %v4248 = vadd.f32 %v4232, %v4240
    %s4249 = scalar_lea.vmem [#allocation2], 6
    %v4250 = vld [vmem:[%s4249] ss:$8 sm:$0x7]
    %s4251 = scalar_lea.vmem [#allocation2], 30
    %v4252 = vld [vmem:[%s4251] ss:$8 sm:$0x7]
    %s4253 = scalar_lea.vmem [#allocation2], 54
    %v4254 = vld [vmem:[%s4253] ss:$8 sm:$0x7]
    %s4255 = scalar_lea.vmem [#allocation2], 78
    %v4256 = vld [vmem:[%s4255] ss:$8 sm:$0x7]
    %s4257 = scalar_lea.vmem [#allocation2], 102
    %v4258 = vld [vmem:[%s4257] ss:$8 sm:$0x7]
    %s4259 = scalar_lea.vmem [#allocation2], 126
    %v4260 = vld [vmem:[%s4259] ss:$8 sm:$0x7]
    %s4261 = scalar_lea.vmem [#allocation2], 150
    %v4262 = vld [vmem:[%s4261] ss:$8 sm:$0x7]
    %s4263 = scalar_lea.vmem [#allocation2], 174
    %v4264 = vld [vmem:[%s4263] ss:$8 sm:$0x7]
    %v4273 = vcombine.low %v4241, %v4242
    %v4274 = vcombine.low %v4243, %v4244
    %v4275 = vcombine.low %v4245, %v4246
    %v4276 = vcombine.low %v4247, %v4248
    %v4278 = vunpack.c.l.s4 1966171168
    %v4279 = vunpack.c.0.s8 %v4278
    %v4280 = vlaneseq
    %v4281 = vshrl.u32 %v4280, 7
    %v4282 = vsub.s32 %v4279, %v4281
    %v4283 = vrot.slane %v4273, %v4282
    %v4285 = vunpack.c.l.s4 1966171168
    %v4286 = vunpack.c.0.s8 %v4285
    %v4287 = vlaneseq
    %v4288 = vshrl.u32 %v4287, 7
    %v4289 = vsub.s32 %v4286, %v4288
    %v4290 = vrot.slane %v4274, %v4289
    %v4292 = vunpack.c.l.s4 1966171168
    %v4293 = vunpack.c.0.s8 %v4292
    %v4294 = vlaneseq
    %v4295 = vshrl.u32 %v4294, 7
    %v4296 = vsub.s32 %v4293, %v4295
    %v4297 = vrot.slane %v4275, %v4296
    %v4299 = vunpack.c.l.s4 1966171168
    %v4300 = vunpack.c.0.s8 %v4299
    %v4301 = vlaneseq
    %v4302 = vshrl.u32 %v4301, 7
    %v4303 = vsub.s32 %v4300, %v4302
    %v4304 = vrot.slane %v4276, %v4303
    %v4305 = vcombine.low %v4283, %v4290
    %v4306 = vcombine.low %v4297, %v4304
    %v4308 = vunpack.c.l.s4 1966171168
    %v4309 = vunpack.c.0.s8 %v4308
    %v4310 = vlaneseq
    %v4311 = vshrl.u32 %v4310, 7
    %v4312 = vsub.s32 %v4309, %v4311
    %v4313 = vrot.slane %v4305, %v4312
    %v4315 = vunpack.c.l.s4 1966171168
    %v4316 = vunpack.c.0.s8 %v4315
    %v4317 = vlaneseq
    %v4318 = vshrl.u32 %v4317, 7
    %v4319 = vsub.s32 %v4316, %v4318
    %v4320 = vrot.slane %v4306, %v4319
    %v4321 = vcombine.low %v4313, %v4320
    %4323 = vmatprep.subr.mxu0 %v47
    %4324 = vmatpush1.msra.mxu0 %v46
    %4325 = vmatprep.subr.mxu0 %v50
    %4326 = vmatpush1.msra.mxu0 %v49
    %4327 = vmatprep.subr.mxu0 %v53
    %4328 = vmatpush1.msra.mxu0 %v52
    %4329 = vmatprep.subr.mxu0 %v56
    %4330 = vmatpush1.msra.mxu0 %v55
    %4331 = vmatprep.subr.mxu0 %v59
    %4332 = vmatpush1.msra.mxu0 %v58
    %4333 = vmatprep.subr.mxu0 %v62
    %4334 = vmatpush1.msra.mxu0 %v61
    %4335 = vmatprep.subr.mxu0 %v65
    %4336 = vmatpush1.msra.mxu0 %v64
    %4337 = vmatprep.subr.mxu0 %v68
    %4338 = vmatpush1.msra.mxu0 %v67
    %4339 = vmatprep.subr.mxu0 %v71
    %4340 = vmatpush1.msra.mxu0 %v70
    %4341 = vmatprep.subr.mxu0 %v74
    %4342 = vmatpush1.msra.mxu0 %v73
    %4343 = vmatprep.subr.mxu0 %v77
    %4344 = vmatpush1.msra.mxu0 %v76
    %4345 = vmatprep.subr.mxu0 %v80
    %4346 = vmatpush1.msra.mxu0 %v79
    %4347 = vmatprep.subr.mxu0 %v83
    %4348 = vmatpush1.msra.mxu0 %v82
    %4349 = vmatprep.subr.mxu0 %v86
    %4350 = vmatpush1.msra.mxu0 %v85
    %4351 = vmatprep.subr.mxu0 %v89
    %4352 = vmatpush1.msra.mxu0 %v88
    %4353 = vmatprep.subr.mxu0 %v92
    %4354 = vmatpush1.msra.mxu0 %v91
    %4355 = vmatprep.subr.mxu0 0.0
    %4356 = vmatpush1.msra.mxu0 0.0
    %4357 = vmatprep.subr.mxu0 0.0
    %4358 = vmatpush1.msra.mxu0 0.0
    %4359 = vmatprep.subr.mxu0 0.0
    %4360 = vmatpush1.msra.mxu0 0.0
    %4361 = vmatprep.subr.mxu0 0.0
    %4362 = vmatpush1.msra.mxu0 0.0
    %4363 = vmatprep.subr.mxu0 0.0
    %4364 = vmatpush1.msra.mxu0 0.0
    %4365 = vmatprep.subr.mxu0 0.0
    %4366 = vmatpush1.msra.mxu0 0.0
    %4367 = vmatprep.subr.mxu0 0.0
    %4368 = vmatpush1.msra.mxu0 0.0
    %4369 = vmatprep.subr.mxu0 0.0
    %4370 = vmatpush1.msra.mxu0 0.0
    %4371 = vmatprep.subr.mxu0 0.0
    %4372 = vmatpush1.msra.mxu0 0.0
    %4373 = vmatprep.subr.mxu0 0.0
    %4374 = vmatpush1.msra.mxu0 0.0
    %4375 = vmatprep.subr.mxu0 0.0
    %4376 = vmatpush1.msra.mxu0 0.0
    %4377 = vmatprep.subr.mxu0 0.0
    %4378 = vmatpush1.msra.mxu0 0.0
    %4379 = vmatprep.subr.mxu0 0.0
    %4380 = vmatpush1.msra.mxu0 0.0
    %4381 = vmatprep.subr.mxu0 0.0
    %4382 = vmatpush1.msra.mxu0 0.0
    %4383 = vmatprep.subr.mxu0 0.0
    %4384 = vmatpush1.msra.mxu0 0.0
    %4385 = vmatprep.subr.mxu0 0.0
    %4386 = vmatpush1.msra.mxu0 0.0
    %4387 = vmatprep.mubr.f32.mxu0 0.0
    %4388 = vmatmul.mubr.f32.gmra.mrb[0].mxu0 %v4321
    %v4389 = vpop.f32.mrb[0].mxu0
    %v4390 = vadd.f32 0.0, %v4389
    %v4391 = vpop.f32.mrb[0].mxu0
    %v4392 = vadd.f32 0.0, %v4391
    %4393 = vdwg.mxu0
    %4394 = vmatprep.subr.mxu0 0.0
    %4395 = vmatpush1.msra.mxu0 %v48
    %4396 = vmatprep.subr.mxu0 0.0
    %4397 = vmatpush1.msra.mxu0 %v51
    %4398 = vmatprep.subr.mxu0 0.0
    %4399 = vmatpush1.msra.mxu0 %v54
    %4400 = vmatprep.subr.mxu0 0.0
    %4401 = vmatpush1.msra.mxu0 %v57
    %4402 = vmatprep.subr.mxu0 0.0
    %4403 = vmatpush1.msra.mxu0 %v60
    %4404 = vmatprep.subr.mxu0 0.0
    %4405 = vmatpush1.msra.mxu0 %v63
    %4406 = vmatprep.subr.mxu0 0.0
    %4407 = vmatpush1.msra.mxu0 %v66
    %4408 = vmatprep.subr.mxu0 0.0
    %4409 = vmatpush1.msra.mxu0 %v69
    %4410 = vmatprep.subr.mxu0 0.0
    %4411 = vmatpush1.msra.mxu0 %v72
    %4412 = vmatprep.subr.mxu0 0.0
    %4413 = vmatpush1.msra.mxu0 %v75
    %4414 = vmatprep.subr.mxu0 0.0
    %4415 = vmatpush1.msra.mxu0 %v78
    %4416 = vmatprep.subr.mxu0 0.0
    %4417 = vmatpush1.msra.mxu0 %v81
    %4418 = vmatprep.subr.mxu0 0.0
    %4419 = vmatpush1.msra.mxu0 %v84
    %4420 = vmatprep.subr.mxu0 0.0
    %4421 = vmatpush1.msra.mxu0 %v87
    %4422 = vmatprep.subr.mxu0 0.0
    %4423 = vmatpush1.msra.mxu0 %v90
    %4424 = vmatprep.subr.mxu0 0.0
    %4425 = vmatpush1.msra.mxu0 %v93
    %4426 = vmatprep.subr.mxu0 0.0
    %4427 = vmatpush1.msra.mxu0 0.0
    %4428 = vmatprep.subr.mxu0 0.0
    %4429 = vmatpush1.msra.mxu0 0.0
    %4430 = vmatprep.subr.mxu0 0.0
    %4431 = vmatpush1.msra.mxu0 0.0
    %4432 = vmatprep.subr.mxu0 0.0
    %4433 = vmatpush1.msra.mxu0 0.0
    %4434 = vmatprep.subr.mxu0 0.0
    %4435 = vmatpush1.msra.mxu0 0.0
    %4436 = vmatprep.subr.mxu0 0.0
    %4437 = vmatpush1.msra.mxu0 0.0
    %4438 = vmatprep.subr.mxu0 0.0
    %4439 = vmatpush1.msra.mxu0 0.0
    %4440 = vmatprep.subr.mxu0 0.0
    %4441 = vmatpush1.msra.mxu0 0.0
    %4442 = vmatprep.subr.mxu0 0.0
    %4443 = vmatpush1.msra.mxu0 0.0
    %4444 = vmatprep.subr.mxu0 0.0
    %4445 = vmatpush1.msra.mxu0 0.0
    %4446 = vmatprep.subr.mxu0 0.0
    %4447 = vmatpush1.msra.mxu0 0.0
    %4448 = vmatprep.subr.mxu0 0.0
    %4449 = vmatpush1.msra.mxu0 0.0
    %4450 = vmatprep.subr.mxu0 0.0
    %4451 = vmatpush1.msra.mxu0 0.0
    %4452 = vmatprep.subr.mxu0 0.0
    %4453 = vmatpush1.msra.mxu0 0.0
    %4454 = vmatprep.subr.mxu0 0.0
    %4455 = vmatpush1.msra.mxu0 0.0
    %4456 = vmatprep.subr.mxu0 0.0
    %4457 = vmatpush1.msra.mxu0 0.0
    %4458 = vmatprep.mubr.f32.mxu0 0.0
    %4459 = vmatmul.mubr.f32.gmra.mrb[0].mxu0 %v4321
    %v4460 = vpop.f32.mrb[0].mxu0
    %v4461 = vadd.f32 0.0, %v4460
    %v4462 = vpop.f32.mrb[0].mxu0
    %4463 = vdwg.mxu0
    %v4465 = vcombine.high %v4390, %v4390
    %v4467 = vunpack.c.l.s4 1966171168
    %v4468 = vunpack.c.0.s8 %v4467
    %v4469 = vlaneseq
    %v4470 = vshrl.u32 %v4469, 7
    %v4471 = vsub.s32 %v4468, %v4470
    %v4472 = vrot.slane %v4390, %v4471
    %v4474 = vunpack.c.l.s4 1966171168
    %v4475 = vunpack.c.0.s8 %v4474
    %v4476 = vlaneseq
    %v4477 = vshrl.u32 %v4476, 7
    %v4478 = vsub.s32 %v4475, %v4477
    %v4479 = vrot.slane %v4465, %v4478
    %v4480 = vcombine.high %v4472, %v4472
    %v4481 = vcombine.high %v4479, %v4479
    %v4483 = vunpack.c.l.s4 1966171168
    %v4484 = vunpack.c.0.s8 %v4483
    %v4485 = vlaneseq
    %v4486 = vshrl.u32 %v4485, 7
    %v4487 = vsub.s32 %v4484, %v4486
    %v4488 = vrot.slane %v4472, %v4487
    %v4490 = vunpack.c.l.s4 1966171168
    %v4491 = vunpack.c.0.s8 %v4490
    %v4492 = vlaneseq
    %v4493 = vshrl.u32 %v4492, 7
    %v4494 = vsub.s32 %v4491, %v4493
    %v4495 = vrot.slane %v4479, %v4494
    %v4497 = vunpack.c.l.s4 1966171168
    %v4498 = vunpack.c.0.s8 %v4497
    %v4499 = vlaneseq
    %v4500 = vshrl.u32 %v4499, 7
    %v4501 = vsub.s32 %v4498, %v4500
    %v4502 = vrot.slane %v4480, %v4501
    %v4504 = vunpack.c.l.s4 1966171168
    %v4505 = vunpack.c.0.s8 %v4504
    %v4506 = vlaneseq
    %v4507 = vshrl.u32 %v4506, 7
    %v4508 = vsub.s32 %v4505, %v4507
    %v4509 = vrot.slane %v4481, %v4508
    %v4510 = vcombine.high %v4488, %v4488
    %v4511 = vcombine.high %v4495, %v4495
    %v4512 = vcombine.high %v4502, %v4502
    %v4513 = vcombine.high %v4509, %v4509
    %v4522 = vadd.f32 %v4250, %v4488
    %v4523 = vadd.f32 %v4252, %v4502
    %v4524 = vadd.f32 %v4254, %v4510
    %v4525 = vadd.f32 %v4256, %v4512
    %v4526 = vadd.f32 %v4258, %v4495
    %v4527 = vadd.f32 %v4260, %v4509
    %v4528 = vadd.f32 %v4262, %v4511
    %v4529 = vadd.f32 %v4264, %v4513
    %v4530 = vadd.f32 %v4522, %v648
    %v4531 = vadd.f32 %v4523, %v662
    %v4532 = vadd.f32 %v4524, %v670
    %v4533 = vadd.f32 %v4525, %v672
    %v4534 = vadd.f32 %v4526, %v655
    %v4535 = vadd.f32 %v4527, %v669
    %v4536 = vadd.f32 %v4528, %v671
    %v4537 = vadd.f32 %v4529, %v673
    %v4538 = vxor.u32 %v4530, 2147483648
    %v4539 = vxor.u32 %v4531, 2147483648
    %v4540 = vxor.u32 %v4532, 2147483648
    %v4541 = vxor.u32 %v4533, 2147483648
    %v4542 = vxor.u32 %v4534, 2147483648
    %v4543 = vxor.u32 %v4535, 2147483648
    %v4544 = vxor.u32 %v4536, 2147483648
    %v4545 = vxor.u32 %v4537, 2147483648
    %v4546 = vmul.f32 %v4538, 1.442695
    %v4547 = vpow.pop %v4546
    %v4548 = vmul.f32 %v4539, 1.442695
    %v4549 = vpow.pop %v4548
    %v4550 = vmul.f32 %v4540, 1.442695
    %v4551 = vpow.pop %v4550
    %v4552 = vmul.f32 %v4541, 1.442695
    %v4553 = vpow.pop %v4552
    %v4554 = vmul.f32 %v4542, 1.442695
    %v4555 = vpow.pop %v4554
    %v4556 = vmul.f32 %v4543, 1.442695
    %v4557 = vpow.pop %v4556
    %v4558 = vmul.f32 %v4544, 1.442695
    %v4559 = vpow.pop %v4558
    %v4560 = vmul.f32 %v4545, 1.442695
    %v4561 = vpow.pop %v4560
    %v4562 = vadd.f32 %v4547, 1.0
    %v4563 = vadd.f32 %v4549, 1.0
    %v4564 = vadd.f32 %v4551, 1.0
    %v4565 = vadd.f32 %v4553, 1.0
    %v4566 = vadd.f32 %v4555, 1.0
    %v4567 = vadd.f32 %v4557, 1.0
    %v4568 = vadd.f32 %v4559, 1.0
    %v4569 = vadd.f32 %v4561, 1.0
    %v4570 = vrcp.pop %v4562
    %v4571 = vmul.f32 1.0, %v4570
    %v4572 = vrcp.pop %v4563
    %v4573 = vmul.f32 1.0, %v4572
    %v4574 = vrcp.pop %v4564
    %v4575 = vmul.f32 1.0, %v4574
    %v4576 = vrcp.pop %v4565
    %v4577 = vmul.f32 1.0, %v4576
    %v4578 = vrcp.pop %v4566
    %v4579 = vmul.f32 1.0, %v4578
    %v4580 = vrcp.pop %v4567
    %v4581 = vmul.f32 1.0, %v4580
    %v4582 = vrcp.pop %v4568
    %v4583 = vmul.f32 1.0, %v4582
    %v4584 = vrcp.pop %v4569
    %v4585 = vmul.f32 1.0, %v4584
    %v4594 = vrot.slane %v4250, 1
    %v4595 = vrot.slane %v4252, 1
    %v4596 = vrot.slane %v4254, 1
    %v4597 = vrot.slane %v4256, 1
    %v4598 = vrot.slane %v4258, 1
    %v4599 = vrot.slane %v4260, 1
    %v4600 = vrot.slane %v4262, 1
    %v4601 = vrot.slane %v4264, 1
    %v4611 = vcombine.high %v4392, %v4392
    %v4613 = vunpack.c.l.s4 1966171168
    %v4614 = vunpack.c.0.s8 %v4613
    %v4615 = vlaneseq
    %v4616 = vshrl.u32 %v4615, 7
    %v4617 = vsub.s32 %v4614, %v4616
    %v4618 = vrot.slane %v4392, %v4617
    %v4620 = vunpack.c.l.s4 1966171168
    %v4621 = vunpack.c.0.s8 %v4620
    %v4622 = vlaneseq
    %v4623 = vshrl.u32 %v4622, 7
    %v4624 = vsub.s32 %v4621, %v4623
    %v4625 = vrot.slane %v4611, %v4624
    %v4626 = vcombine.high %v4618, %v4618
    %v4627 = vcombine.high %v4625, %v4625
    %v4629 = vunpack.c.l.s4 1966171168
    %v4630 = vunpack.c.0.s8 %v4629
    %v4631 = vlaneseq
    %v4632 = vshrl.u32 %v4631, 7
    %v4633 = vsub.s32 %v4630, %v4632
    %v4634 = vrot.slane %v4618, %v4633
    %v4636 = vunpack.c.l.s4 1966171168
    %v4637 = vunpack.c.0.s8 %v4636
    %v4638 = vlaneseq
    %v4639 = vshrl.u32 %v4638, 7
    %v4640 = vsub.s32 %v4637, %v4639
    %v4641 = vrot.slane %v4625, %v4640
    %v4643 = vunpack.c.l.s4 1966171168
    %v4644 = vunpack.c.0.s8 %v4643
    %v4645 = vlaneseq
    %v4646 = vshrl.u32 %v4645, 7
    %v4647 = vsub.s32 %v4644, %v4646
    %v4648 = vrot.slane %v4626, %v4647
    %v4650 = vunpack.c.l.s4 1966171168
    %v4651 = vunpack.c.0.s8 %v4650
    %v4652 = vlaneseq
    %v4653 = vshrl.u32 %v4652, 7
    %v4654 = vsub.s32 %v4651, %v4653
    %v4655 = vrot.slane %v4627, %v4654
    %v4656 = vcombine.high %v4634, %v4634
    %v4657 = vcombine.high %v4641, %v4641
    %v4658 = vcombine.high %v4648, %v4648
    %v4659 = vcombine.high %v4655, %v4655
    %v4668 = vadd.f32 %v4594, %v4634
    %v4669 = vadd.f32 %v4595, %v4648
    %v4670 = vadd.f32 %v4596, %v4656
    %v4671 = vadd.f32 %v4597, %v4658
    %v4672 = vadd.f32 %v4598, %v4641
    %v4673 = vadd.f32 %v4599, %v4655
    %v4674 = vadd.f32 %v4600, %v4657
    %v4675 = vadd.f32 %v4601, %v4659
    %v4676 = vadd.f32 %v4668, %v852
    %v4677 = vadd.f32 %v4669, %v866
    %v4678 = vadd.f32 %v4670, %v874
    %v4679 = vadd.f32 %v4671, %v876
    %v4680 = vadd.f32 %v4672, %v859
    %v4681 = vadd.f32 %v4673, %v873
    %v4682 = vadd.f32 %v4674, %v875
    %v4683 = vadd.f32 %v4675, %v877
    %v4684 = vxor.u32 %v4676, 2147483648
    %v4685 = vxor.u32 %v4677, 2147483648
    %v4686 = vxor.u32 %v4678, 2147483648
    %v4687 = vxor.u32 %v4679, 2147483648
    %v4688 = vxor.u32 %v4680, 2147483648
    %v4689 = vxor.u32 %v4681, 2147483648
    %v4690 = vxor.u32 %v4682, 2147483648
    %v4691 = vxor.u32 %v4683, 2147483648
    %v4692 = vmul.f32 %v4684, 1.442695
    %v4693 = vpow.pop %v4692
    %v4694 = vmul.f32 %v4685, 1.442695
    %v4695 = vpow.pop %v4694
    %v4696 = vmul.f32 %v4686, 1.442695
    %v4697 = vpow.pop %v4696
    %v4698 = vmul.f32 %v4687, 1.442695
    %v4699 = vpow.pop %v4698
    %v4700 = vmul.f32 %v4688, 1.442695
    %v4701 = vpow.pop %v4700
    %v4702 = vmul.f32 %v4689, 1.442695
    %v4703 = vpow.pop %v4702
    %v4704 = vmul.f32 %v4690, 1.442695
    %v4705 = vpow.pop %v4704
    %v4706 = vmul.f32 %v4691, 1.442695
    %v4707 = vpow.pop %v4706
    %v4708 = vadd.f32 %v4693, 1.0
    %v4709 = vadd.f32 %v4695, 1.0
    %v4710 = vadd.f32 %v4697, 1.0
    %v4711 = vadd.f32 %v4699, 1.0
    %v4712 = vadd.f32 %v4701, 1.0
    %v4713 = vadd.f32 %v4703, 1.0
    %v4714 = vadd.f32 %v4705, 1.0
    %v4715 = vadd.f32 %v4707, 1.0
    %v4716 = vrcp.pop %v4708
    %v4717 = vmul.f32 1.0, %v4716
    %v4718 = vrcp.pop %v4709
    %v4719 = vmul.f32 1.0, %v4718
    %v4720 = vrcp.pop %v4710
    %v4721 = vmul.f32 1.0, %v4720
    %v4722 = vrcp.pop %v4711
    %v4723 = vmul.f32 1.0, %v4722
    %v4724 = vrcp.pop %v4712
    %v4725 = vmul.f32 1.0, %v4724
    %v4726 = vrcp.pop %v4713
    %v4727 = vmul.f32 1.0, %v4726
    %v4728 = vrcp.pop %v4714
    %v4729 = vmul.f32 1.0, %v4728
    %v4730 = vrcp.pop %v4715
    %v4731 = vmul.f32 1.0, %v4730
    %v4732 = vrot.slane %v4250, 2
    %v4733 = vrot.slane %v4252, 2
    %v4734 = vrot.slane %v4254, 2
    %v4735 = vrot.slane %v4256, 2
    %v4736 = vrot.slane %v4258, 2
    %v4737 = vrot.slane %v4260, 2
    %v4738 = vrot.slane %v4262, 2
    %v4739 = vrot.slane %v4264, 2
    %v4748 = vadd.f32 %v4732, %v982
    %v4749 = vadd.f32 %v4733, %v996
    %v4750 = vadd.f32 %v4734, %v1004
    %v4751 = vadd.f32 %v4735, %v1006
    %v4752 = vadd.f32 %v4736, %v989
    %v4753 = vadd.f32 %v4737, %v1003
    %v4754 = vadd.f32 %v4738, %v1005
    %v4755 = vadd.f32 %v4739, %v1007
    %v4756 = vadd.f32 %v4461, %v401
    %v4758 = vcombine.high %v4756, %v4756
    %v4760 = vunpack.c.l.s4 1966171168
    %v4761 = vunpack.c.0.s8 %v4760
    %v4762 = vlaneseq
    %v4763 = vshrl.u32 %v4762, 7
    %v4764 = vsub.s32 %v4761, %v4763
    %v4765 = vrot.slane %v4756, %v4764
    %v4767 = vunpack.c.l.s4 1966171168
    %v4768 = vunpack.c.0.s8 %v4767
    %v4769 = vlaneseq
    %v4770 = vshrl.u32 %v4769, 7
    %v4771 = vsub.s32 %v4768, %v4770
    %v4772 = vrot.slane %v4758, %v4771
    %v4773 = vcombine.high %v4765, %v4765
    %v4774 = vcombine.high %v4772, %v4772
    %v4776 = vunpack.c.l.s4 1966171168
    %v4777 = vunpack.c.0.s8 %v4776
    %v4778 = vlaneseq
    %v4779 = vshrl.u32 %v4778, 7
    %v4780 = vsub.s32 %v4777, %v4779
    %v4781 = vrot.slane %v4765, %v4780
    %v4783 = vunpack.c.l.s4 1966171168
    %v4784 = vunpack.c.0.s8 %v4783
    %v4785 = vlaneseq
    %v4786 = vshrl.u32 %v4785, 7
    %v4787 = vsub.s32 %v4784, %v4786
    %v4788 = vrot.slane %v4772, %v4787
    %v4790 = vunpack.c.l.s4 1966171168
    %v4791 = vunpack.c.0.s8 %v4790
    %v4792 = vlaneseq
    %v4793 = vshrl.u32 %v4792, 7
    %v4794 = vsub.s32 %v4791, %v4793
    %v4795 = vrot.slane %v4773, %v4794
    %v4797 = vunpack.c.l.s4 1966171168
    %v4798 = vunpack.c.0.s8 %v4797
    %v4799 = vlaneseq
    %v4800 = vshrl.u32 %v4799, 7
    %v4801 = vsub.s32 %v4798, %v4800
    %v4802 = vrot.slane %v4774, %v4801
    %v4803 = vcombine.high %v4781, %v4781
    %v4804 = vcombine.high %v4788, %v4788
    %v4805 = vcombine.high %v4795, %v4795
    %v4806 = vcombine.high %v4802, %v4802
    %v4815 = vmul.f32 %v4571, %v4781
    %v4816 = vmul.f32 %v4573, %v4795
    %v4817 = vmul.f32 %v4575, %v4803
    %v4818 = vmul.f32 %v4577, %v4805
    %v4819 = vmul.f32 %v4579, %v4788
    %v4820 = vmul.f32 %v4581, %v4802
    %v4821 = vmul.f32 %v4583, %v4804
    %v4822 = vmul.f32 %v4585, %v4806
    %v4823 = vadd.f32 %v4748, %v4815
    %v4824 = vadd.f32 %v4749, %v4816
    %v4825 = vadd.f32 %v4750, %v4817
    %v4826 = vadd.f32 %v4751, %v4818
    %v4827 = vadd.f32 %v4752, %v4819
    %v4828 = vadd.f32 %v4753, %v4820
    %v4829 = vadd.f32 %v4754, %v4821
    %v4830 = vadd.f32 %v4755, %v4822
    %v4831 = vtanh.pop %v4823
    %v4832 = vtanh.pop %v4824
    %v4833 = vtanh.pop %v4825
    %v4834 = vtanh.pop %v4826
    %v4835 = vtanh.pop %v4827
    %v4836 = vtanh.pop %v4828
    %v4837 = vtanh.pop %v4829
    %v4838 = vtanh.pop %v4830
    %v4839 = vsub.f32 1.0, %v4717
    %v4840 = vsub.f32 1.0, %v4719
    %v4841 = vsub.f32 1.0, %v4721
    %v4842 = vsub.f32 1.0, %v4723
    %v4843 = vsub.f32 1.0, %v4725
    %v4844 = vsub.f32 1.0, %v4727
    %v4845 = vsub.f32 1.0, %v4729
    %v4846 = vsub.f32 1.0, %v4731
    %v4847 = vmul.f32 %v4839, %v4831
    %v4848 = vmul.f32 %v4840, %v4832
    %v4849 = vmul.f32 %v4841, %v4833
    %v4850 = vmul.f32 %v4842, %v4834
    %v4851 = vmul.f32 %v4843, %v4835
    %v4852 = vmul.f32 %v4844, %v4836
    %v4853 = vmul.f32 %v4845, %v4837
    %v4854 = vmul.f32 %v4846, %v4838
    %v4855 = vmul.f32 %v4717, %v4241
    %v4856 = vmul.f32 %v4719, %v4242
    %v4857 = vmul.f32 %v4721, %v4243
    %v4858 = vmul.f32 %v4723, %v4244
    %v4859 = vmul.f32 %v4725, %v4245
    %v4860 = vmul.f32 %v4727, %v4246
    %v4861 = vmul.f32 %v4729, %v4247
    %v4862 = vmul.f32 %v4731, %v4248
    %v4863 = vadd.f32 %v4847, %v4855
    %v4864 = vadd.f32 %v4848, %v4856
    %v4865 = vadd.f32 %v4849, %v4857
    %v4866 = vadd.f32 %v4850, %v4858
    %v4867 = vadd.f32 %v4851, %v4859
    %v4868 = vadd.f32 %v4852, %v4860
    %v4869 = vadd.f32 %v4853, %v4861
    %v4870 = vadd.f32 %v4854, %v4862
    %s4871 = scalar_lea.vmem [#allocation2], 7
    %v4872 = vld [vmem:[%s4871] ss:$8 sm:$0x7]
    %s4873 = scalar_lea.vmem [#allocation2], 31
    %v4874 = vld [vmem:[%s4873] ss:$8 sm:$0x7]
    %s4875 = scalar_lea.vmem [#allocation2], 55
    %v4876 = vld [vmem:[%s4875] ss:$8 sm:$0x7]
    %s4877 = scalar_lea.vmem [#allocation2], 79
    %v4878 = vld [vmem:[%s4877] ss:$8 sm:$0x7]
    %s4879 = scalar_lea.vmem [#allocation2], 103
    %v4880 = vld [vmem:[%s4879] ss:$8 sm:$0x7]
    %s4881 = scalar_lea.vmem [#allocation2], 127
    %v4882 = vld [vmem:[%s4881] ss:$8 sm:$0x7]
    %s4883 = scalar_lea.vmem [#allocation2], 151
    %v4884 = vld [vmem:[%s4883] ss:$8 sm:$0x7]
    %s4885 = scalar_lea.vmem [#allocation2], 175
    %v4886 = vld [vmem:[%s4885] ss:$8 sm:$0x7]
    %v4895 = vcombine.low %v4863, %v4864
    %v4896 = vcombine.low %v4865, %v4866
    %v4897 = vcombine.low %v4867, %v4868
    %v4898 = vcombine.low %v4869, %v4870
    %v4900 = vunpack.c.l.s4 1966171168
    %v4901 = vunpack.c.0.s8 %v4900
    %v4902 = vlaneseq
    %v4903 = vshrl.u32 %v4902, 7
    %v4904 = vsub.s32 %v4901, %v4903
    %v4905 = vrot.slane %v4895, %v4904
    %v4907 = vunpack.c.l.s4 1966171168
    %v4908 = vunpack.c.0.s8 %v4907
    %v4909 = vlaneseq
    %v4910 = vshrl.u32 %v4909, 7
    %v4911 = vsub.s32 %v4908, %v4910
    %v4912 = vrot.slane %v4896, %v4911
    %v4914 = vunpack.c.l.s4 1966171168
    %v4915 = vunpack.c.0.s8 %v4914
    %v4916 = vlaneseq
    %v4917 = vshrl.u32 %v4916, 7
    %v4918 = vsub.s32 %v4915, %v4917
    %v4919 = vrot.slane %v4897, %v4918
    %v4921 = vunpack.c.l.s4 1966171168
    %v4922 = vunpack.c.0.s8 %v4921
    %v4923 = vlaneseq
    %v4924 = vshrl.u32 %v4923, 7
    %v4925 = vsub.s32 %v4922, %v4924
    %v4926 = vrot.slane %v4898, %v4925
    %v4927 = vcombine.low %v4905, %v4912
    %v4928 = vcombine.low %v4919, %v4926
    %v4930 = vunpack.c.l.s4 1966171168
    %v4931 = vunpack.c.0.s8 %v4930
    %v4932 = vlaneseq
    %v4933 = vshrl.u32 %v4932, 7
    %v4934 = vsub.s32 %v4931, %v4933
    %v4935 = vrot.slane %v4927, %v4934
    %v4937 = vunpack.c.l.s4 1966171168
    %v4938 = vunpack.c.0.s8 %v4937
    %v4939 = vlaneseq
    %v4940 = vshrl.u32 %v4939, 7
    %v4941 = vsub.s32 %v4938, %v4940
    %v4942 = vrot.slane %v4928, %v4941
    %v4943 = vcombine.low %v4935, %v4942
    %4945 = vmatprep.subr.mxu0 %v47
    %4946 = vmatpush1.msra.mxu0 %v46
    %4947 = vmatprep.subr.mxu0 %v50
    %4948 = vmatpush1.msra.mxu0 %v49
    %4949 = vmatprep.subr.mxu0 %v53
    %4950 = vmatpush1.msra.mxu0 %v52
    %4951 = vmatprep.subr.mxu0 %v56
    %4952 = vmatpush1.msra.mxu0 %v55
    %4953 = vmatprep.subr.mxu0 %v59
    %4954 = vmatpush1.msra.mxu0 %v58
    %4955 = vmatprep.subr.mxu0 %v62
    %4956 = vmatpush1.msra.mxu0 %v61
    %4957 = vmatprep.subr.mxu0 %v65
    %4958 = vmatpush1.msra.mxu0 %v64
    %4959 = vmatprep.subr.mxu0 %v68
    %4960 = vmatpush1.msra.mxu0 %v67
    %4961 = vmatprep.subr.mxu0 %v71
    %4962 = vmatpush1.msra.mxu0 %v70
    %4963 = vmatprep.subr.mxu0 %v74
    %4964 = vmatpush1.msra.mxu0 %v73
    %4965 = vmatprep.subr.mxu0 %v77
    %4966 = vmatpush1.msra.mxu0 %v76
    %4967 = vmatprep.subr.mxu0 %v80
    %4968 = vmatpush1.msra.mxu0 %v79
    %4969 = vmatprep.subr.mxu0 %v83
    %4970 = vmatpush1.msra.mxu0 %v82
    %4971 = vmatprep.subr.mxu0 %v86
    %4972 = vmatpush1.msra.mxu0 %v85
    %4973 = vmatprep.subr.mxu0 %v89
    %4974 = vmatpush1.msra.mxu0 %v88
    %4975 = vmatprep.subr.mxu0 %v92
    %4976 = vmatpush1.msra.mxu0 %v91
    %4977 = vmatprep.subr.mxu0 0.0
    %4978 = vmatpush1.msra.mxu0 0.0
    %4979 = vmatprep.subr.mxu0 0.0
    %4980 = vmatpush1.msra.mxu0 0.0
    %4981 = vmatprep.subr.mxu0 0.0
    %4982 = vmatpush1.msra.mxu0 0.0
    %4983 = vmatprep.subr.mxu0 0.0
    %4984 = vmatpush1.msra.mxu0 0.0
    %4985 = vmatprep.subr.mxu0 0.0
    %4986 = vmatpush1.msra.mxu0 0.0
    %4987 = vmatprep.subr.mxu0 0.0
    %4988 = vmatpush1.msra.mxu0 0.0
    %4989 = vmatprep.subr.mxu0 0.0
    %4990 = vmatpush1.msra.mxu0 0.0
    %4991 = vmatprep.subr.mxu0 0.0
    %4992 = vmatpush1.msra.mxu0 0.0
    %4993 = vmatprep.subr.mxu0 0.0
    %4994 = vmatpush1.msra.mxu0 0.0
    %4995 = vmatprep.subr.mxu0 0.0
    %4996 = vmatpush1.msra.mxu0 0.0
    %4997 = vmatprep.subr.mxu0 0.0
    %4998 = vmatpush1.msra.mxu0 0.0
    %4999 = vmatprep.subr.mxu0 0.0
    %5000 = vmatpush1.msra.mxu0 0.0
    %5001 = vmatprep.subr.mxu0 0.0
    %5002 = vmatpush1.msra.mxu0 0.0
    %5003 = vmatprep.subr.mxu0 0.0
    %5004 = vmatpush1.msra.mxu0 0.0
    %5005 = vmatprep.subr.mxu0 0.0
    %5006 = vmatpush1.msra.mxu0 0.0
    %5007 = vmatprep.subr.mxu0 0.0
    %5008 = vmatpush1.msra.mxu0 0.0
    %5009 = vmatprep.mubr.f32.mxu0 0.0
    %5010 = vmatmul.mubr.f32.gmra.mrb[0].mxu0 %v4943
    %v5011 = vpop.f32.mrb[0].mxu0
    %v5012 = vadd.f32 0.0, %v5011
    %v5013 = vpop.f32.mrb[0].mxu0
    %v5014 = vadd.f32 0.0, %v5013
    %5015 = vdwg.mxu0
    %5016 = vmatprep.subr.mxu0 0.0
    %5017 = vmatpush1.msra.mxu0 %v48
    %5018 = vmatprep.subr.mxu0 0.0
    %5019 = vmatpush1.msra.mxu0 %v51
    %5020 = vmatprep.subr.mxu0 0.0
    %5021 = vmatpush1.msra.mxu0 %v54
    %5022 = vmatprep.subr.mxu0 0.0
    %5023 = vmatpush1.msra.mxu0 %v57
    %5024 = vmatprep.subr.mxu0 0.0
    %5025 = vmatpush1.msra.mxu0 %v60
    %5026 = vmatprep.subr.mxu0 0.0
    %5027 = vmatpush1.msra.mxu0 %v63
    %5028 = vmatprep.subr.mxu0 0.0
    %5029 = vmatpush1.msra.mxu0 %v66
    %5030 = vmatprep.subr.mxu0 0.0
    %5031 = vmatpush1.msra.mxu0 %v69
    %5032 = vmatprep.subr.mxu0 0.0
    %5033 = vmatpush1.msra.mxu0 %v72
    %5034 = vmatprep.subr.mxu0 0.0
    %5035 = vmatpush1.msra.mxu0 %v75
    %5036 = vmatprep.subr.mxu0 0.0
    %5037 = vmatpush1.msra.mxu0 %v78
    %5038 = vmatprep.subr.mxu0 0.0
    %5039 = vmatpush1.msra.mxu0 %v81
    %5040 = vmatprep.subr.mxu0 0.0
    %5041 = vmatpush1.msra.mxu0 %v84
    %5042 = vmatprep.subr.mxu0 0.0
    %5043 = vmatpush1.msra.mxu0 %v87
    %5044 = vmatprep.subr.mxu0 0.0
    %5045 = vmatpush1.msra.mxu0 %v90
    %5046 = vmatprep.subr.mxu0 0.0
    %5047 = vmatpush1.msra.mxu0 %v93
    %5048 = vmatprep.subr.mxu0 0.0
    %5049 = vmatpush1.msra.mxu0 0.0
    %5050 = vmatprep.subr.mxu0 0.0
    %5051 = vmatpush1.msra.mxu0 0.0
    %5052 = vmatprep.subr.mxu0 0.0
    %5053 = vmatpush1.msra.mxu0 0.0
    %5054 = vmatprep.subr.mxu0 0.0
    %5055 = vmatpush1.msra.mxu0 0.0
    %5056 = vmatprep.subr.mxu0 0.0
    %5057 = vmatpush1.msra.mxu0 0.0
    %5058 = vmatprep.subr.mxu0 0.0
    %5059 = vmatpush1.msra.mxu0 0.0
    %5060 = vmatprep.subr.mxu0 0.0
    %5061 = vmatpush1.msra.mxu0 0.0
    %5062 = vmatprep.subr.mxu0 0.0
    %5063 = vmatpush1.msra.mxu0 0.0
    %5064 = vmatprep.subr.mxu0 0.0
    %5065 = vmatpush1.msra.mxu0 0.0
    %5066 = vmatprep.subr.mxu0 0.0
    %5067 = vmatpush1.msra.mxu0 0.0
    %5068 = vmatprep.subr.mxu0 0.0
    %5069 = vmatpush1.msra.mxu0 0.0
    %5070 = vmatprep.subr.mxu0 0.0
    %5071 = vmatpush1.msra.mxu0 0.0
    %5072 = vmatprep.subr.mxu0 0.0
    %5073 = vmatpush1.msra.mxu0 0.0
    %5074 = vmatprep.subr.mxu0 0.0
    %5075 = vmatpush1.msra.mxu0 0.0
    %5076 = vmatprep.subr.mxu0 0.0
    %5077 = vmatpush1.msra.mxu0 0.0
    %5078 = vmatprep.subr.mxu0 0.0
    %5079 = vmatpush1.msra.mxu0 0.0
    %5080 = vmatprep.mubr.f32.mxu0 0.0
    %5081 = vmatmul.mubr.f32.gmra.mrb[0].mxu0 %v4943
    %v5082 = vpop.f32.mrb[0].mxu0
    %v5083 = vadd.f32 0.0, %v5082
    %v5084 = vpop.f32.mrb[0].mxu0
    %5085 = vdwg.mxu0
    %v5087 = vcombine.high %v5012, %v5012
    %v5089 = vunpack.c.l.s4 1966171168
    %v5090 = vunpack.c.0.s8 %v5089
    %v5091 = vlaneseq
    %v5092 = vshrl.u32 %v5091, 7
    %v5093 = vsub.s32 %v5090, %v5092
    %v5094 = vrot.slane %v5012, %v5093
    %v5096 = vunpack.c.l.s4 1966171168
    %v5097 = vunpack.c.0.s8 %v5096
    %v5098 = vlaneseq
    %v5099 = vshrl.u32 %v5098, 7
    %v5100 = vsub.s32 %v5097, %v5099
    %v5101 = vrot.slane %v5087, %v5100
    %v5102 = vcombine.high %v5094, %v5094
    %v5103 = vcombine.high %v5101, %v5101
    %v5105 = vunpack.c.l.s4 1966171168
    %v5106 = vunpack.c.0.s8 %v5105
    %v5107 = vlaneseq
    %v5108 = vshrl.u32 %v5107, 7
    %v5109 = vsub.s32 %v5106, %v5108
    %v5110 = vrot.slane %v5094, %v5109
    %v5112 = vunpack.c.l.s4 1966171168
    %v5113 = vunpack.c.0.s8 %v5112
    %v5114 = vlaneseq
    %v5115 = vshrl.u32 %v5114, 7
    %v5116 = vsub.s32 %v5113, %v5115
    %v5117 = vrot.slane %v5101, %v5116
    %v5119 = vunpack.c.l.s4 1966171168
    %v5120 = vunpack.c.0.s8 %v5119
    %v5121 = vlaneseq
    %v5122 = vshrl.u32 %v5121, 7
    %v5123 = vsub.s32 %v5120, %v5122
    %v5124 = vrot.slane %v5102, %v5123
    %v5126 = vunpack.c.l.s4 1966171168
    %v5127 = vunpack.c.0.s8 %v5126
    %v5128 = vlaneseq
    %v5129 = vshrl.u32 %v5128, 7
    %v5130 = vsub.s32 %v5127, %v5129
    %v5131 = vrot.slane %v5103, %v5130
    %v5132 = vcombine.high %v5110, %v5110
    %v5133 = vcombine.high %v5117, %v5117
    %v5134 = vcombine.high %v5124, %v5124
    %v5135 = vcombine.high %v5131, %v5131
    %v5144 = vadd.f32 %v4872, %v5110
    %v5145 = vadd.f32 %v4874, %v5124
    %v5146 = vadd.f32 %v4876, %v5132
    %v5147 = vadd.f32 %v4878, %v5134
    %v5148 = vadd.f32 %v4880, %v5117
    %v5149 = vadd.f32 %v4882, %v5131
    %v5150 = vadd.f32 %v4884, %v5133
    %v5151 = vadd.f32 %v4886, %v5135
    %v5152 = vadd.f32 %v5144, %v648
    %v5153 = vadd.f32 %v5145, %v662
    %v5154 = vadd.f32 %v5146, %v670
    %v5155 = vadd.f32 %v5147, %v672
    %v5156 = vadd.f32 %v5148, %v655
    %v5157 = vadd.f32 %v5149, %v669
    %v5158 = vadd.f32 %v5150, %v671
    %v5159 = vadd.f32 %v5151, %v673
    %v5160 = vxor.u32 %v5152, 2147483648
    %v5161 = vxor.u32 %v5153, 2147483648
    %v5162 = vxor.u32 %v5154, 2147483648
    %v5163 = vxor.u32 %v5155, 2147483648
    %v5164 = vxor.u32 %v5156, 2147483648
    %v5165 = vxor.u32 %v5157, 2147483648
    %v5166 = vxor.u32 %v5158, 2147483648
    %v5167 = vxor.u32 %v5159, 2147483648
    %v5168 = vmul.f32 %v5160, 1.442695
    %v5169 = vpow.pop %v5168
    %v5170 = vmul.f32 %v5161, 1.442695
    %v5171 = vpow.pop %v5170
    %v5172 = vmul.f32 %v5162, 1.442695
    %v5173 = vpow.pop %v5172
    %v5174 = vmul.f32 %v5163, 1.442695
    %v5175 = vpow.pop %v5174
    %v5176 = vmul.f32 %v5164, 1.442695
    %v5177 = vpow.pop %v5176
    %v5178 = vmul.f32 %v5165, 1.442695
    %v5179 = vpow.pop %v5178
    %v5180 = vmul.f32 %v5166, 1.442695
    %v5181 = vpow.pop %v5180
    %v5182 = vmul.f32 %v5167, 1.442695
    %v5183 = vpow.pop %v5182
    %v5184 = vadd.f32 %v5169, 1.0
    %v5185 = vadd.f32 %v5171, 1.0
    %v5186 = vadd.f32 %v5173, 1.0
    %v5187 = vadd.f32 %v5175, 1.0
    %v5188 = vadd.f32 %v5177, 1.0
    %v5189 = vadd.f32 %v5179, 1.0
    %v5190 = vadd.f32 %v5181, 1.0
    %v5191 = vadd.f32 %v5183, 1.0
    %v5192 = vrcp.pop %v5184
    %v5193 = vmul.f32 1.0, %v5192
    %v5194 = vrcp.pop %v5185
    %v5195 = vmul.f32 1.0, %v5194
    %v5196 = vrcp.pop %v5186
    %v5197 = vmul.f32 1.0, %v5196
    %v5198 = vrcp.pop %v5187
    %v5199 = vmul.f32 1.0, %v5198
    %v5200 = vrcp.pop %v5188
    %v5201 = vmul.f32 1.0, %v5200
    %v5202 = vrcp.pop %v5189
    %v5203 = vmul.f32 1.0, %v5202
    %v5204 = vrcp.pop %v5190
    %v5205 = vmul.f32 1.0, %v5204
    %v5206 = vrcp.pop %v5191
    %v5207 = vmul.f32 1.0, %v5206
    %v5216 = vrot.slane %v4872, 1
    %v5217 = vrot.slane %v4874, 1
    %v5218 = vrot.slane %v4876, 1
    %v5219 = vrot.slane %v4878, 1
    %v5220 = vrot.slane %v4880, 1
    %v5221 = vrot.slane %v4882, 1
    %v5222 = vrot.slane %v4884, 1
    %v5223 = vrot.slane %v4886, 1
    %v5233 = vcombine.high %v5014, %v5014
    %v5235 = vunpack.c.l.s4 1966171168
    %v5236 = vunpack.c.0.s8 %v5235
    %v5237 = vlaneseq
    %v5238 = vshrl.u32 %v5237, 7
    %v5239 = vsub.s32 %v5236, %v5238
    %v5240 = vrot.slane %v5014, %v5239
    %v5242 = vunpack.c.l.s4 1966171168
    %v5243 = vunpack.c.0.s8 %v5242
    %v5244 = vlaneseq
    %v5245 = vshrl.u32 %v5244, 7
    %v5246 = vsub.s32 %v5243, %v5245
    %v5247 = vrot.slane %v5233, %v5246
    %v5248 = vcombine.high %v5240, %v5240
    %v5249 = vcombine.high %v5247, %v5247
    %v5251 = vunpack.c.l.s4 1966171168
    %v5252 = vunpack.c.0.s8 %v5251
    %v5253 = vlaneseq
    %v5254 = vshrl.u32 %v5253, 7
    %v5255 = vsub.s32 %v5252, %v5254
    %v5256 = vrot.slane %v5240, %v5255
    %v5258 = vunpack.c.l.s4 1966171168
    %v5259 = vunpack.c.0.s8 %v5258
    %v5260 = vlaneseq
    %v5261 = vshrl.u32 %v5260, 7
    %v5262 = vsub.s32 %v5259, %v5261
    %v5263 = vrot.slane %v5247, %v5262
    %v5265 = vunpack.c.l.s4 1966171168
    %v5266 = vunpack.c.0.s8 %v5265
    %v5267 = vlaneseq
    %v5268 = vshrl.u32 %v5267, 7
    %v5269 = vsub.s32 %v5266, %v5268
    %v5270 = vrot.slane %v5248, %v5269
    %v5272 = vunpack.c.l.s4 1966171168
    %v5273 = vunpack.c.0.s8 %v5272
    %v5274 = vlaneseq
    %v5275 = vshrl.u32 %v5274, 7
    %v5276 = vsub.s32 %v5273, %v5275
    %v5277 = vrot.slane %v5249, %v5276
    %v5278 = vcombine.high %v5256, %v5256
    %v5279 = vcombine.high %v5263, %v5263
    %v5280 = vcombine.high %v5270, %v5270
    %v5281 = vcombine.high %v5277, %v5277
    %v5290 = vadd.f32 %v5216, %v5256
    %v5291 = vadd.f32 %v5217, %v5270
    %v5292 = vadd.f32 %v5218, %v5278
    %v5293 = vadd.f32 %v5219, %v5280
    %v5294 = vadd.f32 %v5220, %v5263
    %v5295 = vadd.f32 %v5221, %v5277
    %v5296 = vadd.f32 %v5222, %v5279
    %v5297 = vadd.f32 %v5223, %v5281
    %v5298 = vadd.f32 %v5290, %v852
    %v5299 = vadd.f32 %v5291, %v866
    %v5300 = vadd.f32 %v5292, %v874
    %v5301 = vadd.f32 %v5293, %v876
    %v5302 = vadd.f32 %v5294, %v859
    %v5303 = vadd.f32 %v5295, %v873
    %v5304 = vadd.f32 %v5296, %v875
    %v5305 = vadd.f32 %v5297, %v877
    %v5306 = vxor.u32 %v5298, 2147483648
    %v5307 = vxor.u32 %v5299, 2147483648
    %v5308 = vxor.u32 %v5300, 2147483648
    %v5309 = vxor.u32 %v5301, 2147483648
    %v5310 = vxor.u32 %v5302, 2147483648
    %v5311 = vxor.u32 %v5303, 2147483648
    %v5312 = vxor.u32 %v5304, 2147483648
    %v5313 = vxor.u32 %v5305, 2147483648
    %v5314 = vmul.f32 %v5306, 1.442695
    %v5315 = vpow.pop %v5314
    %v5316 = vmul.f32 %v5307, 1.442695
    %v5317 = vpow.pop %v5316
    %v5318 = vmul.f32 %v5308, 1.442695
    %v5319 = vpow.pop %v5318
    %v5320 = vmul.f32 %v5309, 1.442695
    %v5321 = vpow.pop %v5320
    %v5322 = vmul.f32 %v5310, 1.442695
    %v5323 = vpow.pop %v5322
    %v5324 = vmul.f32 %v5311, 1.442695
    %v5325 = vpow.pop %v5324
    %v5326 = vmul.f32 %v5312, 1.442695
    %v5327 = vpow.pop %v5326
    %v5328 = vmul.f32 %v5313, 1.442695
    %v5329 = vpow.pop %v5328
    %v5330 = vadd.f32 %v5315, 1.0
    %v5331 = vadd.f32 %v5317, 1.0
    %v5332 = vadd.f32 %v5319, 1.0
    %v5333 = vadd.f32 %v5321, 1.0
    %v5334 = vadd.f32 %v5323, 1.0
    %v5335 = vadd.f32 %v5325, 1.0
    %v5336 = vadd.f32 %v5327, 1.0
    %v5337 = vadd.f32 %v5329, 1.0
    %v5338 = vrcp.pop %v5330
    %v5339 = vmul.f32 1.0, %v5338
    %v5340 = vrcp.pop %v5331
    %v5341 = vmul.f32 1.0, %v5340
    %v5342 = vrcp.pop %v5332
    %v5343 = vmul.f32 1.0, %v5342
    %v5344 = vrcp.pop %v5333
    %v5345 = vmul.f32 1.0, %v5344
    %v5346 = vrcp.pop %v5334
    %v5347 = vmul.f32 1.0, %v5346
    %v5348 = vrcp.pop %v5335
    %v5349 = vmul.f32 1.0, %v5348
    %v5350 = vrcp.pop %v5336
    %v5351 = vmul.f32 1.0, %v5350
    %v5352 = vrcp.pop %v5337
    %v5353 = vmul.f32 1.0, %v5352
    %v5354 = vrot.slane %v4872, 2
    %v5355 = vrot.slane %v4874, 2
    %v5356 = vrot.slane %v4876, 2
    %v5357 = vrot.slane %v4878, 2
    %v5358 = vrot.slane %v4880, 2
    %v5359 = vrot.slane %v4882, 2
    %v5360 = vrot.slane %v4884, 2
    %v5361 = vrot.slane %v4886, 2
    %v5370 = vadd.f32 %v5354, %v982
    %v5371 = vadd.f32 %v5355, %v996
    %v5372 = vadd.f32 %v5356, %v1004
    %v5373 = vadd.f32 %v5357, %v1006
    %v5374 = vadd.f32 %v5358, %v989
    %v5375 = vadd.f32 %v5359, %v1003
    %v5376 = vadd.f32 %v5360, %v1005
    %v5377 = vadd.f32 %v5361, %v1007
    %v5378 = vadd.f32 %v5083, %v401
    %v5380 = vcombine.high %v5378, %v5378
    %v5382 = vunpack.c.l.s4 1966171168
    %v5383 = vunpack.c.0.s8 %v5382
    %v5384 = vlaneseq
    %v5385 = vshrl.u32 %v5384, 7
    %v5386 = vsub.s32 %v5383, %v5385
    %v5387 = vrot.slane %v5378, %v5386
    %v5389 = vunpack.c.l.s4 1966171168
    %v5390 = vunpack.c.0.s8 %v5389
    %v5391 = vlaneseq
    %v5392 = vshrl.u32 %v5391, 7
    %v5393 = vsub.s32 %v5390, %v5392
    %v5394 = vrot.slane %v5380, %v5393
    %v5395 = vcombine.high %v5387, %v5387
    %v5396 = vcombine.high %v5394, %v5394
    %v5398 = vunpack.c.l.s4 1966171168
    %v5399 = vunpack.c.0.s8 %v5398
    %v5400 = vlaneseq
    %v5401 = vshrl.u32 %v5400, 7
    %v5402 = vsub.s32 %v5399, %v5401
    %v5403 = vrot.slane %v5387, %v5402
    %v5405 = vunpack.c.l.s4 1966171168
    %v5406 = vunpack.c.0.s8 %v5405
    %v5407 = vlaneseq
    %v5408 = vshrl.u32 %v5407, 7
    %v5409 = vsub.s32 %v5406, %v5408
    %v5410 = vrot.slane %v5394, %v5409
    %v5412 = vunpack.c.l.s4 1966171168
    %v5413 = vunpack.c.0.s8 %v5412
    %v5414 = vlaneseq
    %v5415 = vshrl.u32 %v5414, 7
    %v5416 = vsub.s32 %v5413, %v5415
    %v5417 = vrot.slane %v5395, %v5416
    %v5419 = vunpack.c.l.s4 1966171168
    %v5420 = vunpack.c.0.s8 %v5419
    %v5421 = vlaneseq
    %v5422 = vshrl.u32 %v5421, 7
    %v5423 = vsub.s32 %v5420, %v5422
    %v5424 = vrot.slane %v5396, %v5423
    %v5425 = vcombine.high %v5403, %v5403
    %v5426 = vcombine.high %v5410, %v5410
    %v5427 = vcombine.high %v5417, %v5417
    %v5428 = vcombine.high %v5424, %v5424
    %v5437 = vmul.f32 %v5193, %v5403
    %v5438 = vmul.f32 %v5195, %v5417
    %v5439 = vmul.f32 %v5197, %v5425
    %v5440 = vmul.f32 %v5199, %v5427
    %v5441 = vmul.f32 %v5201, %v5410
    %v5442 = vmul.f32 %v5203, %v5424
    %v5443 = vmul.f32 %v5205, %v5426
    %v5444 = vmul.f32 %v5207, %v5428
    %v5445 = vadd.f32 %v5370, %v5437
    %v5446 = vadd.f32 %v5371, %v5438
    %v5447 = vadd.f32 %v5372, %v5439
    %v5448 = vadd.f32 %v5373, %v5440
    %v5449 = vadd.f32 %v5374, %v5441
    %v5450 = vadd.f32 %v5375, %v5442
    %v5451 = vadd.f32 %v5376, %v5443
    %v5452 = vadd.f32 %v5377, %v5444
    %v5453 = vtanh.pop %v5445
    %v5454 = vtanh.pop %v5446
    %v5455 = vtanh.pop %v5447
    %v5456 = vtanh.pop %v5448
    %v5457 = vtanh.pop %v5449
    %v5458 = vtanh.pop %v5450
    %v5459 = vtanh.pop %v5451
    %v5460 = vtanh.pop %v5452
    %v5461 = vsub.f32 1.0, %v5339
    %v5462 = vsub.f32 1.0, %v5341
    %v5463 = vsub.f32 1.0, %v5343
    %v5464 = vsub.f32 1.0, %v5345
    %v5465 = vsub.f32 1.0, %v5347
    %v5466 = vsub.f32 1.0, %v5349
    %v5467 = vsub.f32 1.0, %v5351
    %v5468 = vsub.f32 1.0, %v5353
    %v5469 = vmul.f32 %v5461, %v5453
    %v5470 = vmul.f32 %v5462, %v5454
    %v5471 = vmul.f32 %v5463, %v5455
    %v5472 = vmul.f32 %v5464, %v5456
    %v5473 = vmul.f32 %v5465, %v5457
    %v5474 = vmul.f32 %v5466, %v5458
    %v5475 = vmul.f32 %v5467, %v5459
    %v5476 = vmul.f32 %v5468, %v5460
    %v5477 = vmul.f32 %v5339, %v4863
    %v5478 = vmul.f32 %v5341, %v4864
    %v5479 = vmul.f32 %v5343, %v4865
    %v5480 = vmul.f32 %v5345, %v4866
    %v5481 = vmul.f32 %v5347, %v4867
    %v5482 = vmul.f32 %v5349, %v4868
    %v5483 = vmul.f32 %v5351, %v4869
    %v5484 = vmul.f32 %v5353, %v4870
    %v5485 = vadd.f32 %v5469, %v5477
    %v5486 = vadd.f32 %v5470, %v5478
    %v5487 = vadd.f32 %v5471, %v5479
    %v5488 = vadd.f32 %v5472, %v5480
    %v5489 = vadd.f32 %v5473, %v5481
    %v5490 = vadd.f32 %v5474, %v5482
    %v5491 = vadd.f32 %v5475, %v5483
    %v5492 = vadd.f32 %v5476, %v5484
    %v5493 = vld [vmem:[#allocation6] sm:$0xff]
    %v5494 = vld [vmem:[#allocation6 + $0x8] sm:$0xff]
    %v5495 = vld [vmem:[#allocation6 + $0x10] sm:$0xff]
    %v5496 = vld [vmem:[#allocation6 + $0x18] sm:$0xff]
    %v5497 = vld [vmem:[#allocation6 + $0x20] sm:$0xff]
    %v5498 = vld [vmem:[#allocation6 + $0x28] sm:$0xff]
    %v5499 = vld [vmem:[#allocation6 + $0x30] sm:$0xff]
    %v5500 = vld [vmem:[#allocation6 + $0x38] sm:$0xff]
    %v5501 = vld [vmem:[#allocation6 + $0x40] sm:$0xff]
    %v5502 = vld [vmem:[#allocation6 + $0x48] sm:$0xff]
    %v5503 = vld [vmem:[#allocation6 + $0x50] sm:$0xff]
    %v5504 = vld [vmem:[#allocation6 + $0x58] sm:$0xff]
    %v5505 = vld [vmem:[#allocation6 + $0x60] sm:$0xff]
    %v5506 = vld [vmem:[#allocation6 + $0x68] sm:$0xff]
    %v5507 = vld [vmem:[#allocation6 + $0x70] sm:$0xff]
    %v5508 = vld [vmem:[#allocation6 + $0x78] sm:$0xff]
    %v5509 = vld [vmem:[#allocation6 + $0x80] sm:$0xff]
    %v5510 = vld [vmem:[#allocation6 + $0x88] sm:$0xff]
    %v5511 = vld [vmem:[#allocation6 + $0x90] sm:$0xff]
    %v5512 = vld [vmem:[#allocation6 + $0x98] sm:$0xff]
    %v5513 = vld [vmem:[#allocation6 + $0xa0] sm:$0xff]
    %v5514 = vld [vmem:[#allocation6 + $0xa8] sm:$0xff]
    %v5515 = vld [vmem:[#allocation6 + $0xb0] sm:$0xff]
    %v5516 = vld [vmem:[#allocation6 + $0xb8] sm:$0xff]
    %v5517 = vld [vmem:[#allocation6 + $0xc0] sm:$0xff]
    %v5518 = vld [vmem:[#allocation6 + $0xc8] sm:$0xff]
    %v5519 = vld [vmem:[#allocation6 + $0xd0] sm:$0xff]
    %v5520 = vld [vmem:[#allocation6 + $0xd8] sm:$0xff]
    %v5521 = vld [vmem:[#allocation6 + $0xe0] sm:$0xff]
    %v5522 = vld [vmem:[#allocation6 + $0xe8] sm:$0xff]
    %v5523 = vld [vmem:[#allocation6 + $0xf0] sm:$0xff]
    %v5524 = vld [vmem:[#allocation6 + $0xf8] sm:$0xff]
    %v5525 = vld [vmem:[%s3 + $0x4] sm:$0x1]
    %v5526 = vlaneseq
    %v5527 = vshrl.u32 %v5526, 7
    %v5528 = vsub.s32 0, %v5527
    %v5529 = vrot.slane %v5525, %v5528
    %v5530 = vld [vmem:[%s3 + $0x5] sm:$0x1]
    %v5531 = vlaneseq
    %v5532 = vshrl.u32 %v5531, 7
    %v5533 = vsub.s32 0, %v5532
    %v5534 = vrot.slane %v5530, %v5533
    %v5543 = vcombine.low %v5485, %v5486
    %v5544 = vcombine.low %v5487, %v5488
    %v5545 = vcombine.low %v5489, %v5490
    %v5546 = vcombine.low %v5491, %v5492
    %v5548 = vunpack.c.l.s4 1966171168
    %v5549 = vunpack.c.0.s8 %v5548
    %v5550 = vlaneseq
    %v5551 = vshrl.u32 %v5550, 7
    %v5552 = vsub.s32 %v5549, %v5551
    %v5553 = vrot.slane %v5543, %v5552
    %v5555 = vunpack.c.l.s4 1966171168
    %v5556 = vunpack.c.0.s8 %v5555
    %v5557 = vlaneseq
    %v5558 = vshrl.u32 %v5557, 7
    %v5559 = vsub.s32 %v5556, %v5558
    %v5560 = vrot.slane %v5544, %v5559
    %v5562 = vunpack.c.l.s4 1966171168
    %v5563 = vunpack.c.0.s8 %v5562
    %v5564 = vlaneseq
    %v5565 = vshrl.u32 %v5564, 7
    %v5566 = vsub.s32 %v5563, %v5565
    %v5567 = vrot.slane %v5545, %v5566
    %v5569 = vunpack.c.l.s4 1966171168
    %v5570 = vunpack.c.0.s8 %v5569
    %v5571 = vlaneseq
    %v5572 = vshrl.u32 %v5571, 7
    %v5573 = vsub.s32 %v5570, %v5572
    %v5574 = vrot.slane %v5546, %v5573
    %v5575 = vcombine.low %v5553, %v5560
    %v5576 = vcombine.low %v5567, %v5574
    %v5578 = vunpack.c.l.s4 1966171168
    %v5579 = vunpack.c.0.s8 %v5578
    %v5580 = vlaneseq
    %v5581 = vshrl.u32 %v5580, 7
    %v5582 = vsub.s32 %v5579, %v5581
    %v5583 = vrot.slane %v5575, %v5582
    %v5585 = vunpack.c.l.s4 1966171168
    %v5586 = vunpack.c.0.s8 %v5585
    %v5587 = vlaneseq
    %v5588 = vshrl.u32 %v5587, 7
    %v5589 = vsub.s32 %v5586, %v5588
    %v5590 = vrot.slane %v5576, %v5589
    %v5591 = vcombine.low %v5583, %v5590
    %5593 = vmatprep.subr.mxu0 0.0
    %5594 = vmatpush1.msra.mxu0 %v5493
    %5595 = vmatprep.subr.mxu0 0.0
    %5596 = vmatpush1.msra.mxu0 %v5494
    %5597 = vmatprep.subr.mxu0 0.0
    %5598 = vmatpush1.msra.mxu0 %v5495
    %5599 = vmatprep.subr.mxu0 0.0
    %5600 = vmatpush1.msra.mxu0 %v5496
    %5601 = vmatprep.subr.mxu0 0.0
    %5602 = vmatpush1.msra.mxu0 %v5497
    %5603 = vmatprep.subr.mxu0 0.0
    %5604 = vmatpush1.msra.mxu0 %v5498
    %5605 = vmatprep.subr.mxu0 0.0
    %5606 = vmatpush1.msra.mxu0 %v5499
    %5607 = vmatprep.subr.mxu0 0.0
    %5608 = vmatpush1.msra.mxu0 %v5500
    %5609 = vmatprep.subr.mxu0 0.0
    %5610 = vmatpush1.msra.mxu0 %v5501
    %5611 = vmatprep.subr.mxu0 0.0
    %5612 = vmatpush1.msra.mxu0 %v5502
    %5613 = vmatprep.subr.mxu0 0.0
    %5614 = vmatpush1.msra.mxu0 %v5503
    %5615 = vmatprep.subr.mxu0 0.0
    %5616 = vmatpush1.msra.mxu0 %v5504
    %5617 = vmatprep.subr.mxu0 0.0
    %5618 = vmatpush1.msra.mxu0 %v5505
    %5619 = vmatprep.subr.mxu0 0.0
    %5620 = vmatpush1.msra.mxu0 %v5506
    %5621 = vmatprep.subr.mxu0 0.0
    %5622 = vmatpush1.msra.mxu0 %v5507
    %5623 = vmatprep.subr.mxu0 0.0
    %5624 = vmatpush1.msra.mxu0 %v5508
    %5625 = vmatprep.subr.mxu0 0.0
    %5626 = vmatpush1.msra.mxu0 0.0
    %5627 = vmatprep.subr.mxu0 0.0
    %5628 = vmatpush1.msra.mxu0 0.0
    %5629 = vmatprep.subr.mxu0 0.0
    %5630 = vmatpush1.msra.mxu0 0.0
    %5631 = vmatprep.subr.mxu0 0.0
    %5632 = vmatpush1.msra.mxu0 0.0
    %5633 = vmatprep.subr.mxu0 0.0
    %5634 = vmatpush1.msra.mxu0 0.0
    %5635 = vmatprep.subr.mxu0 0.0
    %5636 = vmatpush1.msra.mxu0 0.0
    %5637 = vmatprep.subr.mxu0 0.0
    %5638 = vmatpush1.msra.mxu0 0.0
    %5639 = vmatprep.subr.mxu0 0.0
    %5640 = vmatpush1.msra.mxu0 0.0
    %5641 = vmatprep.subr.mxu0 0.0
    %5642 = vmatpush1.msra.mxu0 0.0
    %5643 = vmatprep.subr.mxu0 0.0
    %5644 = vmatpush1.msra.mxu0 0.0
    %5645 = vmatprep.subr.mxu0 0.0
    %5646 = vmatpush1.msra.mxu0 0.0
    %5647 = vmatprep.subr.mxu0 0.0
    %5648 = vmatpush1.msra.mxu0 0.0
    %5649 = vmatprep.subr.mxu0 0.0
    %5650 = vmatpush1.msra.mxu0 0.0
    %5651 = vmatprep.subr.mxu0 0.0
    %5652 = vmatpush1.msra.mxu0 0.0
    %5653 = vmatprep.subr.mxu0 0.0
    %5654 = vmatpush1.msra.mxu0 0.0
    %5655 = vmatprep.subr.mxu0 0.0
    %5656 = vmatpush1.msra.mxu0 0.0
    %5657 = vmatprep.mubr.f32.mxu0 0.0
    %5658 = vmatmul.mubr.f32.gmra.mrb[0].mxu0 %v5591
    %v5659 = vpop.f32.mrb[0].mxu0
    %v5660 = vadd.f32 %v5529, %v5659
    %v5661 = vpop.f32.mrb[0].mxu0
    %5662 = vdwg.mxu0
    %v5663 = vmax.f32 %v5660, 0.0
    %5664 = vmatprep.subr.mxu0 0.0
    %5665 = vmatpush1.msra.mxu0 %v5509
    %5666 = vmatprep.subr.mxu0 0.0
    %5667 = vmatpush1.msra.mxu0 %v5510
    %5668 = vmatprep.subr.mxu0 0.0
    %5669 = vmatpush1.msra.mxu0 %v5511
    %5670 = vmatprep.subr.mxu0 0.0
    %5671 = vmatpush1.msra.mxu0 %v5512
    %5672 = vmatprep.subr.mxu0 0.0
    %5673 = vmatpush1.msra.mxu0 %v5513
    %5674 = vmatprep.subr.mxu0 0.0
    %5675 = vmatpush1.msra.mxu0 %v5514
    %5676 = vmatprep.subr.mxu0 0.0
    %5677 = vmatpush1.msra.mxu0 %v5515
    %5678 = vmatprep.subr.mxu0 0.0
    %5679 = vmatpush1.msra.mxu0 %v5516
    %5680 = vmatprep.subr.mxu0 0.0
    %5681 = vmatpush1.msra.mxu0 %v5517
    %5682 = vmatprep.subr.mxu0 0.0
    %5683 = vmatpush1.msra.mxu0 %v5518
    %5684 = vmatprep.subr.mxu0 0.0
    %5685 = vmatpush1.msra.mxu0 %v5519
    %5686 = vmatprep.subr.mxu0 0.0
    %5687 = vmatpush1.msra.mxu0 %v5520
    %5688 = vmatprep.subr.mxu0 0.0
    %5689 = vmatpush1.msra.mxu0 %v5521
    %5690 = vmatprep.subr.mxu0 0.0
    %5691 = vmatpush1.msra.mxu0 %v5522
    %5692 = vmatprep.subr.mxu0 0.0
    %5693 = vmatpush1.msra.mxu0 %v5523
    %5694 = vmatprep.subr.mxu0 0.0
    %5695 = vmatpush1.msra.mxu0 %v5524
    %5696 = vmatprep.subr.mxu0 0.0
    %5697 = vmatpush1.msra.mxu0 0.0
    %5698 = vmatprep.subr.mxu0 0.0
    %5699 = vmatpush1.msra.mxu0 0.0
    %5700 = vmatprep.subr.mxu0 0.0
    %5701 = vmatpush1.msra.mxu0 0.0
    %5702 = vmatprep.subr.mxu0 0.0
    %5703 = vmatpush1.msra.mxu0 0.0
    %5704 = vmatprep.subr.mxu0 0.0
    %5705 = vmatpush1.msra.mxu0 0.0
    %5706 = vmatprep.subr.mxu0 0.0
    %5707 = vmatpush1.msra.mxu0 0.0
    %5708 = vmatprep.subr.mxu0 0.0
    %5709 = vmatpush1.msra.mxu0 0.0
    %5710 = vmatprep.subr.mxu0 0.0
    %5711 = vmatpush1.msra.mxu0 0.0
    %5712 = vmatprep.subr.mxu0 0.0
    %5713 = vmatpush1.msra.mxu0 0.0
    %5714 = vmatprep.subr.mxu0 0.0
    %5715 = vmatpush1.msra.mxu0 0.0
    %5716 = vmatprep.subr.mxu0 0.0
    %5717 = vmatpush1.msra.mxu0 0.0
    %5718 = vmatprep.subr.mxu0 0.0
    %5719 = vmatpush1.msra.mxu0 0.0
    %5720 = vmatprep.subr.mxu0 0.0
    %5721 = vmatpush1.msra.mxu0 0.0
    %5722 = vmatprep.subr.mxu0 0.0
    %5723 = vmatpush1.msra.mxu0 0.0
    %5724 = vmatprep.subr.mxu0 0.0
    %5725 = vmatpush1.msra.mxu0 0.0
    %5726 = vmatprep.subr.mxu0 0.0
    %5727 = vmatpush1.msra.mxu0 0.0
    %5728 = vmatprep.mubr.f32.mxu0 0.0
    %5729 = vmatmul.mubr.f32.gmra.mrb[0].mxu0 %v5663
    %v5730 = vpop.f32.mrb[0].mxu0
    %v5731 = vadd.f32 %v5534, %v5730
    %v5732 = vpop.f32.mrb[0].mxu0
    %5733 = vdwg.mxu0
    %5734 = vst [vmem:[#allocation8] sm:$0xff] %v5731
    // Predicated region
    $region26: #{tpu_custom_call.1} parent=1 // pred_check
      _
    $region27: #{tpu_custom_call.1} parent=1 // pred_check_branch
      %5736 = sbr.rel (0) target = $region29
    $region28: #{tpu_custom_call.1} parent=1 // pred_region
      %s5738 = ssub.s32 128, 128
      %5739 = vsyncadd [#allocation5], %s5738
      %s5741 = sshll.u32 [#allocation8], 4
      %s5742 = int_to_ptr.vmem [resolvable:$true] %s5741
      %5744 = dma.vmem_to_hbm [thread:$0]  %s5742, 128, %s4, [#allocation5]
    $region29: #{tpu_custom_call.1} parent=1 // pred_fallthru
      _
    // Predicated region
    $region30: #{tpu_custom_call.1} parent=1 // pred_check
      _
    $region31: #{tpu_custom_call.1} parent=1 // pred_check_branch
      %5746 = sbr.rel (0) target = $region33
    $region32: #{tpu_custom_call.1} parent=1 // pred_region
      %5747 = dma.done [#allocation5], 128
    $region33: #{tpu_custom_call.1} parent=1 // pred_fallthru
      _
    %5748 = vsyncpa [#allocation4], 1
    %5749 = vsyncpa [#allocation7], 1
    %5750 = vsyncpa [#allocation5], 1

</llo_original>
